<compile_context>
chip_gen: v7x
topology: tpu7x:2x2x1
jax: 0.10.0
libtpu: 0.0.40
codegen_flags: <defaults>
</compile_context>

<pallas_src>
import math
import functools

import numpy as np
import jax
import jax.numpy as jnp
from jax.experimental import pallas as pl
from jax.experimental.pallas import tpu as pltpu

_NEG_INF = -1e30                    # large finite negative (avoids NaN / inf-inf issues)
_VMEM_LIMIT = 48 * 1024 * 1024      # leaves headroom even on v7x's 64 MiB VMEM


def _pick_tile(dim, candidates):
    """Largest candidate tile that evenly divides `dim`; else the full dim."""
    for c in candidates:
        if dim >= c and dim % c == 0:
            return c
    return dim


# ---------------------------------------------------------------------------
# Tiled linear projection kernel:  y = x @ W^T + b      (W stays (d_out, d_in))
# ---------------------------------------------------------------------------
def _linear_kernel(x_ref, w_ref, b_ref, o_ref, acc_ref):
    @pl.when(pl.program_id(2) == 0)
    def _init():
        acc_ref[...] = jnp.zeros(acc_ref.shape, jnp.float32)

    acc_ref[...] += jax.lax.dot_general(
        x_ref[...].astype(jnp.bfloat16),
        w_ref[...].astype(jnp.bfloat16),          # (tn, tk): contract dim 1 with dim 1
        dimension_numbers=(((1,), (1,)), ((), ())),
        preferred_element_type=jnp.float32)

    @pl.when(pl.program_id(2) == pl.num_programs(2) - 1)
    def _finalize():
        o_ref[...] = acc_ref[...] + b_ref[...]


def linear(x, w, b):
    """x: (M, K), w: (N, K), b: (N,) -> (M, N) float32."""
    M, K = x.shape
    N = w.shape[0]
    tm = _pick_tile(M, (256, 128))
    tn = _pick_tile(N, (256, 128))
    tk = _pick_tile(K, (512, 256, 128))
    return pl.pallas_call(
        _linear_kernel,
        out_shape=jax.ShapeDtypeStruct((M, N), jnp.float32),
        grid=(M // tm, N // tn, K // tk),
        in_specs=[
            pl.BlockSpec((tm, tk), lambda i, j, k: (i, k)),
            pl.BlockSpec((tn, tk), lambda i, j, k: (j, k)),
            pl.BlockSpec((1, tn), lambda i, j, k: (0, j)),
        ],
        out_specs=pl.BlockSpec((tm, tn), lambda i, j, k: (i, j)),
        scratch_shapes=[pltpu.VMEM((tm, tn), jnp.float32)],
        compiler_params=pltpu.CompilerParams(
            dimension_semantics=("parallel", "parallel", "arbitrary"),
            vmem_limit_bytes=_VMEM_LIMIT),
    )(x, w, b.reshape(1, N))


# ---------------------------------------------------------------------------
# Rotary-embedding tables (RotaryEmbedding(d_h // 2), theta=10000, interleaved)
# ---------------------------------------------------------------------------
def rope_tables(L, d_h):
    dim = d_h // 2                                # rotary dim = d_h // 2
    freqs = 1.0 / (10000.0 ** (jnp.arange(0, dim, 2, dtype=jnp.float32) / dim))
    angles = jnp.arange(L, dtype=jnp.float32)[:, None] * freqs[None, :]   # (L, dim//2)
    angles = jnp.repeat(angles, 2, axis=-1)                               # interleaved
    rot_dim = angles.shape[-1]
    cos = jnp.concatenate(
        [jnp.cos(angles), jnp.ones((L, d_h - rot_dim), jnp.float32)], axis=-1)
    sin = jnp.concatenate(
        [jnp.sin(angles), jnp.zeros((L, d_h - rot_dim), jnp.float32)], axis=-1)
    return cos, sin                               # (L, d_h) each


def rope_swap_matrix(d_h):
    """P so that x @ P == rotate_half(x) on the rotated interleaved prefix, 0 elsewhere."""
    rot_dim = d_h // 2
    P = np.zeros((d_h, d_h), np.float32)
    for i in range(rot_dim // 2):
        P[2 * i + 1, 2 * i] = -1.0   # out[2i]   = -x[2i+1]
        P[2 * i, 2 * i + 1] = 1.0    # out[2i+1] =  x[2i]
    return jnp.asarray(P)


# ---------------------------------------------------------------------------
# Attention kernel: grid = (B, Lk//tk); all heads per step; online softmax over Lk
# ---------------------------------------------------------------------------
def _attn_kernel(q_ref, kv_ref, cosq_ref, sinq_ref, cosk_ref, sink_ref, rot_ref,
                 mask_ref, o_ref, q_scr, m_scr, l_scr, acc_scr, *, n_heads, d_h):
    kv_step = pl.program_id(1)
    d_model = n_heads * d_h
    P = rot_ref[...].astype(jnp.bfloat16)         # (d_h, d_h), entries 0/+-1 (exact in bf16)

    def rope(x, cos, sin):
        # interleaved RoPE: x*cos + pair_swap(x)*sin  (sign folded into P)
        swapped = jnp.dot(x.astype(jnp.bfloat16), P, preferred_element_type=jnp.float32)
        return x * cos + swapped * sin

    @pl.when(kv_step == 0)
    def _init():
        m_scr[...] = jnp.full(m_scr.shape, _NEG_INF, jnp.float32)
        l_scr[...] = jnp.zeros(l_scr.shape, jnp.float32)
        acc_scr[...] = jnp.zeros(acc_scr.shape, jnp.float32)
        q = q_ref[0]                              # (Lq, d_model)
        cos_q = cosq_ref[...]                     # (Lq, d_h), softmax scale folded in
        sin_q = sinq_ref[...]
        for h in range(n_heads):
            q_scr[h] = rope(q[:, h * d_h:(h + 1) * d_h], cos_q, sin_q)

    kv_blk = kv_ref[0]                            # (tk, 2*d_model) = [K | V]
    mask = mask_ref[0].astype(jnp.float32)        # (Lq, tk), shared across heads
    cos_k = cosk_ref[...]
    sin_k = sink_ref[...]

    for h in range(n_heads):
        k_h = rope(kv_blk[:, h * d_h:(h + 1) * d_h], cos_k, sin_k)               # (tk, d_h)
        v_h = kv_blk[:, d_model + h * d_h:d_model + (h + 1) * d_h]               # (tk, d_h)

        s = jax.lax.dot_general(                                                  # (Lq, tk)
            q_scr[h].astype(jnp.bfloat16), k_h.astype(jnp.bfloat16),
            dimension_numbers=(((1,), (1,)), ((), ())),
            preferred_element_type=jnp.float32)
        s = jnp.where(mask != 0.0, s, _NEG_INF)

        m_prev = m_scr[h]                                                         # (Lq, 1)
        m_new = jnp.maximum(m_prev, jnp.max(s, axis=-1, keepdims=True))
        alpha = jnp.exp(m_prev - m_new)
        p = jnp.exp(s - m_new)
        l_scr[h] = alpha * l_scr[h] + jnp.sum(p, axis=-1, keepdims=True)
        acc_scr[h] = alpha * acc_scr[h] + jnp.dot(
            p.astype(jnp.bfloat16), v_h.astype(jnp.bfloat16),
            preferred_element_type=jnp.float32)
        m_scr[h] = m_new

    @pl.when(kv_step == pl.num_programs(1) - 1)
    def _finalize():
        outs = [acc_scr[h] * pl.reciprocal(l_scr[h], approx=True)
                for h in range(n_heads)]
        o_ref[0] = jnp.concatenate(outs, axis=-1).astype(o_ref.dtype)  # lane-dense store


def attention(Q, KV, mask_i8, n_heads, scale):
    """Q: (B, Lq, D), KV: (B, Lk, 2D) fused [K|V], mask_i8: (B, Lq, Lk) -> (B, Lq, D)."""
    B, Lq, d_model = Q.shape
    Lk = KV.shape[1]
    d_h = d_model // n_heads

    cos_q, sin_q = rope_tables(Lq, d_h)
    cos_q = cos_q * scale                 # fold softmax scale into the Q rotary tables
    sin_q = sin_q * scale
    cos_k, sin_k = rope_tables(Lk, d_h)
    P = rope_swap_matrix(d_h)

    tk = _pick_tile(Lk, (512, 256, 128))
    kernel = functools.partial(_attn_kernel, n_heads=n_heads, d_h=d_h)
    return pl.pallas_call(
        kernel,
        out_shape=jax.ShapeDtypeStruct((B, Lq, d_model), jnp.float32),
        grid=(B, Lk // tk),
        in_specs=[
            pl.BlockSpec((1, Lq, d_model), lambda b, k: (b, 0, 0)),       # Q
            pl.BlockSpec((1, tk, 2 * d_model), lambda b, k: (b, k, 0)),   # fused K|V
            pl.BlockSpec((Lq, d_h), lambda b, k: (0, 0)),                 # cos_q (scaled)
            pl.BlockSpec((Lq, d_h), lambda b, k: (0, 0)),                 # sin_q (scaled)
            pl.BlockSpec((tk, d_h), lambda b, k: (k, 0)),                 # cos_k
            pl.BlockSpec((tk, d_h), lambda b, k: (k, 0)),                 # sin_k
            pl.BlockSpec((d_h, d_h), lambda b, k: (0, 0)),                # RoPE pair-swap
            pl.BlockSpec((1, Lq, tk), lambda b, k: (b, 0, k)),            # int8 mask
        ],
        out_specs=pl.BlockSpec((1, Lq, d_model), lambda b, k: (b, 0, 0)),
        scratch_shapes=[
            pltpu.VMEM((n_heads, Lq, d_h), jnp.float32),   # rope'd + scaled Q
            pltpu.VMEM((n_heads, Lq, 1), jnp.float32),     # running max m
            pltpu.VMEM((n_heads, Lq, 1), jnp.float32),     # running denom l
            pltpu.VMEM((n_heads, Lq, d_h), jnp.float32),   # output accumulator
        ],
        compiler_params=pltpu.CompilerParams(
            dimension_semantics=("parallel", "arbitrary"),
            vmem_limit_bytes=_VMEM_LIMIT),
    )(Q, KV, cos_q, sin_q, cos_k, sin_k, P, mask_i8)


# ---------------------------------------------------------------------------
# Full forward pass (glue in plain JAX, hot paths in Pallas)
# ---------------------------------------------------------------------------
def fuse_params(params):
    """One-time fusion of the K/V projection weights (call outside the forward)."""
    fused = dict(params)
    fused["Wkv"] = jnp.concatenate([params["Wk"], params["Wv"]], axis=0)  # (2*d_embed, d_k)
    fused["bkv"] = jnp.concatenate([params["bk"], params["bv"]], axis=0)
    return fused


def multihead_attention(embed, key, params, n_heads, attn_mask=None):
    B, Lq, d_embed = embed.shape
    _, Lk, d_k = key.shape
    scale = 1.0 / math.sqrt(d_embed)      # matches the reference module (1/sqrt(d_embed))

    Q = linear(embed.reshape(B * Lq, d_embed), params["Wq"], params["bq"])
    Q = Q.reshape(B, Lq, d_embed)
    KV = linear(key.reshape(B * Lk, d_k), params["Wkv"], params["bkv"])
    KV = KV.reshape(B, Lk, 2 * d_embed)   # stays fused all the way into the attention kernel

    if attn_mask is None:
        mask_i8 = jnp.ones((B, Lq, Lk), jnp.int8)
    else:
        mask_i8 = attn_mask.astype(jnp.int8)

    ctx = attention(Q, KV, mask_i8, n_heads, scale)        # (B, Lq, d_embed), no transposes
    out = linear(ctx.reshape(B * Lq, d_embed), params["Wo"], params["bo"])
    return out.reshape(B, Lq, d_embed)


# ---------------------------------------------------------------------------
# Pure-JAX reference (mirrors the PyTorch forward exactly) for validation
# ---------------------------------------------------------------------------
def _rope_ref(x):
    B, H, L, d_h = x.shape
    cos, sin = rope_tables(L, d_h)
    rot_dim = d_h // 2
    xm, xr = x[..., :rot_dim], x[..., rot_dim:]
    x1, x2 = xm[..., 0::2], xm[..., 1::2]
    rhalf = jnp.stack([-x2, x1], axis=-1).reshape(xm.shape)
    xm = xm * cos[:, :rot_dim] + rhalf * sin[:, :rot_dim]
    return jnp.concatenate([xm, xr], axis=-1)


def reference(embed, key, params, n_heads, attn_mask):
    B, Lq, d_embed = embed.shape
    _, Lk, d_k = key.shape
    d_h = d_embed // n_heads
    Q = embed @ params["Wq"].T + params["bq"]
    K = key @ params["Wk"].T + params["bk"]
    V = key @ params["Wv"].T + params["bv"]
    Qh = Q.reshape(B, Lq, n_heads, d_h).transpose(0, 2, 1, 3)
    Kh = K.reshape(B, Lk, n_heads, d_h).transpose(0, 2, 1, 3)
    Vh = V.reshape(B, Lk, n_heads, d_h).transpose(0, 2, 1, 3)
    Qh, Kh = _rope_ref(Qh), _rope_ref(Kh)
    attn = jnp.einsum("bhqd,bhkd->bhqk", Qh, Kh)
    attn = jnp.where(attn_mask[:, None, :, :], attn, -jnp.inf)
    attn = attn * (1.0 / math.sqrt(d_embed))
    attn = jax.nn.softmax(attn, axis=-1)
    out = jnp.einsum("bhqk,bhkd->bhqd", attn, Vh)
    out = out.transpose(0, 2, 1, 3).reshape(B, Lq, d_embed)
    return out @ params["Wo"].T + params["bo"]


# ---------------------------------------------------------------------------
# Deterministic parameter init (torch.nn.Linear-style uniform)
# ---------------------------------------------------------------------------
def init_params(rng, d_embed, d_k):
    def lin(r, d_out, d_in):
        kw, kb = jax.random.split(r)
        bound = 1.0 / math.sqrt(d_in)
        W = jax.random.uniform(kw, (d_out, d_in), jnp.float32, -bound, bound)
        b = jax.random.uniform(kb, (d_out,), jnp.float32, -bound, bound)
        return W, b

    k = jax.random.split(rng, 4)
    Wq, bq = lin(k[0], d_embed, d_embed)
    Wk, bk = lin(k[1], d_embed, d_k)
    Wv, bv = lin(k[2], d_embed, d_k)
    Wo, bo = lin(k[3], d_embed, d_embed)
    return dict(Wq=Wq, bq=bq, Wk=Wk, bk=bk, Wv=Wv, bv=bv, Wo=Wo, bo=bo)


if __name__ == "__main__":
    root = jax.random.PRNGKey(0)
    k_param, k_embed, k_key, k_mask = jax.random.split(root, 4)

    B, Lq, Lk = 2, 8, 12
    d_embed, d_k, n_heads = 32, 16, 4     # d_h = 8

    params = init_params(k_param, d_embed, d_k)
    params_fused = fuse_params(params)    # one-time Wk||Wv fusion (not per forward call)
    embed = jax.random.normal(k_embed, (B, Lq, d_embed), jnp.float32)
    key_in = jax.random.normal(k_key, (B, Lk, d_k), jnp.float32)
    attn_mask = jax.random.bernoulli(k_mask, 0.7, (B, Lq, Lk))
    attn_mask = attn_mask.at[:, :, 0].set(True)   # at least one valid key per query row

    fwd = jax.jit(multihead_attention, static_argnums=(3,))
    out = jax.block_until_ready(fwd(embed, key_in, params_fused, n_heads, attn_mask))

    assert out.shape == (B, Lq, d_embed)
    assert not bool(jnp.isnan(out).any())

    ref = reference(embed, key_in, params, n_heads, attn_mask)
    max_err = float(jnp.max(jnp.abs(out - ref)))
    assert max_err < 3e-2, f"max abs err vs reference: {max_err}"   # bf16 MXU inputs

    print("KERNEL_OK")
</pallas_src>

<mosaic_0001>
module attributes {stable_mosaic.version = 11 : i64} {
  func.func @_linear_kernel(%arg0: i32, %arg1: i32, %arg2: i32, %arg3: memref<16x32xf32, #tpu.memory_space<vmem>>, %arg4: memref<32x32xf32, #tpu.memory_space<vmem>>, %arg5: memref<1x32xf32, #tpu.memory_space<vmem>>, %arg6: memref<16x32xf32, #tpu.memory_space<vmem>>, %arg7: memref<16x32xf32, #tpu.memory_space<vmem>>) attributes {dimension_semantics = [#tpu.dimension_semantics<parallel>, #tpu.dimension_semantics<parallel>, #tpu.dimension_semantics<arbitrary>], iteration_bounds = array<i64: 1, 1, 1>, scalar_prefetch = 0 : i64, scratch_operands = 1 : i64, tpu.core_type = #tpu.core_type<tc>, window_params = [{transform_indices = @transform_0, window_bounds = array<i64: 16, 32>}, {transform_indices = @transform_1, window_bounds = array<i64: 32, 32>}, {transform_indices = @transform_2, window_bounds = array<i64: 1, 32>}, {transform_indices = @transform_3, window_bounds = array<i64: 16, 32>}]} {
    %c0_i32 = arith.constant 0 : i32
    %0 = arith.cmpi eq, %arg2, %c0_i32 : i32
    %1 = arith.extui %0 : i1 to i32
    %c0_i32_0 = arith.constant 0 : i32
    %2 = arith.cmpi ne, %1, %c0_i32_0 : i32
    scf.if %2 {
      %cst_10 = arith.constant 0.000000e+00 : f32
      %14 = vector.broadcast %cst_10 : f32 to vector<16x32xf32>
      %c0_11 = arith.constant 0 : index
      %c0_12 = arith.constant 0 : index
      %15 = vector.load %arg7[%c0_11, %c0_12] : memref<16x32xf32, #tpu.memory_space<vmem>>, vector<16x32xf32>
      tpu.vector_store %arg7[%c0_11, %c0_12], %14 {strides = array<i32>} : memref<16x32xf32, #tpu.memory_space<vmem>>, vector<16x32xf32>,
    } else {
    }
    %c0 = arith.constant 0 : index
    %c0_1 = arith.constant 0 : index
    %3 = vector.load %arg7[%c0, %c0_1] : memref<16x32xf32, #tpu.memory_space<vmem>>, vector<16x32xf32>
    %c0_2 = arith.constant 0 : index
    %c0_3 = arith.constant 0 : index
    %4 = vector.load %arg3[%c0_2, %c0_3] : memref<16x32xf32, #tpu.memory_space<vmem>>, vector<16x32xf32>
    %5 = arith.truncf %4 : vector<16x32xf32> to vector<16x32xbf16>
    %c0_4 = arith.constant 0 : index
    %c0_5 = arith.constant 0 : index
    %6 = vector.load %arg4[%c0_4, %c0_5] : memref<32x32xf32, #tpu.memory_space<vmem>>, vector<32x32xf32>
    %7 = arith.truncf %6 : vector<32x32xf32> to vector<32x32xbf16>
    %cst = arith.constant dense<0.000000e+00> : vector<16x32xf32>
    %8 = tpu.matmul %5, %7, %cst {dimension_numbers = #tpu.dot_dimension_numbers<[1], [1], [0], [0], [0, 0, 1, 0], [], []>} : vector<16x32xbf16>, vector<32x32xbf16>, vector<16x32xf32> -> vector<16x32xf32>
    %9 = arith.addf %3, %8 : vector<16x32xf32>
    %c0_6 = arith.constant 0 : index
    %c0_7 = arith.constant 0 : index
    %10 = vector.load %arg7[%c0_6, %c0_7] : memref<16x32xf32, #tpu.memory_space<vmem>>, vector<16x32xf32>
    tpu.vector_store %arg7[%c0_6, %c0_7], %9 {strides = array<i32>} : memref<16x32xf32, #tpu.memory_space<vmem>>, vector<16x32xf32>,
    %c0_i32_8 = arith.constant 0 : i32
    %11 = arith.cmpi eq, %arg2, %c0_i32_8 : i32
    %12 = arith.extui %11 : i1 to i32
    %c0_i32_9 = arith.constant 0 : i32
    %13 = arith.cmpi ne, %12, %c0_i32_9 : i32
    scf.if %13 {
      %c0_10 = arith.constant 0 : index
      %c0_11 = arith.constant 0 : index
      %14 = vector.load %arg7[%c0_10, %c0_11] : memref<16x32xf32, #tpu.memory_space<vmem>>, vector<16x32xf32>
      %c0_12 = arith.constant 0 : index
      %c0_13 = arith.constant 0 : index
      %15 = vector.load %arg5[%c0_12, %c0_13] : memref<1x32xf32, #tpu.memory_space<vmem>>, vector<1x32xf32>
      %16 = vector.broadcast %15 : vector<1x32xf32> to vector<16x32xf32>
      %17 = arith.addf %14, %16 : vector<16x32xf32>
      %c0_14 = arith.constant 0 : index
      %c0_15 = arith.constant 0 : index
      %18 = vector.load %arg6[%c0_14, %c0_15] : memref<16x32xf32, #tpu.memory_space<vmem>>, vector<16x32xf32>
      tpu.vector_store %arg6[%c0_14, %c0_15], %17 {strides = array<i32>} : memref<16x32xf32, #tpu.memory_space<vmem>>, vector<16x32xf32>,
    } else {
    }
    return
  }
  func.func @transform_0(%arg0: i32, %arg1: i32, %arg2: i32) -> (i32, i32) {
    %c0_i32 = arith.constant 0 : i32
    return %arg0, %arg2 : i32, i32
  }
  func.func @transform_1(%arg0: i32, %arg1: i32, %arg2: i32) -> (i32, i32) {
    %c0_i32 = arith.constant 0 : i32
    return %arg1, %arg2 : i32, i32
  }
  func.func @transform_2(%arg0: i32, %arg1: i32, %arg2: i32) -> (i32, i32) {
    %c0_i32 = arith.constant 0 : i32
    %c0_i32_0 = arith.constant 0 : i32
    return %c0_i32, %arg1 : i32, i32
  }
  func.func @transform_3(%arg0: i32, %arg1: i32, %arg2: i32) -> (i32, i32) {
    %c0_i32 = arith.constant 0 : i32
    return %arg0, %arg1 : i32, i32
  }
}

module attributes {stable_mosaic.version = 11 : i64} {
  func.func @_linear_kernel(%arg0: i32, %arg1: i32, %arg2: i32, %arg3: memref<24x16xf32, #tpu.memory_space<vmem>>, %arg4: memref<64x16xf32, #tpu.memory_space<vmem>>, %arg5: memref<1x64xf32, #tpu.memory_space<vmem>>, %arg6: memref<24x64xf32, #tpu.memory_space<vmem>>, %arg7: memref<24x64xf32, #tpu.memory_space<vmem>>) attributes {dimension_semantics = [#tpu.dimension_semantics<parallel>, #tpu.dimension_semantics<parallel>, #tpu.dimension_semantics<arbitrary>], iteration_bounds = array<i64: 1, 1, 1>, scalar_prefetch = 0 : i64, scratch_operands = 1 : i64, tpu.core_type = #tpu.core_type<tc>, window_params = [{transform_indices = @transform_0, window_bounds = array<i64: 24, 16>}, {transform_indices = @transform_1, window_bounds = array<i64: 64, 16>}, {transform_indices = @transform_2, window_bounds = array<i64: 1, 64>}, {transform_indices = @transform_3, window_bounds = array<i64: 24, 64>}]} {
    %c0_i32 = arith.constant 0 : i32
    %0 = arith.cmpi eq, %arg2, %c0_i32 : i32
    %1 = arith.extui %0 : i1 to i32
    %c0_i32_0 = arith.constant 0 : i32
    %2 = arith.cmpi ne, %1, %c0_i32_0 : i32
    scf.if %2 {
      %cst_10 = arith.constant 0.000000e+00 : f32
      %14 = vector.broadcast %cst_10 : f32 to vector<24x64xf32>
      %c0_11 = arith.constant 0 : index
      %c0_12 = arith.constant 0 : index
      %15 = vector.load %arg7[%c0_11, %c0_12] : memref<24x64xf32, #tpu.memory_space<vmem>>, vector<24x64xf32>
      tpu.vector_store %arg7[%c0_11, %c0_12], %14 {strides = array<i32>} : memref<24x64xf32, #tpu.memory_space<vmem>>, vector<24x64xf32>,
    } else {
    }
    %c0 = arith.constant 0 : index
    %c0_1 = arith.constant 0 : index
    %3 = vector.load %arg7[%c0, %c0_1] : memref<24x64xf32, #tpu.memory_space<vmem>>, vector<24x64xf32>
    %c0_2 = arith.constant 0 : index
    %c0_3 = arith.constant 0 : index
    %4 = vector.load %arg3[%c0_2, %c0_3] : memref<24x16xf32, #tpu.memory_space<vmem>>, vector<24x16xf32>
    %5 = arith.truncf %4 : vector<24x16xf32> to vector<24x16xbf16>
    %c0_4 = arith.constant 0 : index
    %c0_5 = arith.constant 0 : index
    %6 = vector.load %arg4[%c0_4, %c0_5] : memref<64x16xf32, #tpu.memory_space<vmem>>, vector<64x16xf32>
    %7 = arith.truncf %6 : vector<64x16xf32> to vector<64x16xbf16>
    %cst = arith.constant dense<0.000000e+00> : vector<24x64xf32>
    %8 = tpu.matmul %5, %7, %cst {dimension_numbers = #tpu.dot_dimension_numbers<[1], [1], [0], [0], [0, 0, 1, 0], [], []>} : vector<24x16xbf16>, vector<64x16xbf16>, vector<24x64xf32> -> vector<24x64xf32>
    %9 = arith.addf %3, %8 : vector<24x64xf32>
    %c0_6 = arith.constant 0 : index
    %c0_7 = arith.constant 0 : index
    %10 = vector.load %arg7[%c0_6, %c0_7] : memref<24x64xf32, #tpu.memory_space<vmem>>, vector<24x64xf32>
    tpu.vector_store %arg7[%c0_6, %c0_7], %9 {strides = array<i32>} : memref<24x64xf32, #tpu.memory_space<vmem>>, vector<24x64xf32>,
    %c0_i32_8 = arith.constant 0 : i32
    %11 = arith.cmpi eq, %arg2, %c0_i32_8 : i32
    %12 = arith.extui %11 : i1 to i32
    %c0_i32_9 = arith.constant 0 : i32
    %13 = arith.cmpi ne, %12, %c0_i32_9 : i32
    scf.if %13 {
      %c0_10 = arith.constant 0 : index
      %c0_11 = arith.constant 0 : index
      %14 = vector.load %arg7[%c0_10, %c0_11] : memref<24x64xf32, #tpu.memory_space<vmem>>, vector<24x64xf32>
      %c0_12 = arith.constant 0 : index
      %c0_13 = arith.constant 0 : index
      %15 = vector.load %arg5[%c0_12, %c0_13] : memref<1x64xf32, #tpu.memory_space<vmem>>, vector<1x64xf32>
      %16 = vector.broadcast %15 : vector<1x64xf32> to vector<24x64xf32>
      %17 = arith.addf %14, %16 : vector<24x64xf32>
      %c0_14 = arith.constant 0 : index
      %c0_15 = arith.constant 0 : index
      %18 = vector.load %arg6[%c0_14, %c0_15] : memref<24x64xf32, #tpu.memory_space<vmem>>, vector<24x64xf32>
      tpu.vector_store %arg6[%c0_14, %c0_15], %17 {strides = array<i32>} : memref<24x64xf32, #tpu.memory_space<vmem>>, vector<24x64xf32>,
    } else {
    }
    return
  }
  func.func @transform_0(%arg0: i32, %arg1: i32, %arg2: i32) -> (i32, i32) {
    %c0_i32 = arith.constant 0 : i32
    return %arg0, %arg2 : i32, i32
  }
  func.func @transform_1(%arg0: i32, %arg1: i32, %arg2: i32) -> (i32, i32) {
    %c0_i32 = arith.constant 0 : i32
    return %arg1, %arg2 : i32, i32
  }
  func.func @transform_2(%arg0: i32, %arg1: i32, %arg2: i32) -> (i32, i32) {
    %c0_i32 = arith.constant 0 : i32
    %c0_i32_0 = arith.constant 0 : i32
    return %c0_i32, %arg1 : i32, i32
  }
  func.func @transform_3(%arg0: i32, %arg1: i32, %arg2: i32) -> (i32, i32) {
    %c0_i32 = arith.constant 0 : i32
    return %arg0, %arg1 : i32, i32
  }
}

module attributes {stable_mosaic.version = 11 : i64} {
  func.func @_linear_kernel(%arg0: i32, %arg1: i32, %arg2: i32, %arg3: memref<16x32xf32, #tpu.memory_space<vmem>>, %arg4: memref<32x32xf32, #tpu.memory_space<vmem>>, %arg5: memref<1x32xf32, #tpu.memory_space<vmem>>, %arg6: memref<16x32xf32, #tpu.memory_space<vmem>>, %arg7: memref<16x32xf32, #tpu.memory_space<vmem>>) attributes {dimension_semantics = [#tpu.dimension_semantics<parallel>, #tpu.dimension_semantics<parallel>, #tpu.dimension_semantics<arbitrary>], iteration_bounds = array<i64: 1, 1, 1>, scalar_prefetch = 0 : i64, scratch_operands = 1 : i64, tpu.core_type = #tpu.core_type<tc>, window_params = [{transform_indices = @transform_0, window_bounds = array<i64: 16, 32>}, {transform_indices = @transform_1, window_bounds = array<i64: 32, 32>}, {transform_indices = @transform_2, window_bounds = array<i64: 1, 32>}, {transform_indices = @transform_3, window_bounds = array<i64: 16, 32>}]} {
    %c0_i32 = arith.constant 0 : i32
    %0 = arith.cmpi eq, %arg2, %c0_i32 : i32
    %1 = arith.extui %0 : i1 to i32
    %c0_i32_0 = arith.constant 0 : i32
    %2 = arith.cmpi ne, %1, %c0_i32_0 : i32
    scf.if %2 {
      %cst_10 = arith.constant 0.000000e+00 : f32
      %14 = vector.broadcast %cst_10 : f32 to vector<16x32xf32>
      %c0_11 = arith.constant 0 : index
      %c0_12 = arith.constant 0 : index
      %15 = vector.load %arg7[%c0_11, %c0_12] : memref<16x32xf32, #tpu.memory_space<vmem>>, vector<16x32xf32>
      tpu.vector_store %arg7[%c0_11, %c0_12], %14 {strides = array<i32>} : memref<16x32xf32, #tpu.memory_space<vmem>>, vector<16x32xf32>,
    } else {
    }
    %c0 = arith.constant 0 : index
    %c0_1 = arith.constant 0 : index
    %3 = vector.load %arg7[%c0, %c0_1] : memref<16x32xf32, #tpu.memory_space<vmem>>, vector<16x32xf32>
    %c0_2 = arith.constant 0 : index
    %c0_3 = arith.constant 0 : index
    %4 = vector.load %arg3[%c0_2, %c0_3] : memref<16x32xf32, #tpu.memory_space<vmem>>, vector<16x32xf32>
    %5 = arith.truncf %4 : vector<16x32xf32> to vector<16x32xbf16>
    %c0_4 = arith.constant 0 : index
    %c0_5 = arith.constant 0 : index
    %6 = vector.load %arg4[%c0_4, %c0_5] : memref<32x32xf32, #tpu.memory_space<vmem>>, vector<32x32xf32>
    %7 = arith.truncf %6 : vector<32x32xf32> to vector<32x32xbf16>
    %cst = arith.constant dense<0.000000e+00> : vector<16x32xf32>
    %8 = tpu.matmul %5, %7, %cst {dimension_numbers = #tpu.dot_dimension_numbers<[1], [1], [0], [0], [0, 0, 1, 0], [], []>} : vector<16x32xbf16>, vector<32x32xbf16>, vector<16x32xf32> -> vector<16x32xf32>
    %9 = arith.addf %3, %8 : vector<16x32xf32>
    %c0_6 = arith.constant 0 : index
    %c0_7 = arith.constant 0 : index
    %10 = vector.load %arg7[%c0_6, %c0_7] : memref<16x32xf32, #tpu.memory_space<vmem>>, vector<16x32xf32>
    tpu.vector_store %arg7[%c0_6, %c0_7], %9 {strides = array<i32>} : memref<16x32xf32, #tpu.memory_space<vmem>>, vector<16x32xf32>,
    %c0_i32_8 = arith.constant 0 : i32
    %11 = arith.cmpi eq, %arg2, %c0_i32_8 : i32
    %12 = arith.extui %11 : i1 to i32
    %c0_i32_9 = arith.constant 0 : i32
    %13 = arith.cmpi ne, %12, %c0_i32_9 : i32
    scf.if %13 {
      %c0_10 = arith.constant 0 : index
      %c0_11 = arith.constant 0 : index
      %14 = vector.load %arg7[%c0_10, %c0_11] : memref<16x32xf32, #tpu.memory_space<vmem>>, vector<16x32xf32>
      %c0_12 = arith.constant 0 : index
      %c0_13 = arith.constant 0 : index
      %15 = vector.load %arg5[%c0_12, %c0_13] : memref<1x32xf32, #tpu.memory_space<vmem>>, vector<1x32xf32>
      %16 = vector.broadcast %15 : vector<1x32xf32> to vector<16x32xf32>
      %17 = arith.addf %14, %16 : vector<16x32xf32>
      %c0_14 = arith.constant 0 : index
      %c0_15 = arith.constant 0 : index
      %18 = vector.load %arg6[%c0_14, %c0_15] : memref<16x32xf32, #tpu.memory_space<vmem>>, vector<16x32xf32>
      tpu.vector_store %arg6[%c0_14, %c0_15], %17 {strides = array<i32>} : memref<16x32xf32, #tpu.memory_space<vmem>>, vector<16x32xf32>,
    } else {
    }
    return
  }
  func.func @transform_0(%arg0: i32, %arg1: i32, %arg2: i32) -> (i32, i32) {
    %c0_i32 = arith.constant 0 : i32
    return %arg0, %arg2 : i32, i32
  }
  func.func @transform_1(%arg0: i32, %arg1: i32, %arg2: i32) -> (i32, i32) {
    %c0_i32 = arith.constant 0 : i32
    return %arg1, %arg2 : i32, i32
  }
  func.func @transform_2(%arg0: i32, %arg1: i32, %arg2: i32) -> (i32, i32) {
    %c0_i32 = arith.constant 0 : i32
    %c0_i32_0 = arith.constant 0 : i32
    return %c0_i32, %arg1 : i32, i32
  }
  func.func @transform_3(%arg0: i32, %arg1: i32, %arg2: i32) -> (i32, i32) {
    %c0_i32 = arith.constant 0 : i32
    return %arg0, %arg1 : i32, i32
  }
}

module attributes {stable_mosaic.version = 11 : i64} {
  func.func @_attn_kernel(%arg0: i32, %arg1: i32, %arg2: memref<1x8x32xf32, #tpu.memory_space<vmem>>, %arg3: memref<1x12x64xf32, #tpu.memory_space<vmem>>, %arg4: memref<8x8xf32, #tpu.memory_space<vmem>>, %arg5: memref<8x8xf32, #tpu.memory_space<vmem>>, %arg6: memref<12x8xf32, #tpu.memory_space<vmem>>, %arg7: memref<12x8xf32, #tpu.memory_space<vmem>>, %arg8: memref<8x8xf32, #tpu.memory_space<vmem>>, %arg9: memref<1x8x12xi8, #tpu.memory_space<vmem>>, %arg10: memref<1x8x32xf32, #tpu.memory_space<vmem>>, %arg11: memref<4x8x8xf32, #tpu.memory_space<vmem>>, %arg12: memref<4x8x1xf32, #tpu.memory_space<vmem>>, %arg13: memref<4x8x1xf32, #tpu.memory_space<vmem>>, %arg14: memref<4x8x8xf32, #tpu.memory_space<vmem>>) attributes {dimension_semantics = [#tpu.dimension_semantics<parallel>, #tpu.dimension_semantics<arbitrary>], iteration_bounds = array<i64: 2, 1>, scalar_prefetch = 0 : i64, scratch_operands = 4 : i64, tpu.core_type = #tpu.core_type<tc>, window_params = [{transform_indices = @transform_0, window_bounds = array<i64: 1, 8, 32>}, {transform_indices = @transform_1, window_bounds = array<i64: 1, 12, 64>}, {pipeline_mode = #tpu.pipeline_mode<synchronous>, transform_indices = @transform_2, window_bounds = array<i64: 8, 8>}, {pipeline_mode = #tpu.pipeline_mode<synchronous>, transform_indices = @transform_3, window_bounds = array<i64: 8, 8>}, {transform_indices = @transform_4, window_bounds = array<i64: 12, 8>}, {transform_indices = @transform_5, window_bounds = array<i64: 12, 8>}, {pipeline_mode = #tpu.pipeline_mode<synchronous>, transform_indices = @transform_6, window_bounds = array<i64: 8, 8>}, {transform_indices = @transform_7, window_bounds = array<i64: 1, 8, 12>}, {transform_indices = @transform_8, window_bounds = array<i64: 1, 8, 32>}]} {
    %c0 = arith.constant 0 : index
    %c0_0 = arith.constant 0 : index
    %0 = vector.load %arg8[%c0, %c0_0] : memref<8x8xf32, #tpu.memory_space<vmem>>, vector<8x8xf32>
    %1 = arith.truncf %0 : vector<8x8xf32> to vector<8x8xbf16>
    %c0_i32 = arith.constant 0 : i32
    %2 = arith.cmpi eq, %arg1, %c0_i32 : i32
    %3 = arith.extui %2 : i1 to i32
    %c0_i32_1 = arith.constant 0 : i32
    %4 = arith.cmpi ne, %3, %c0_i32_1 : i32
    scf.if %4 {
      %cst_122 = arith.constant -1.000000e+30 : f32
      %211 = vector.broadcast %cst_122 : f32 to vector<4x8x1xf32>
      %c0_123 = arith.constant 0 : index
      %c0_124 = arith.constant 0 : index
      %c0_125 = arith.constant 0 : index
      %212 = vector.load %arg12[%c0_123, %c0_124, %c0_125] : memref<4x8x1xf32, #tpu.memory_space<vmem>>, vector<4x8x1xf32>
      tpu.vector_store %arg12[%c0_123, %c0_124, %c0_125], %211 {strides = array<i32>} : memref<4x8x1xf32, #tpu.memory_space<vmem>>, vector<4x8x1xf32>,
      %cst_126 = arith.constant 0.000000e+00 : f32
      %213 = vector.broadcast %cst_126 : f32 to vector<4x8x1xf32>
      %c0_127 = arith.constant 0 : index
      %c0_128 = arith.constant 0 : index
      %c0_129 = arith.constant 0 : index
      %214 = vector.load %arg13[%c0_127, %c0_128, %c0_129] : memref<4x8x1xf32, #tpu.memory_space<vmem>>, vector<4x8x1xf32>
      tpu.vector_store %arg13[%c0_127, %c0_128, %c0_129], %213 {strides = array<i32>} : memref<4x8x1xf32, #tpu.memory_space<vmem>>, vector<4x8x1xf32>,
      %cst_130 = arith.constant 0.000000e+00 : f32
      %215 = vector.broadcast %cst_130 : f32 to vector<4x8x8xf32>
      %c0_131 = arith.constant 0 : index
      %c0_132 = arith.constant 0 : index
      %c0_133 = arith.constant 0 : index
      %216 = vector.load %arg14[%c0_131, %c0_132, %c0_133] : memref<4x8x8xf32, #tpu.memory_space<vmem>>, vector<4x8x8xf32>
      tpu.vector_store %arg14[%c0_131, %c0_132, %c0_133], %215 {strides = array<i32>} : memref<4x8x8xf32, #tpu.memory_space<vmem>>, vector<4x8x8xf32>,
      %c0_134 = arith.constant 0 : index
      %c0_135 = arith.constant 0 : index
      %c0_136 = arith.constant 0 : index
      %217 = vector.load %arg2[%c0_134, %c0_135, %c0_136] : memref<1x8x32xf32, #tpu.memory_space<vmem>>, vector<1x8x32xf32>
      %218 = vector.shape_cast %217 : vector<1x8x32xf32> to vector<8x32xf32>
      %c0_137 = arith.constant 0 : index
      %c0_138 = arith.constant 0 : index
      %219 = vector.load %arg4[%c0_137, %c0_138] : memref<8x8xf32, #tpu.memory_space<vmem>>, vector<8x8xf32>
      %c0_139 = arith.constant 0 : index
      %c0_140 = arith.constant 0 : index
      %220 = vector.load %arg5[%c0_139, %c0_140] : memref<8x8xf32, #tpu.memory_space<vmem>>, vector<8x8xf32>
      %221 = vector.extract_strided_slice %218 {offsets = [0, 0], sizes = [8, 8], strides = [1, 1]} : vector<8x32xf32> to vector<8x8xf32>
      %222 = arith.truncf %221 : vector<8x8xf32> to vector<8x8xbf16>
      %cst_141 = arith.constant dense<0.000000e+00> : vector<8x8xf32>
      %223 = tpu.matmul %222, %1, %cst_141 {dimension_numbers = #tpu.dot_dimension_numbers<[1], [0], [0], [1], [0, 0, 1, 1], [], []>} : vector<8x8xbf16>, vector<8x8xbf16>, vector<8x8xf32> -> vector<8x8xf32>
      %224 = arith.mulf %221, %219 : vector<8x8xf32>
      %225 = arith.mulf %223, %220 : vector<8x8xf32>
      %226 = arith.addf %224, %225 : vector<8x8xf32>
      %c0_142 = arith.constant 0 : index
      %c0_143 = arith.constant 0 : index
      %c0_144 = arith.constant 0 : index
      %227 = vector.load %arg11[%c0_142, %c0_143, %c0_144] : memref<4x8x8xf32, #tpu.memory_space<vmem>>, vector<1x8x8xf32>
      %228 = vector.shape_cast %227 : vector<1x8x8xf32> to vector<8x8xf32>
      %229 = vector.shape_cast %226 : vector<8x8xf32> to vector<1x8x8xf32>
      tpu.vector_store %arg11[%c0_142, %c0_143, %c0_144], %229 {strides = array<i32>} : memref<4x8x8xf32, #tpu.memory_space<vmem>>, vector<1x8x8xf32>,
      %230 = vector.extract_strided_slice %218 {offsets = [0, 8], sizes = [8, 8], strides = [1, 1]} : vector<8x32xf32> to vector<8x8xf32>
      %231 = arith.truncf %230 : vector<8x8xf32> to vector<8x8xbf16>
      %cst_145 = arith.constant dense<0.000000e+00> : vector<8x8xf32>
      %232 = tpu.matmul %231, %1, %cst_145 {dimension_numbers = #tpu.dot_dimension_numbers<[1], [0], [0], [1], [0, 0, 1, 1], [], []>} : vector<8x8xbf16>, vector<8x8xbf16>, vector<8x8xf32> -> vector<8x8xf32>
      %233 = arith.mulf %230, %219 : vector<8x8xf32>
      %234 = arith.mulf %232, %220 : vector<8x8xf32>
      %235 = arith.addf %233, %234 : vector<8x8xf32>
      %c1_146 = arith.constant 1 : index
      %c0_147 = arith.constant 0 : index
      %c0_148 = arith.constant 0 : index
      %236 = vector.load %arg11[%c1_146, %c0_147, %c0_148] : memref<4x8x8xf32, #tpu.memory_space<vmem>>, vector<1x8x8xf32>
      %237 = vector.shape_cast %236 : vector<1x8x8xf32> to vector<8x8xf32>
      %238 = vector.shape_cast %235 : vector<8x8xf32> to vector<1x8x8xf32>
      tpu.vector_store %arg11[%c1_146, %c0_147, %c0_148], %238 {strides = array<i32>} : memref<4x8x8xf32, #tpu.memory_space<vmem>>, vector<1x8x8xf32>,
      %239 = vector.extract_strided_slice %218 {offsets = [0, 16], sizes = [8, 8], strides = [1, 1]} : vector<8x32xf32> to vector<8x8xf32>
      %240 = arith.truncf %239 : vector<8x8xf32> to vector<8x8xbf16>
      %cst_149 = arith.constant dense<0.000000e+00> : vector<8x8xf32>
      %241 = tpu.matmul %240, %1, %cst_149 {dimension_numbers = #tpu.dot_dimension_numbers<[1], [0], [0], [1], [0, 0, 1, 1], [], []>} : vector<8x8xbf16>, vector<8x8xbf16>, vector<8x8xf32> -> vector<8x8xf32>
      %242 = arith.mulf %239, %219 : vector<8x8xf32>
      %243 = arith.mulf %241, %220 : vector<8x8xf32>
      %244 = arith.addf %242, %243 : vector<8x8xf32>
      %c2_150 = arith.constant 2 : index
      %c0_151 = arith.constant 0 : index
      %c0_152 = arith.constant 0 : index
      %245 = vector.load %arg11[%c2_150, %c0_151, %c0_152] : memref<4x8x8xf32, #tpu.memory_space<vmem>>, vector<1x8x8xf32>
      %246 = vector.shape_cast %245 : vector<1x8x8xf32> to vector<8x8xf32>
      %247 = vector.shape_cast %244 : vector<8x8xf32> to vector<1x8x8xf32>
      tpu.vector_store %arg11[%c2_150, %c0_151, %c0_152], %247 {strides = array<i32>} : memref<4x8x8xf32, #tpu.memory_space<vmem>>, vector<1x8x8xf32>,
      %248 = vector.extract_strided_slice %218 {offsets = [0, 24], sizes = [8, 8], strides = [1, 1]} : vector<8x32xf32> to vector<8x8xf32>
      %249 = arith.truncf %248 : vector<8x8xf32> to vector<8x8xbf16>
      %cst_153 = arith.constant dense<0.000000e+00> : vector<8x8xf32>
      %250 = tpu.matmul %249, %1, %cst_153 {dimension_numbers = #tpu.dot_dimension_numbers<[1], [0], [0], [1], [0, 0, 1, 1], [], []>} : vector<8x8xbf16>, vector<8x8xbf16>, vector<8x8xf32> -> vector<8x8xf32>
      %251 = arith.mulf %248, %219 : vector<8x8xf32>
      %252 = arith.mulf %250, %220 : vector<8x8xf32>
      %253 = arith.addf %251, %252 : vector<8x8xf32>
      %c3_154 = arith.constant 3 : index
      %c0_155 = arith.constant 0 : index
      %c0_156 = arith.constant 0 : index
      %254 = vector.load %arg11[%c3_154, %c0_155, %c0_156] : memref<4x8x8xf32, #tpu.memory_space<vmem>>, vector<1x8x8xf32>
      %255 = vector.shape_cast %254 : vector<1x8x8xf32> to vector<8x8xf32>
      %256 = vector.shape_cast %253 : vector<8x8xf32> to vector<1x8x8xf32>
      tpu.vector_store %arg11[%c3_154, %c0_155, %c0_156], %256 {strides = array<i32>} : memref<4x8x8xf32, #tpu.memory_space<vmem>>, vector<1x8x8xf32>,
    } else {
    }
    %c0_2 = arith.constant 0 : index
    %c0_3 = arith.constant 0 : index
    %c0_4 = arith.constant 0 : index
    %5 = vector.load %arg3[%c0_2, %c0_3, %c0_4] : memref<1x12x64xf32, #tpu.memory_space<vmem>>, vector<1x12x64xf32>
    %6 = vector.shape_cast %5 : vector<1x12x64xf32> to vector<12x64xf32>
    %c0_5 = arith.constant 0 : index
    %c0_6 = arith.constant 0 : index
    %c0_7 = arith.constant 0 : index
    %7 = vector.load %arg9[%c0_5, %c0_6, %c0_7] : memref<1x8x12xi8, #tpu.memory_space<vmem>>, vector<1x8x12xi8>
    %8 = vector.shape_cast %7 : vector<1x8x12xi8> to vector<8x12xi8>
    %9 = arith.sitofp %8 : vector<8x12xi8> to vector<8x12xf32>
    %c0_8 = arith.constant 0 : index
    %c0_9 = arith.constant 0 : index
    %10 = vector.load %arg6[%c0_8, %c0_9] : memref<12x8xf32, #tpu.memory_space<vmem>>, vector<12x8xf32>
    %c0_10 = arith.constant 0 : index
    %c0_11 = arith.constant 0 : index
    %11 = vector.load %arg7[%c0_10, %c0_11] : memref<12x8xf32, #tpu.memory_space<vmem>>, vector<12x8xf32>
    %12 = vector.extract_strided_slice %6 {offsets = [0, 0], sizes = [12, 8], strides = [1, 1]} : vector<12x64xf32> to vector<12x8xf32>
    %13 = arith.truncf %12 : vector<12x8xf32> to vector<12x8xbf16>
    %cst = arith.constant dense<0.000000e+00> : vector<12x8xf32>
    %14 = tpu.matmul %13, %1, %cst {dimension_numbers = #tpu.dot_dimension_numbers<[1], [0], [0], [1], [0, 0, 1, 1], [], []>} : vector<12x8xbf16>, vector<8x8xbf16>, vector<12x8xf32> -> vector<12x8xf32>
    %15 = arith.mulf %12, %10 : vector<12x8xf32>
    %16 = arith.mulf %14, %11 : vector<12x8xf32>
    %17 = arith.addf %15, %16 : vector<12x8xf32>
    %18 = vector.extract_strided_slice %6 {offsets = [0, 32], sizes = [12, 8], strides = [1, 1]} : vector<12x64xf32> to vector<12x8xf32>
    %c0_12 = arith.constant 0 : index
    %c0_13 = arith.constant 0 : index
    %c0_14 = arith.constant 0 : index
    %19 = vector.load %arg11[%c0_12, %c0_13, %c0_14] : memref<4x8x8xf32, #tpu.memory_space<vmem>>, vector<1x8x8xf32>
    %20 = vector.shape_cast %19 : vector<1x8x8xf32> to vector<8x8xf32>
    %21 = arith.truncf %20 : vector<8x8xf32> to vector<8x8xbf16>
    %22 = arith.truncf %17 : vector<12x8xf32> to vector<12x8xbf16>
    %cst_15 = arith.constant dense<0.000000e+00> : vector<8x12xf32>
    %23 = tpu.matmul %21, %22, %cst_15 {dimension_numbers = #tpu.dot_dimension_numbers<[1], [1], [0], [0], [0, 0, 1, 0], [], []>} : vector<8x8xbf16>, vector<12x8xbf16>, vector<8x12xf32> -> vector<8x12xf32>
    %cst_16 = arith.constant 0.000000e+00 : f32
    %24 = vector.broadcast %cst_16 : f32 to vector<8x12xf32>
    %25 = arith.cmpf one, %9, %24 : vector<8x12xf32>
    %cst_17 = arith.constant -1.000000e+30 : f32
    %26 = vector.broadcast %cst_17 : f32 to vector<8x12xf32>
    %27 = arith.select %25, %23, %26 : vector<8x12xi1>, vector<8x12xf32>
    %c0_18 = arith.constant 0 : index
    %c0_19 = arith.constant 0 : index
    %c0_20 = arith.constant 0 : index
    %28 = vector.load %arg12[%c0_18, %c0_19, %c0_20] : memref<4x8x1xf32, #tpu.memory_space<vmem>>, vector<1x8x1xf32>
    %29 = vector.shape_cast %28 : vector<1x8x1xf32> to vector<8x1xf32>
    %cst_21 = arith.constant dense<0xFF800000> : vector<8xf32>
    %30 = vector.multi_reduction <maximumf>, %27, %cst_21 [1] : vector<8x12xf32> to vector<8xf32>
    %31 = vector.shape_cast %30 : vector<8xf32> to vector<8x1xf32>
    %32 = arith.maximumf %29, %31 : vector<8x1xf32>
    %33 = arith.subf %29, %32 : vector<8x1xf32>
    %34 = math.exp %33 : vector<8x1xf32>
    %35 = vector.broadcast %32 : vector<8x1xf32> to vector<8x12xf32>
    %36 = arith.subf %27, %35 : vector<8x12xf32>
    %37 = math.exp %36 : vector<8x12xf32>
    %c0_22 = arith.constant 0 : index
    %c0_23 = arith.constant 0 : index
    %c0_24 = arith.constant 0 : index
    %38 = vector.load %arg13[%c0_22, %c0_23, %c0_24] : memref<4x8x1xf32, #tpu.memory_space<vmem>>, vector<1x8x1xf32>
    %39 = vector.shape_cast %38 : vector<1x8x1xf32> to vector<8x1xf32>
    %40 = arith.mulf %34, %39 : vector<8x1xf32>
    %cst_25 = arith.constant dense<0.000000e+00> : vector<8xf32>
    %41 = vector.multi_reduction <add>, %37, %cst_25 [1] : vector<8x12xf32> to vector<8xf32>
    %42 = vector.shape_cast %41 : vector<8xf32> to vector<8x1xf32>
    %43 = arith.addf %40, %42 : vector<8x1xf32>
    %c0_26 = arith.constant 0 : index
    %c0_27 = arith.constant 0 : index
    %c0_28 = arith.constant 0 : index
    %44 = vector.load %arg13[%c0_26, %c0_27, %c0_28] : memref<4x8x1xf32, #tpu.memory_space<vmem>>, vector<1x8x1xf32>
    %45 = vector.shape_cast %44 : vector<1x8x1xf32> to vector<8x1xf32>
    %46 = vector.shape_cast %43 : vector<8x1xf32> to vector<1x8x1xf32>
    tpu.vector_store %arg13[%c0_26, %c0_27, %c0_28], %46 {strides = array<i32>} : memref<4x8x1xf32, #tpu.memory_space<vmem>>, vector<1x8x1xf32>,
    %c0_29 = arith.constant 0 : index
    %c0_30 = arith.constant 0 : index
    %c0_31 = arith.constant 0 : index
    %47 = vector.load %arg14[%c0_29, %c0_30, %c0_31] : memref<4x8x8xf32, #tpu.memory_space<vmem>>, vector<1x8x8xf32>
    %48 = vector.shape_cast %47 : vector<1x8x8xf32> to vector<8x8xf32>
    %49 = vector.broadcast %34 : vector<8x1xf32> to vector<8x8xf32>
    %50 = arith.mulf %49, %48 : vector<8x8xf32>
    %51 = arith.truncf %37 : vector<8x12xf32> to vector<8x12xbf16>
    %52 = arith.truncf %18 : vector<12x8xf32> to vector<12x8xbf16>
    %cst_32 = arith.constant dense<0.000000e+00> : vector<8x8xf32>
    %53 = tpu.matmul %51, %52, %cst_32 {dimension_numbers = #tpu.dot_dimension_numbers<[1], [0], [0], [1], [0, 0, 1, 1], [], []>} : vector<8x12xbf16>, vector<12x8xbf16>, vector<8x8xf32> -> vector<8x8xf32>
    %54 = arith.addf %50, %53 : vector<8x8xf32>
    %c0_33 = arith.constant 0 : index
    %c0_34 = arith.constant 0 : index
    %c0_35 = arith.constant 0 : index
    %55 = vector.load %arg14[%c0_33, %c0_34, %c0_35] : memref<4x8x8xf32, #tpu.memory_space<vmem>>, vector<1x8x8xf32>
    %56 = vector.shape_cast %55 : vector<1x8x8xf32> to vector<8x8xf32>
    %57 = vector.shape_cast %54 : vector<8x8xf32> to vector<1x8x8xf32>
    tpu.vector_store %arg14[%c0_33, %c0_34, %c0_35], %57 {strides = array<i32>} : memref<4x8x8xf32, #tpu.memory_space<vmem>>, vector<1x8x8xf32>,
    %c0_36 = arith.constant 0 : index
    %c0_37 = arith.constant 0 : index
    %c0_38 = arith.constant 0 : index
    %58 = vector.load %arg12[%c0_36, %c0_37, %c0_38] : memref<4x8x1xf32, #tpu.memory_space<vmem>>, vector<1x8x1xf32>
    %59 = vector.shape_cast %58 : vector<1x8x1xf32> to vector<8x1xf32>
    %60 = vector.shape_cast %32 : vector<8x1xf32> to vector<1x8x1xf32>
    tpu.vector_store %arg12[%c0_36, %c0_37, %c0_38], %60 {strides = array<i32>} : memref<4x8x1xf32, #tpu.memory_space<vmem>>, vector<1x8x1xf32>,
    %61 = vector.extract_strided_slice %6 {offsets = [0, 8], sizes = [12, 8], strides = [1, 1]} : vector<12x64xf32> to vector<12x8xf32>
    %62 = arith.truncf %61 : vector<12x8xf32> to vector<12x8xbf16>
    %cst_39 = arith.constant dense<0.000000e+00> : vector<12x8xf32>
    %63 = tpu.matmul %62, %1, %cst_39 {dimension_numbers = #tpu.dot_dimension_numbers<[1], [0], [0], [1], [0, 0, 1, 1], [], []>} : vector<12x8xbf16>, vector<8x8xbf16>, vector<12x8xf32> -> vector<12x8xf32>
    %64 = arith.mulf %61, %10 : vector<12x8xf32>
    %65 = arith.mulf %63, %11 : vector<12x8xf32>
    %66 = arith.addf %64, %65 : vector<12x8xf32>
    %67 = vector.extract_strided_slice %6 {offsets = [0, 40], sizes = [12, 8], strides = [1, 1]} : vector<12x64xf32> to vector<12x8xf32>
    %c1 = arith.constant 1 : index
    %c0_40 = arith.constant 0 : index
    %c0_41 = arith.constant 0 : index
    %68 = vector.load %arg11[%c1, %c0_40, %c0_41] : memref<4x8x8xf32, #tpu.memory_space<vmem>>, vector<1x8x8xf32>
    %69 = vector.shape_cast %68 : vector<1x8x8xf32> to vector<8x8xf32>
    %70 = arith.truncf %69 : vector<8x8xf32> to vector<8x8xbf16>
    %71 = arith.truncf %66 : vector<12x8xf32> to vector<12x8xbf16>
    %cst_42 = arith.constant dense<0.000000e+00> : vector<8x12xf32>
    %72 = tpu.matmul %70, %71, %cst_42 {dimension_numbers = #tpu.dot_dimension_numbers<[1], [1], [0], [0], [0, 0, 1, 0], [], []>} : vector<8x8xbf16>, vector<12x8xbf16>, vector<8x12xf32> -> vector<8x12xf32>
    %cst_43 = arith.constant 0.000000e+00 : f32
    %73 = vector.broadcast %cst_43 : f32 to vector<8x12xf32>
    %74 = arith.cmpf one, %9, %73 : vector<8x12xf32>
    %cst_44 = arith.constant -1.000000e+30 : f32
    %75 = vector.broadcast %cst_44 : f32 to vector<8x12xf32>
    %76 = arith.select %74, %72, %75 : vector<8x12xi1>, vector<8x12xf32>
    %c1_45 = arith.constant 1 : index
    %c0_46 = arith.constant 0 : index
    %c0_47 = arith.constant 0 : index
    %77 = vector.load %arg12[%c1_45, %c0_46, %c0_47] : memref<4x8x1xf32, #tpu.memory_space<vmem>>, vector<1x8x1xf32>
    %78 = vector.shape_cast %77 : vector<1x8x1xf32> to vector<8x1xf32>
    %cst_48 = arith.constant dense<0xFF800000> : vector<8xf32>
    %79 = vector.multi_reduction <maximumf>, %76, %cst_48 [1] : vector<8x12xf32> to vector<8xf32>
    %80 = vector.shape_cast %79 : vector<8xf32> to vector<8x1xf32>
    %81 = arith.maximumf %78, %80 : vector<8x1xf32>
    %82 = arith.subf %78, %81 : vector<8x1xf32>
    %83 = math.exp %82 : vector<8x1xf32>
    %84 = vector.broadcast %81 : vector<8x1xf32> to vector<8x12xf32>
    %85 = arith.subf %76, %84 : vector<8x12xf32>
    %86 = math.exp %85 : vector<8x12xf32>
    %c1_49 = arith.constant 1 : index
    %c0_50 = arith.constant 0 : index
    %c0_51 = arith.constant 0 : index
    %87 = vector.load %arg13[%c1_49, %c0_50, %c0_51] : memref<4x8x1xf32, #tpu.memory_space<vmem>>, vector<1x8x1xf32>
    %88 = vector.shape_cast %87 : vector<1x8x1xf32> to vector<8x1xf32>
    %89 = arith.mulf %83, %88 : vector<8x1xf32>
    %cst_52 = arith.constant dense<0.000000e+00> : vector<8xf32>
    %90 = vector.multi_reduction <add>, %86, %cst_52 [1] : vector<8x12xf32> to vector<8xf32>
    %91 = vector.shape_cast %90 : vector<8xf32> to vector<8x1xf32>
    %92 = arith.addf %89, %91 : vector<8x1xf32>
    %c1_53 = arith.constant 1 : index
    %c0_54 = arith.constant 0 : index
    %c0_55 = arith.constant 0 : index
    %93 = vector.load %arg13[%c1_53, %c0_54, %c0_55] : memref<4x8x1xf32, #tpu.memory_space<vmem>>, vector<1x8x1xf32>
    %94 = vector.shape_cast %93 : vector<1x8x1xf32> to vector<8x1xf32>
    %95 = vector.shape_cast %92 : vector<8x1xf32> to vector<1x8x1xf32>
    tpu.vector_store %arg13[%c1_53, %c0_54, %c0_55], %95 {strides = array<i32>} : memref<4x8x1xf32, #tpu.memory_space<vmem>>, vector<1x8x1xf32>,
    %c1_56 = arith.constant 1 : index
    %c0_57 = arith.constant 0 : index
    %c0_58 = arith.constant 0 : index
    %96 = vector.load %arg14[%c1_56, %c0_57, %c0_58] : memref<4x8x8xf32, #tpu.memory_space<vmem>>, vector<1x8x8xf32>
    %97 = vector.shape_cast %96 : vector<1x8x8xf32> to vector<8x8xf32>
    %98 = vector.broadcast %83 : vector<8x1xf32> to vector<8x8xf32>
    %99 = arith.mulf %98, %97 : vector<8x8xf32>
    %100 = arith.truncf %86 : vector<8x12xf32> to vector<8x12xbf16>
    %101 = arith.truncf %67 : vector<12x8xf32> to vector<12x8xbf16>
    %cst_59 = arith.constant dense<0.000000e+00> : vector<8x8xf32>
    %102 = tpu.matmul %100, %101, %cst_59 {dimension_numbers = #tpu.dot_dimension_numbers<[1], [0], [0], [1], [0, 0, 1, 1], [], []>} : vector<8x12xbf16>, vector<12x8xbf16>, vector<8x8xf32> -> vector<8x8xf32>
    %103 = arith.addf %99, %102 : vector<8x8xf32>
    %c1_60 = arith.constant 1 : index
    %c0_61 = arith.constant 0 : index
    %c0_62 = arith.constant 0 : index
    %104 = vector.load %arg14[%c1_60, %c0_61, %c0_62] : memref<4x8x8xf32, #tpu.memory_space<vmem>>, vector<1x8x8xf32>
    %105 = vector.shape_cast %104 : vector<1x8x8xf32> to vector<8x8xf32>
    %106 = vector.shape_cast %103 : vector<8x8xf32> to vector<1x8x8xf32>
    tpu.vector_store %arg14[%c1_60, %c0_61, %c0_62], %106 {strides = array<i32>} : memref<4x8x8xf32, #tpu.memory_space<vmem>>, vector<1x8x8xf32>,
    %c1_63 = arith.constant 1 : index
    %c0_64 = arith.constant 0 : index
    %c0_65 = arith.constant 0 : index
    %107 = vector.load %arg12[%c1_63, %c0_64, %c0_65] : memref<4x8x1xf32, #tpu.memory_space<vmem>>, vector<1x8x1xf32>
    %108 = vector.shape_cast %107 : vector<1x8x1xf32> to vector<8x1xf32>
    %109 = vector.shape_cast %81 : vector<8x1xf32> to vector<1x8x1xf32>
    tpu.vector_store %arg12[%c1_63, %c0_64, %c0_65], %109 {strides = array<i32>} : memref<4x8x1xf32, #tpu.memory_space<vmem>>, vector<1x8x1xf32>,
    %110 = vector.extract_strided_slice %6 {offsets = [0, 16], sizes = [12, 8], strides = [1, 1]} : vector<12x64xf32> to vector<12x8xf32>
    %111 = arith.truncf %110 : vector<12x8xf32> to vector<12x8xbf16>
    %cst_66 = arith.constant dense<0.000000e+00> : vector<12x8xf32>
    %112 = tpu.matmul %111, %1, %cst_66 {dimension_numbers = #tpu.dot_dimension_numbers<[1], [0], [0], [1], [0, 0, 1, 1], [], []>} : vector<12x8xbf16>, vector<8x8xbf16>, vector<12x8xf32> -> vector<12x8xf32>
    %113 = arith.mulf %110, %10 : vector<12x8xf32>
    %114 = arith.mulf %112, %11 : vector<12x8xf32>
    %115 = arith.addf %113, %114 : vector<12x8xf32>
    %116 = vector.extract_strided_slice %6 {offsets = [0, 48], sizes = [12, 8], strides = [1, 1]} : vector<12x64xf32> to vector<12x8xf32>
    %c2 = arith.constant 2 : index
    %c0_67 = arith.constant 0 : index
    %c0_68 = arith.constant 0 : index
    %117 = vector.load %arg11[%c2, %c0_67, %c0_68] : memref<4x8x8xf32, #tpu.memory_space<vmem>>, vector<1x8x8xf32>
    %118 = vector.shape_cast %117 : vector<1x8x8xf32> to vector<8x8xf32>
    %119 = arith.truncf %118 : vector<8x8xf32> to vector<8x8xbf16>
    %120 = arith.truncf %115 : vector<12x8xf32> to vector<12x8xbf16>
    %cst_69 = arith.constant dense<0.000000e+00> : vector<8x12xf32>
    %121 = tpu.matmul %119, %120, %cst_69 {dimension_numbers = #tpu.dot_dimension_numbers<[1], [1], [0], [0], [0, 0, 1, 0], [], []>} : vector<8x8xbf16>, vector<12x8xbf16>, vector<8x12xf32> -> vector<8x12xf32>
    %cst_70 = arith.constant 0.000000e+00 : f32
    %122 = vector.broadcast %cst_70 : f32 to vector<8x12xf32>
    %123 = arith.cmpf one, %9, %122 : vector<8x12xf32>
    %cst_71 = arith.constant -1.000000e+30 : f32
    %124 = vector.broadcast %cst_71 : f32 to vector<8x12xf32>
    %125 = arith.select %123, %121, %124 : vector<8x12xi1>, vector<8x12xf32>
    %c2_72 = arith.constant 2 : index
    %c0_73 = arith.constant 0 : index
    %c0_74 = arith.constant 0 : index
    %126 = vector.load %arg12[%c2_72, %c0_73, %c0_74] : memref<4x8x1xf32, #tpu.memory_space<vmem>>, vector<1x8x1xf32>
    %127 = vector.shape_cast %126 : vector<1x8x1xf32> to vector<8x1xf32>
    %cst_75 = arith.constant dense<0xFF800000> : vector<8xf32>
    %128 = vector.multi_reduction <maximumf>, %125, %cst_75 [1] : vector<8x12xf32> to vector<8xf32>
    %129 = vector.shape_cast %128 : vector<8xf32> to vector<8x1xf32>
    %130 = arith.maximumf %127, %129 : vector<8x1xf32>
    %131 = arith.subf %127, %130 : vector<8x1xf32>
    %132 = math.exp %131 : vector<8x1xf32>
    %133 = vector.broadcast %130 : vector<8x1xf32> to vector<8x12xf32>
    %134 = arith.subf %125, %133 : vector<8x12xf32>
    %135 = math.exp %134 : vector<8x12xf32>
    %c2_76 = arith.constant 2 : index
    %c0_77 = arith.constant 0 : index
    %c0_78 = arith.constant 0 : index
    %136 = vector.load %arg13[%c2_76, %c0_77, %c0_78] : memref<4x8x1xf32, #tpu.memory_space<vmem>>, vector<1x8x1xf32>
    %137 = vector.shape_cast %136 : vector<1x8x1xf32> to vector<8x1xf32>
    %138 = arith.mulf %132, %137 : vector<8x1xf32>
    %cst_79 = arith.constant dense<0.000000e+00> : vector<8xf32>
    %139 = vector.multi_reduction <add>, %135, %cst_79 [1] : vector<8x12xf32> to vector<8xf32>
    %140 = vector.shape_cast %139 : vector<8xf32> to vector<8x1xf32>
    %141 = arith.addf %138, %140 : vector<8x1xf32>
    %c2_80 = arith.constant 2 : index
    %c0_81 = arith.constant 0 : index
    %c0_82 = arith.constant 0 : index
    %142 = vector.load %arg13[%c2_80, %c0_81, %c0_82] : memref<4x8x1xf32, #tpu.memory_space<vmem>>, vector<1x8x1xf32>
    %143 = vector.shape_cast %142 : vector<1x8x1xf32> to vector<8x1xf32>
    %144 = vector.shape_cast %141 : vector<8x1xf32> to vector<1x8x1xf32>
    tpu.vector_store %arg13[%c2_80, %c0_81, %c0_82], %144 {strides = array<i32>} : memref<4x8x1xf32, #tpu.memory_space<vmem>>, vector<1x8x1xf32>,
    %c2_83 = arith.constant 2 : index
    %c0_84 = arith.constant 0 : index
    %c0_85 = arith.constant 0 : index
    %145 = vector.load %arg14[%c2_83, %c0_84, %c0_85] : memref<4x8x8xf32, #tpu.memory_space<vmem>>, vector<1x8x8xf32>
    %146 = vector.shape_cast %145 : vector<1x8x8xf32> to vector<8x8xf32>
    %147 = vector.broadcast %132 : vector<8x1xf32> to vector<8x8xf32>
    %148 = arith.mulf %147, %146 : vector<8x8xf32>
    %149 = arith.truncf %135 : vector<8x12xf32> to vector<8x12xbf16>
    %150 = arith.truncf %116 : vector<12x8xf32> to vector<12x8xbf16>
    %cst_86 = arith.constant dense<0.000000e+00> : vector<8x8xf32>
    %151 = tpu.matmul %149, %150, %cst_86 {dimension_numbers = #tpu.dot_dimension_numbers<[1], [0], [0], [1], [0, 0, 1, 1], [], []>} : vector<8x12xbf16>, vector<12x8xbf16>, vector<8x8xf32> -> vector<8x8xf32>
    %152 = arith.addf %148, %151 : vector<8x8xf32>
    %c2_87 = arith.constant 2 : index
    %c0_88 = arith.constant 0 : index
    %c0_89 = arith.constant 0 : index
    %153 = vector.load %arg14[%c2_87, %c0_88, %c0_89] : memref<4x8x8xf32, #tpu.memory_space<vmem>>, vector<1x8x8xf32>
    %154 = vector.shape_cast %153 : vector<1x8x8xf32> to vector<8x8xf32>
    %155 = vector.shape_cast %152 : vector<8x8xf32> to vector<1x8x8xf32>
    tpu.vector_store %arg14[%c2_87, %c0_88, %c0_89], %155 {strides = array<i32>} : memref<4x8x8xf32, #tpu.memory_space<vmem>>, vector<1x8x8xf32>,
    %c2_90 = arith.constant 2 : index
    %c0_91 = arith.constant 0 : index
    %c0_92 = arith.constant 0 : index
    %156 = vector.load %arg12[%c2_90, %c0_91, %c0_92] : memref<4x8x1xf32, #tpu.memory_space<vmem>>, vector<1x8x1xf32>
    %157 = vector.shape_cast %156 : vector<1x8x1xf32> to vector<8x1xf32>
    %158 = vector.shape_cast %130 : vector<8x1xf32> to vector<1x8x1xf32>
    tpu.vector_store %arg12[%c2_90, %c0_91, %c0_92], %158 {strides = array<i32>} : memref<4x8x1xf32, #tpu.memory_space<vmem>>, vector<1x8x1xf32>,
    %159 = vector.extract_strided_slice %6 {offsets = [0, 24], sizes = [12, 8], strides = [1, 1]} : vector<12x64xf32> to vector<12x8xf32>
    %160 = arith.truncf %159 : vector<12x8xf32> to vector<12x8xbf16>
    %cst_93 = arith.constant dense<0.000000e+00> : vector<12x8xf32>
    %161 = tpu.matmul %160, %1, %cst_93 {dimension_numbers = #tpu.dot_dimension_numbers<[1], [0], [0], [1], [0, 0, 1, 1], [], []>} : vector<12x8xbf16>, vector<8x8xbf16>, vector<12x8xf32> -> vector<12x8xf32>
    %162 = arith.mulf %159, %10 : vector<12x8xf32>
    %163 = arith.mulf %161, %11 : vector<12x8xf32>
    %164 = arith.addf %162, %163 : vector<12x8xf32>
    %165 = vector.extract_strided_slice %6 {offsets = [0, 56], sizes = [12, 8], strides = [1, 1]} : vector<12x64xf32> to vector<12x8xf32>
    %c3 = arith.constant 3 : index
    %c0_94 = arith.constant 0 : index
    %c0_95 = arith.constant 0 : index
    %166 = vector.load %arg11[%c3, %c0_94, %c0_95] : memref<4x8x8xf32, #tpu.memory_space<vmem>>, vector<1x8x8xf32>
    %167 = vector.shape_cast %166 : vector<1x8x8xf32> to vector<8x8xf32>
    %168 = arith.truncf %167 : vector<8x8xf32> to vector<8x8xbf16>
    %169 = arith.truncf %164 : vector<12x8xf32> to vector<12x8xbf16>
    %cst_96 = arith.constant dense<0.000000e+00> : vector<8x12xf32>
    %170 = tpu.matmul %168, %169, %cst_96 {dimension_numbers = #tpu.dot_dimension_numbers<[1], [1], [0], [0], [0, 0, 1, 0], [], []>} : vector<8x8xbf16>, vector<12x8xbf16>, vector<8x12xf32> -> vector<8x12xf32>
    %cst_97 = arith.constant 0.000000e+00 : f32
    %171 = vector.broadcast %cst_97 : f32 to vector<8x12xf32>
    %172 = arith.cmpf one, %9, %171 : vector<8x12xf32>
    %cst_98 = arith.constant -1.000000e+30 : f32
    %173 = vector.broadcast %cst_98 : f32 to vector<8x12xf32>
    %174 = arith.select %172, %170, %173 : vector<8x12xi1>, vector<8x12xf32>
    %c3_99 = arith.constant 3 : index
    %c0_100 = arith.constant 0 : index
    %c0_101 = arith.constant 0 : index
    %175 = vector.load %arg12[%c3_99, %c0_100, %c0_101] : memref<4x8x1xf32, #tpu.memory_space<vmem>>, vector<1x8x1xf32>
    %176 = vector.shape_cast %175 : vector<1x8x1xf32> to vector<8x1xf32>
    %cst_102 = arith.constant dense<0xFF800000> : vector<8xf32>
    %177 = vector.multi_reduction <maximumf>, %174, %cst_102 [1] : vector<8x12xf32> to vector<8xf32>
    %178 = vector.shape_cast %177 : vector<8xf32> to vector<8x1xf32>
    %179 = arith.maximumf %176, %178 : vector<8x1xf32>
    %180 = arith.subf %176, %179 : vector<8x1xf32>
    %181 = math.exp %180 : vector<8x1xf32>
    %182 = vector.broadcast %179 : vector<8x1xf32> to vector<8x12xf32>
    %183 = arith.subf %174, %182 : vector<8x12xf32>
    %184 = math.exp %183 : vector<8x12xf32>
    %c3_103 = arith.constant 3 : index
    %c0_104 = arith.constant 0 : index
    %c0_105 = arith.constant 0 : index
    %185 = vector.load %arg13[%c3_103, %c0_104, %c0_105] : memref<4x8x1xf32, #tpu.memory_space<vmem>>, vector<1x8x1xf32>
    %186 = vector.shape_cast %185 : vector<1x8x1xf32> to vector<8x1xf32>
    %187 = arith.mulf %181, %186 : vector<8x1xf32>
    %cst_106 = arith.constant dense<0.000000e+00> : vector<8xf32>
    %188 = vector.multi_reduction <add>, %184, %cst_106 [1] : vector<8x12xf32> to vector<8xf32>
    %189 = vector.shape_cast %188 : vector<8xf32> to vector<8x1xf32>
    %190 = arith.addf %187, %189 : vector<8x1xf32>
    %c3_107 = arith.constant 3 : index
    %c0_108 = arith.constant 0 : index
    %c0_109 = arith.constant 0 : index
    %191 = vector.load %arg13[%c3_107, %c0_108, %c0_109] : memref<4x8x1xf32, #tpu.memory_space<vmem>>, vector<1x8x1xf32>
    %192 = vector.shape_cast %191 : vector<1x8x1xf32> to vector<8x1xf32>
    %193 = vector.shape_cast %190 : vector<8x1xf32> to vector<1x8x1xf32>
    tpu.vector_store %arg13[%c3_107, %c0_108, %c0_109], %193 {strides = array<i32>} : memref<4x8x1xf32, #tpu.memory_space<vmem>>, vector<1x8x1xf32>,
    %c3_110 = arith.constant 3 : index
    %c0_111 = arith.constant 0 : index
    %c0_112 = arith.constant 0 : index
    %194 = vector.load %arg14[%c3_110, %c0_111, %c0_112] : memref<4x8x8xf32, #tpu.memory_space<vmem>>, vector<1x8x8xf32>
    %195 = vector.shape_cast %194 : vector<1x8x8xf32> to vector<8x8xf32>
    %196 = vector.broadcast %181 : vector<8x1xf32> to vector<8x8xf32>
    %197 = arith.mulf %196, %195 : vector<8x8xf32>
    %198 = arith.truncf %184 : vector<8x12xf32> to vector<8x12xbf16>
    %199 = arith.truncf %165 : vector<12x8xf32> to vector<12x8xbf16>
    %cst_113 = arith.constant dense<0.000000e+00> : vector<8x8xf32>
    %200 = tpu.matmul %198, %199, %cst_113 {dimension_numbers = #tpu.dot_dimension_numbers<[1], [0], [0], [1], [0, 0, 1, 1], [], []>} : vector<8x12xbf16>, vector<12x8xbf16>, vector<8x8xf32> -> vector<8x8xf32>
    %201 = arith.addf %197, %200 : vector<8x8xf32>
    %c3_114 = arith.constant 3 : index
    %c0_115 = arith.constant 0 : index
    %c0_116 = arith.constant 0 : index
    %202 = vector.load %arg14[%c3_114, %c0_115, %c0_116] : memref<4x8x8xf32, #tpu.memory_space<vmem>>, vector<1x8x8xf32>
    %203 = vector.shape_cast %202 : vector<1x8x8xf32> to vector<8x8xf32>
    %204 = vector.shape_cast %201 : vector<8x8xf32> to vector<1x8x8xf32>
    tpu.vector_store %arg14[%c3_114, %c0_115, %c0_116], %204 {strides = array<i32>} : memref<4x8x8xf32, #tpu.memory_space<vmem>>, vector<1x8x8xf32>,
    %c3_117 = arith.constant 3 : index
    %c0_118 = arith.constant 0 : index
    %c0_119 = arith.constant 0 : index
    %205 = vector.load %arg12[%c3_117, %c0_118, %c0_119] : memref<4x8x1xf32, #tpu.memory_space<vmem>>, vector<1x8x1xf32>
    %206 = vector.shape_cast %205 : vector<1x8x1xf32> to vector<8x1xf32>
    %207 = vector.shape_cast %179 : vector<8x1xf32> to vector<1x8x1xf32>
    tpu.vector_store %arg12[%c3_117, %c0_118, %c0_119], %207 {strides = array<i32>} : memref<4x8x1xf32, #tpu.memory_space<vmem>>, vector<1x8x1xf32>,
    %c0_i32_120 = arith.constant 0 : i32
    %208 = arith.cmpi eq, %arg1, %c0_i32_120 : i32
    %209 = arith.extui %208 : i1 to i32
    %c0_i32_121 = arith.constant 0 : i32
    %210 = arith.cmpi ne, %209, %c0_i32_121 : i32
    scf.if %210 {
      %c0_122 = arith.constant 0 : index
      %c0_123 = arith.constant 0 : index
      %c0_124 = arith.constant 0 : index
      %211 = vector.load %arg14[%c0_122, %c0_123, %c0_124] : memref<4x8x8xf32, #tpu.memory_space<vmem>>, vector<1x8x8xf32>
      %212 = vector.shape_cast %211 : vector<1x8x8xf32> to vector<8x8xf32>
      %c0_125 = arith.constant 0 : index
      %c0_126 = arith.constant 0 : index
      %c0_127 = arith.constant 0 : index
      %213 = vector.load %arg13[%c0_125, %c0_126, %c0_127] : memref<4x8x1xf32, #tpu.memory_space<vmem>>, vector<1x8x1xf32>
      %214 = vector.shape_cast %213 : vector<1x8x1xf32> to vector<8x1xf32>
      %215 = tpu.reciprocal %214 {approx = true} : vector<8x1xf32> -> vector<8x1xf32>
      %216 = vector.broadcast %215 : vector<8x1xf32> to vector<8x8xf32>
      %217 = arith.mulf %212, %216 : vector<8x8xf32>
      %c1_128 = arith.constant 1 : index
      %c0_129 = arith.constant 0 : index
      %c0_130 = arith.constant 0 : index
      %218 = vector.load %arg14[%c1_128, %c0_129, %c0_130] : memref<4x8x8xf32, #tpu.memory_space<vmem>>, vector<1x8x8xf32>
      %219 = vector.shape_cast %218 : vector<1x8x8xf32> to vector<8x8xf32>
      %c1_131 = arith.constant 1 : index
      %c0_132 = arith.constant 0 : index
      %c0_133 = arith.constant 0 : index
      %220 = vector.load %arg13[%c1_131, %c0_132, %c0_133] : memref<4x8x1xf32, #tpu.memory_space<vmem>>, vector<1x8x1xf32>
      %221 = vector.shape_cast %220 : vector<1x8x1xf32> to vector<8x1xf32>
      %222 = tpu.reciprocal %221 {approx = true} : vector<8x1xf32> -> vector<8x1xf32>
      %223 = vector.broadcast %222 : vector<8x1xf32> to vector<8x8xf32>
      %224 = arith.mulf %219, %223 : vector<8x8xf32>
      %c2_134 = arith.constant 2 : index
      %c0_135 = arith.constant 0 : index
      %c0_136 = arith.constant 0 : index
      %225 = vector.load %arg14[%c2_134, %c0_135, %c0_136] : memref<4x8x8xf32, #tpu.memory_space<vmem>>, vector<1x8x8xf32>
      %226 = vector.shape_cast %225 : vector<1x8x8xf32> to vector<8x8xf32>
      %c2_137 = arith.constant 2 : index
      %c0_138 = arith.constant 0 : index
      %c0_139 = arith.constant 0 : index
      %227 = vector.load %arg13[%c2_137, %c0_138, %c0_139] : memref<4x8x1xf32, #tpu.memory_space<vmem>>, vector<1x8x1xf32>
      %228 = vector.shape_cast %227 : vector<1x8x1xf32> to vector<8x1xf32>
      %229 = tpu.reciprocal %228 {approx = true} : vector<8x1xf32> -> vector<8x1xf32>
      %230 = vector.broadcast %229 : vector<8x1xf32> to vector<8x8xf32>
      %231 = arith.mulf %226, %230 : vector<8x8xf32>
      %c3_140 = arith.constant 3 : index
      %c0_141 = arith.constant 0 : index
      %c0_142 = arith.constant 0 : index
      %232 = vector.load %arg14[%c3_140, %c0_141, %c0_142] : memref<4x8x8xf32, #tpu.memory_space<vmem>>, vector<1x8x8xf32>
      %233 = vector.shape_cast %232 : vector<1x8x8xf32> to vector<8x8xf32>
      %c3_143 = arith.constant 3 : index
      %c0_144 = arith.constant 0 : index
      %c0_145 = arith.constant 0 : index
      %234 = vector.load %arg13[%c3_143, %c0_144, %c0_145] : memref<4x8x1xf32, #tpu.memory_space<vmem>>, vector<1x8x1xf32>
      %235 = vector.shape_cast %234 : vector<1x8x1xf32> to vector<8x1xf32>
      %236 = tpu.reciprocal %235 {approx = true} : vector<8x1xf32> -> vector<8x1xf32>
      %237 = vector.broadcast %236 : vector<8x1xf32> to vector<8x8xf32>
      %238 = arith.mulf %233, %237 : vector<8x8xf32>
      %239 = tpu.concatenate %217, %224, %231, %238 in 1 : vector<8x8xf32>, vector<8x8xf32>, vector<8x8xf32>, vector<8x8xf32> -> vector<8x32xf32>
      %c0_146 = arith.constant 0 : index
      %c0_147 = arith.constant 0 : index
      %c0_148 = arith.constant 0 : index
      %240 = vector.load %arg10[%c0_146, %c0_147, %c0_148] : memref<1x8x32xf32, #tpu.memory_space<vmem>>, vector<1x8x32xf32>
      %241 = vector.shape_cast %240 : vector<1x8x32xf32> to vector<8x32xf32>
      %242 = vector.shape_cast %239 : vector<8x32xf32> to vector<1x8x32xf32>
      tpu.vector_store %arg10[%c0_146, %c0_147, %c0_148], %242 {strides = array<i32>} : memref<1x8x32xf32, #tpu.memory_space<vmem>>, vector<1x8x32xf32>,
    } else {
    }
    return
  }
  func.func @transform_0(%arg0: i32, %arg1: i32) -> (i32, i32, i32) {
    %c0_i32 = arith.constant 0 : i32
    %c0_i32_0 = arith.constant 0 : i32
    %c0_i32_1 = arith.constant 0 : i32
    return %arg0, %c0_i32, %c0_i32_0 : i32, i32, i32
  }
  func.func @transform_1(%arg0: i32, %arg1: i32) -> (i32, i32, i32) {
    %c0_i32 = arith.constant 0 : i32
    %c0_i32_0 = arith.constant 0 : i32
    return %arg0, %arg1, %c0_i32 : i32, i32, i32
  }
  func.func @transform_2(%arg0: i32, %arg1: i32) -> (i32, i32) {
    %c0_i32 = arith.constant 0 : i32
    %c0_i32_0 = arith.constant 0 : i32
    %c0_i32_1 = arith.constant 0 : i32
    return %c0_i32, %c0_i32_0 : i32, i32
  }
  func.func @transform_3(%arg0: i32, %arg1: i32) -> (i32, i32) {
    %c0_i32 = arith.constant 0 : i32
    %c0_i32_0 = arith.constant 0 : i32
    %c0_i32_1 = arith.constant 0 : i32
    return %c0_i32, %c0_i32_0 : i32, i32
  }
  func.func @transform_4(%arg0: i32, %arg1: i32) -> (i32, i32) {
    %c0_i32 = arith.constant 0 : i32
    %c0_i32_0 = arith.constant 0 : i32
    return %arg1, %c0_i32 : i32, i32
  }
  func.func @transform_5(%arg0: i32, %arg1: i32) -> (i32, i32) {
    %c0_i32 = arith.constant 0 : i32
    %c0_i32_0 = arith.constant 0 : i32
    return %arg1, %c0_i32 : i32, i32
  }
  func.func @transform_6(%arg0: i32, %arg1: i32) -> (i32, i32) {
    %c0_i32 = arith.constant 0 : i32
    %c0_i32_0 = arith.constant 0 : i32
    %c0_i32_1 = arith.constant 0 : i32
    return %c0_i32, %c0_i32_0 : i32, i32
  }
  func.func @transform_7(%arg0: i32, %arg1: i32) -> (i32, i32, i32) {
    %c0_i32 = arith.constant 0 : i32
    %c0_i32_0 = arith.constant 0 : i32
    return %arg0, %c0_i32, %arg1 : i32, i32, i32
  }
  func.func @transform_8(%arg0: i32, %arg1: i32) -> (i32, i32, i32) {
    %c0_i32 = arith.constant 0 : i32
    %c0_i32_0 = arith.constant 0 : i32
    %c0_i32_1 = arith.constant 0 : i32
    return %arg0, %c0_i32, %c0_i32_0 : i32, i32, i32
  }
}

</mosaic_0001>

<llo_original>
// kernel: multihead_attention.4
$region0: #{multihead_attention.4}
  #allocation0 [shape = 'u32[]', space=smem, size = 0x4, offset = 0x4, fixed_abs, tag = 'smem constant byte address 0x4 - core index']
  #allocation1 [shape = 'u32[144,128]{1,0:T(1,128)}', space=vmem, size = 0x12000, scoped, tag = 'internal scratch']
  #allocation2 [shape = 'f32[16,32]{1,0:T(8,128)}', space=vmem, size = 0x2000, scoped, tag = 'scratch operand']
  %s0 = inlined_call_operand.hbm [shape: f32[16,32], index: 0, kind: input, shape index: {}]
  %s1 = inlined_call_operand.vmem [shape: f32[32,32], index: 1, kind: input, shape index: {}]
  %s2 = inlined_call_operand.vmem [shape: f32[1,32], index: 2, kind: input, shape index: {}]
  %s3 = inlined_call_operand.vmem [shape: f32[16,32], index: 3, kind: output, shape index: {}]
  %s4 = sld [smem:[#allocation0]]
  $region34: #{multihead_attention.4} parent=0
    _
  %s6 = ssub.s32 1, %s4
  %s7 = scalar_select 0, %s6, %s4
  $region1: #{multihead_attention.4} parent=0
    #allocation3 [shape = 'u8[8192]{0}', space=vmem, size = 0x2000, scoped, tag = 'input window, operand 0, single buffered']
    #allocation4 [shape = 's32[1]{0}', space=sflag, size = 0x4, scoped, tag = 'scoped memory for multihead_attention.4']
    %8 = vsyncpa [#allocation4], 0
    // Predicated region
    $region2: #{multihead_attention.4} parent=1 // pred_check
      _
    $region3: #{multihead_attention.4} parent=1 // pred_check_branch
      %10 = sbr.rel (0) target = $region5
    $region4: #{multihead_attention.4} parent=1 // pred_region
      %s12 = ssub.s32 256, 256
      %13 = vsyncadd [#allocation4], %s12
      %s14 = sshll.u32 [#allocation3], 4
      %s15 = int_to_ptr.vmem [resolvable:$true] %s14
      %20 = dma.hbm_to_vmem [thread:$0]  %s0, 256, %s15, [#allocation4], 128, 128, 8
    $region5: #{multihead_attention.4} parent=1 // pred_fallthru
      _
    // Predicated region
    $region6: #{multihead_attention.4} parent=1 // pred_check
      _
    $region7: #{multihead_attention.4} parent=1 // pred_check_branch
      %22 = sbr.rel (0) target = $region9
    $region8: #{multihead_attention.4} parent=1 // pred_region
      _
    $region9: #{multihead_attention.4} parent=1 // pred_fallthru
      _
    // Predicated region
    $region10: #{multihead_attention.4} parent=1 // pred_check
      _
    $region11: #{multihead_attention.4} parent=1 // pred_check_branch
      %24 = sbr.rel (0) target = $region13
    $region12: #{multihead_attention.4} parent=1 // pred_region
      _
    $region13: #{multihead_attention.4} parent=1 // pred_fallthru
      _
    // Predicated region
    $region14: #{multihead_attention.4} parent=1 // pred_check
      _
    $region15: #{multihead_attention.4} parent=1 // pred_check_branch
      %26 = sbr.rel (0) target = $region17
    $region16: #{multihead_attention.4} parent=1 // pred_region
      %27 = dma.done [#allocation4], 256
    $region17: #{multihead_attention.4} parent=1 // pred_fallthru
      _
    %p29 = scmp.eq.s32.totalorder 0, 0
    // Predicated region
    $region18: #{multihead_attention.4} parent=1 // pred_check
      %p30 = pneg %p29
    $region19: #{multihead_attention.4} parent=1 // pred_check_branch
      %32 = sbr.rel (%p30) target = $region21
    $region20: #{multihead_attention.4} parent=1 // pred_region
      %vm33 = vcmask 261120
      %34 = vst.msk [vmem:[#allocation2] sm:$0xff] %vm33, 0.0
      %35 = vst.msk [vmem:[#allocation2 + $0x8] sm:$0xff] %vm33, 0.0
    $region21: #{multihead_attention.4} parent=1 // pred_fallthru
      _
    %v36 = vld [vmem:[#allocation2] sm:$0xff]
    %v37 = vld [vmem:[#allocation2 + $0x8] sm:$0xff]
    %v38 = vld [vmem:[#allocation3] sm:$0xff]
    %v39 = vld [vmem:[#allocation3 + $0x8] sm:$0xff]
    %v40 = vpack.c.bf16 %v39, %v38
    %v41 = vld [vmem:[%s1] sm:$0xff]
    %v42 = vld [vmem:[%s1 + $0x8] sm:$0xff]
    %v43 = vld [vmem:[%s1 + $0x10] sm:$0xff]
    %v44 = vld [vmem:[%s1 + $0x18] sm:$0xff]
    %v45 = vpack.c.bf16 %v42, %v41
    %v46 = vpack.c.bf16 %v44, %v43
    %vm47 = vcmask 261120
    %v49 = vsel %vm47, %v40, 0
    %v52 = vsel %vm47, %v45, 0
    %v55 = vsel %vm47, %v46, 0
    %57 = vmatprep.subr.bf16.mxu0 0
    %58 = vmatpush1.bf16.xpose.msra.mxu0 %v52
    %59 = vmatprep.subr.bf16.mxu0 0
    %60 = vmatpush1.bf16.xpose.msra.mxu0 %v55
    %61 = vmatprep.subr.bf16.mxu0 0
    %62 = vmatpush1.bf16.xpose.msra.mxu0 0
    %63 = vmatprep.subr.bf16.mxu0 0
    %64 = vmatpush1.bf16.xpose.msra.mxu0 0
    %65 = vmatprep.subr.bf16.mxu0 0
    %66 = vmatpush1.bf16.xpose.msra.mxu0 0
    %67 = vmatprep.subr.bf16.mxu0 0
    %68 = vmatpush1.bf16.xpose.msra.mxu0 0
    %69 = vmatprep.subr.bf16.mxu0 0
    %70 = vmatpush1.bf16.xpose.msra.mxu0 0
    %71 = vmatprep.subr.bf16.mxu0 0
    %72 = vmatpush1.bf16.xpose.msra.mxu0 0
    %73 = vmatprep.subr.bf16.mxu0 0
    %74 = vmatpush1.bf16.xpose.msra.mxu0 0
    %75 = vmatprep.subr.bf16.mxu0 0
    %76 = vmatpush1.bf16.xpose.msra.mxu0 0
    %77 = vmatprep.subr.bf16.mxu0 0
    %78 = vmatpush1.bf16.xpose.msra.mxu0 0
    %79 = vmatprep.subr.bf16.mxu0 0
    %80 = vmatpush1.bf16.xpose.msra.mxu0 0
    %81 = vmatprep.subr.bf16.mxu0 0
    %82 = vmatpush1.bf16.xpose.msra.mxu0 0
    %83 = vmatprep.subr.bf16.mxu0 0
    %84 = vmatpush1.bf16.xpose.msra.mxu0 0
    %85 = vmatprep.subr.bf16.mxu0 0
    %86 = vmatpush1.bf16.xpose.msra.mxu0 0
    %87 = vmatprep.subr.bf16.mxu0 0
    %88 = vmatpush1.bf16.xpose.msra.mxu0 0
    %89 = vmatprep.mubr.bf16.mxu0 0
    %90 = vmatmul.mubr.bf16.gmra.mrb[0].mxu0 %v49
    %v91 = vpop.f32.mrb[0].mxu0
    %v92 = vadd.f32 0.0, %v91
    %v93 = vpop.f32.mrb[0].mxu0
    %v94 = vpop.f32.mrb[0].mxu0
    %v95 = vadd.f32 0.0, %v94
    %v96 = vpop.f32.mrb[0].mxu0
    %97 = vdwg.mxu0
    %v98 = vadd.f32 %v36, %v92
    %v99 = vadd.f32 %v37, %v95
    %100 = vst.msk [vmem:[#allocation2] sm:$0xff] %vm47, %v98
    %101 = vst.msk [vmem:[#allocation2 + $0x8] sm:$0xff] %vm47, %v99
    // Predicated region
    $region22: #{multihead_attention.4} parent=1 // pred_check
      %p102 = pneg %p29
    $region23: #{multihead_attention.4} parent=1 // pred_check_branch
      %104 = sbr.rel (%p102) target = $region25
    $region24: #{multihead_attention.4} parent=1 // pred_region
      %v105 = vld [vmem:[#allocation2] sm:$0xff]
      %v106 = vld [vmem:[#allocation2 + $0x8] sm:$0xff]
      %v107 = vld [vmem:[%s2] sm:$0x1]
      %v109 = vlaneseq
      %v110 = vshrl.u32 %v109, 7
      %v111 = vsub.s32 0, %v110
      %v112 = vrot.slane %v107, %v111
      %v114 = vadd.f32 %v105, %v112
      %v115 = vadd.f32 %v106, %v112
      %116 = vst.msk [vmem:[%s3] sm:$0xff] %vm47, %v114
      %117 = vst.msk [vmem:[%s3 + $0x8] sm:$0xff] %vm47, %v115
    $region25: #{multihead_attention.4} parent=1 // pred_fallthru
      _
    // Predicated region
    $region26: #{multihead_attention.4} parent=1 // pred_check
      _
    $region27: #{multihead_attention.4} parent=1 // pred_check_branch
      %119 = sbr.rel (0) target = $region29
    $region28: #{multihead_attention.4} parent=1 // pred_region
      _
    $region29: #{multihead_attention.4} parent=1 // pred_fallthru
      _
    // Predicated region
    $region30: #{multihead_attention.4} parent=1 // pred_check
      _
    $region31: #{multihead_attention.4} parent=1 // pred_check_branch
      %121 = sbr.rel (0) target = $region33
    $region32: #{multihead_attention.4} parent=1 // pred_region
      _
    $region33: #{multihead_attention.4} parent=1 // pred_fallthru
      _
    %122 = vsyncpa [#allocation4], 1

// kernel: multihead_attention.5
$region0: #{multihead_attention.5}
  #allocation0 [shape = 'u32[]', space=smem, size = 0x4, offset = 0x4, fixed_abs, tag = 'smem constant byte address 0x4 - core index']
  #allocation1 [shape = 'u32[144,128]{1,0:T(1,128)}', space=vmem, size = 0x12000, scoped, tag = 'internal scratch']
  #allocation2 [shape = 'f32[24,64]{1,0:T(8,128)}', space=vmem, size = 0x3000, scoped, tag = 'scratch operand']
  %s0 = inlined_call_operand.vmem [shape: f32[24,16], index: 0, kind: input, shape index: {}]
  %s1 = inlined_call_operand.vmem [shape: f32[64,16], index: 1, kind: input, shape index: {}]
  %s2 = inlined_call_operand.vmem [shape: f32[1,64], index: 2, kind: input, shape index: {}]
  %s3 = inlined_call_operand.vmem [shape: f32[24,64], index: 3, kind: output, shape index: {}]
  %s4 = sld [smem:[#allocation0]]
  $region30: #{multihead_attention.5} parent=0
    _
  %s6 = ssub.s32 1, %s4
  %s7 = scalar_select 0, %s6, %s4
  // Predicated region
  $region2: #{multihead_attention.5} parent=0 // pred_check
    _
  $region3: #{multihead_attention.5} parent=0 // pred_check_branch
    %9 = sbr.rel (0) target = $region5
  $region4: #{multihead_attention.5} parent=0 // pred_region
    _
  $region5: #{multihead_attention.5} parent=0 // pred_fallthru
    _
  // Predicated region
  $region6: #{multihead_attention.5} parent=0 // pred_check
    _
  $region7: #{multihead_attention.5} parent=0 // pred_check_branch
    %11 = sbr.rel (0) target = $region9
  $region8: #{multihead_attention.5} parent=0 // pred_region
    _
  $region9: #{multihead_attention.5} parent=0 // pred_fallthru
    _
  // Predicated region
  $region10: #{multihead_attention.5} parent=0 // pred_check
    _
  $region11: #{multihead_attention.5} parent=0 // pred_check_branch
    %13 = sbr.rel (0) target = $region13
  $region12: #{multihead_attention.5} parent=0 // pred_region
    _
  $region13: #{multihead_attention.5} parent=0 // pred_fallthru
    _
  %p15 = scmp.eq.s32.totalorder 0, 0
  // Predicated region
  $region14: #{multihead_attention.5} parent=0 // pred_check
    %p16 = pneg %p15
  $region15: #{multihead_attention.5} parent=0 // pred_check_branch
    %18 = sbr.rel (%p16) target = $region17
  $region16: #{multihead_attention.5} parent=0 // pred_region
    %vm19 = vcmask 523264
    %20 = vst.msk [vmem:[#allocation2] sm:$0xff] %vm19, 0.0
    %21 = vst.msk [vmem:[#allocation2 + $0x8] sm:$0xff] %vm19, 0.0
    %22 = vst.msk [vmem:[#allocation2 + $0x10] sm:$0xff] %vm19, 0.0
  $region17: #{multihead_attention.5} parent=0 // pred_fallthru
    _
  %v23 = vld [vmem:[#allocation2] sm:$0xff]
  %v24 = vld [vmem:[#allocation2 + $0x8] sm:$0xff]
  %v25 = vld [vmem:[#allocation2 + $0x10] sm:$0xff]
  %v26 = vld [vmem:[%s0] sm:$0xff]
  %v27 = vld [vmem:[%s0 + $0x8] sm:$0xff]
  %v28 = vld [vmem:[%s0 + $0x10] sm:$0xff]
  %v29 = vpack.c.bf16 %v27, %v26
  %v30 = vpack.c.bf16 %v28, %v28
  %v31 = vld [vmem:[%s1] sm:$0xff]
  %v32 = vld [vmem:[%s1 + $0x8] sm:$0xff]
  %v33 = vld [vmem:[%s1 + $0x10] sm:$0xff]
  %v34 = vld [vmem:[%s1 + $0x18] sm:$0xff]
  %v35 = vld [vmem:[%s1 + $0x20] sm:$0xff]
  %v36 = vld [vmem:[%s1 + $0x28] sm:$0xff]
  %v37 = vld [vmem:[%s1 + $0x30] sm:$0xff]
  %v38 = vld [vmem:[%s1 + $0x38] sm:$0xff]
  %v39 = vpack.c.bf16 %v32, %v31
  %v40 = vpack.c.bf16 %v34, %v33
  %v41 = vpack.c.bf16 %v36, %v35
  %v42 = vpack.c.bf16 %v38, %v37
  %vm43 = vcmask 130048
  %v45 = vsel %vm43, %v29, 0
  %v48 = vsel %vm43, %v30, 0
  %v51 = vsel %vm43, %v39, 0
  %v54 = vsel %vm43, %v40, 0
  %v57 = vsel %vm43, %v41, 0
  %v60 = vsel %vm43, %v42, 0
  %62 = vmatprep.subr.bf16.mxu0 0
  %63 = vmatpush1.bf16.xpose.msra.mxu0 %v51
  %64 = vmatprep.subr.bf16.mxu0 0
  %65 = vmatpush1.bf16.xpose.msra.mxu0 %v54
  %66 = vmatprep.subr.bf16.mxu0 0
  %67 = vmatpush1.bf16.xpose.msra.mxu0 %v57
  %68 = vmatprep.subr.bf16.mxu0 0
  %69 = vmatpush1.bf16.xpose.msra.mxu0 %v60
  %70 = vmatprep.subr.bf16.mxu0 0
  %71 = vmatpush1.bf16.xpose.msra.mxu0 0
  %72 = vmatprep.subr.bf16.mxu0 0
  %73 = vmatpush1.bf16.xpose.msra.mxu0 0
  %74 = vmatprep.subr.bf16.mxu0 0
  %75 = vmatpush1.bf16.xpose.msra.mxu0 0
  %76 = vmatprep.subr.bf16.mxu0 0
  %77 = vmatpush1.bf16.xpose.msra.mxu0 0
  %78 = vmatprep.subr.bf16.mxu0 0
  %79 = vmatpush1.bf16.xpose.msra.mxu0 0
  %80 = vmatprep.subr.bf16.mxu0 0
  %81 = vmatpush1.bf16.xpose.msra.mxu0 0
  %82 = vmatprep.subr.bf16.mxu0 0
  %83 = vmatpush1.bf16.xpose.msra.mxu0 0
  %84 = vmatprep.subr.bf16.mxu0 0
  %85 = vmatpush1.bf16.xpose.msra.mxu0 0
  %86 = vmatprep.subr.bf16.mxu0 0
  %87 = vmatpush1.bf16.xpose.msra.mxu0 0
  %88 = vmatprep.subr.bf16.mxu0 0
  %89 = vmatpush1.bf16.xpose.msra.mxu0 0
  %90 = vmatprep.subr.bf16.mxu0 0
  %91 = vmatpush1.bf16.xpose.msra.mxu0 0
  %92 = vmatprep.subr.bf16.mxu0 0
  %93 = vmatpush1.bf16.xpose.msra.mxu0 0
  %94 = vmatprep.mubr.bf16.mxu0 0
  %95 = vmatmul.mubr.bf16.gmra.mrb[0].mxu0 %v45
  %v96 = vpop.f32.mrb[0].mxu0
  %v97 = vadd.f32 0.0, %v96
  %v98 = vpop.f32.mrb[0].mxu0
  %v99 = vpop.f32.mrb[0].mxu0
  %v100 = vadd.f32 0.0, %v99
  %v101 = vpop.f32.mrb[0].mxu0
  %102 = vmatprep.mubr.bf16.mxu0 0
  %103 = vmatmul.mubr.bf16.gmra.mrb[0].mxu0 %v48
  %v104 = vpop.f32.mrb[0].mxu0
  %v105 = vadd.f32 0.0, %v104
  %v106 = vpop.f32.mrb[0].mxu0
  %v107 = vpop.f32.mrb[0].mxu0
  %v108 = vpop.f32.mrb[0].mxu0
  %109 = vdwg.mxu0
  %v110 = vadd.f32 %v23, %v97
  %v111 = vadd.f32 %v24, %v100
  %v112 = vadd.f32 %v25, %v105
  %vm113 = vcmask 523264
  %114 = vst.msk [vmem:[#allocation2] sm:$0xff] %vm113, %v110
  %115 = vst.msk [vmem:[#allocation2 + $0x8] sm:$0xff] %vm113, %v111
  %116 = vst.msk [vmem:[#allocation2 + $0x10] sm:$0xff] %vm113, %v112
  // Predicated region
  $region18: #{multihead_attention.5} parent=0 // pred_check
    %p117 = pneg %p15
  $region19: #{multihead_attention.5} parent=0 // pred_check_branch
    %119 = sbr.rel (%p117) target = $region21
  $region20: #{multihead_attention.5} parent=0 // pred_region
    %v120 = vld [vmem:[#allocation2] sm:$0xff]
    %v121 = vld [vmem:[#allocation2 + $0x8] sm:$0xff]
    %v122 = vld [vmem:[#allocation2 + $0x10] sm:$0xff]
    %v123 = vld [vmem:[%s2] sm:$0x1]
    %v125 = vlaneseq
    %v126 = vshrl.u32 %v125, 7
    %v127 = vsub.s32 0, %v126
    %v128 = vrot.slane %v123, %v127
    %v130 = vadd.f32 %v120, %v128
    %v131 = vadd.f32 %v121, %v128
    %v132 = vadd.f32 %v122, %v128
    %133 = vst.msk [vmem:[%s3] sm:$0xff] %vm113, %v130
    %134 = vst.msk [vmem:[%s3 + $0x8] sm:$0xff] %vm113, %v131
    %135 = vst.msk [vmem:[%s3 + $0x10] sm:$0xff] %vm113, %v132
  $region21: #{multihead_attention.5} parent=0 // pred_fallthru
    _
  // Predicated region
  $region22: #{multihead_attention.5} parent=0 // pred_check
    _
  $region23: #{multihead_attention.5} parent=0 // pred_check_branch
    %137 = sbr.rel (0) target = $region25
  $region24: #{multihead_attention.5} parent=0 // pred_region
    _
  $region25: #{multihead_attention.5} parent=0 // pred_fallthru
    _
  // Predicated region
  $region26: #{multihead_attention.5} parent=0 // pred_check
    _
  $region27: #{multihead_attention.5} parent=0 // pred_check_branch
    %139 = sbr.rel (0) target = $region29
  $region28: #{multihead_attention.5} parent=0 // pred_region
    _
  $region29: #{multihead_attention.5} parent=0 // pred_fallthru
    _

// kernel: multihead_attention.7
$region0: #{multihead_attention.7}
  #allocation0 [shape = 'u32[]', space=smem, size = 0x4, offset = 0x4, fixed_abs, tag = 'smem constant byte address 0x4 - core index']
  #allocation1 [shape = 'u32[144,128]{1,0:T(1,128)}', space=vmem, size = 0x12000, scoped, tag = 'internal scratch']
  #allocation2 [shape = 'f32[16,32]{1,0:T(8,128)}', space=vmem, size = 0x2000, scoped, tag = 'scratch operand']
  %s0 = inlined_call_operand.vmem [shape: f32[16,32], index: 0, kind: input, shape index: {}]
  %s1 = inlined_call_operand.vmem [shape: f32[32,32], index: 1, kind: input, shape index: {}]
  %s2 = inlined_call_operand.vmem [shape: f32[1,32], index: 2, kind: input, shape index: {}]
  %s3 = inlined_call_operand.hbm [shape: f32[16,32], index: 3, kind: output, shape index: {}]
  %s4 = sld [smem:[#allocation0]]
  $region30: #{multihead_attention.7} parent=0
    _
  %s6 = ssub.s32 1, %s4
  %s7 = scalar_select 0, %s6, %s4
  $region1: #{multihead_attention.7} parent=0
    #allocation3 [shape = 'u8[8192]{0}', space=vmem, size = 0x2000, scoped, tag = 'output window, operand 0, single buffered']
    #allocation4 [shape = 's32[1]{0}', space=sflag, size = 0x4, scoped, tag = 'scoped memory for multihead_attention.7']
    %8 = vsyncpa [#allocation4], 0
    // Predicated region
    $region2: #{multihead_attention.7} parent=1 // pred_check
      _
    $region3: #{multihead_attention.7} parent=1 // pred_check_branch
      %10 = sbr.rel (0) target = $region5
    $region4: #{multihead_attention.7} parent=1 // pred_region
      _
    $region5: #{multihead_attention.7} parent=1 // pred_fallthru
      _
    // Predicated region
    $region6: #{multihead_attention.7} parent=1 // pred_check
      _
    $region7: #{multihead_attention.7} parent=1 // pred_check_branch
      %12 = sbr.rel (0) target = $region9
    $region8: #{multihead_attention.7} parent=1 // pred_region
      _
    $region9: #{multihead_attention.7} parent=1 // pred_fallthru
      _
    // Predicated region
    $region10: #{multihead_attention.7} parent=1 // pred_check
      _
    $region11: #{multihead_attention.7} parent=1 // pred_check_branch
      %14 = sbr.rel (0) target = $region13
    $region12: #{multihead_attention.7} parent=1 // pred_region
      _
    $region13: #{multihead_attention.7} parent=1 // pred_fallthru
      _
    %p16 = scmp.eq.s32.totalorder 0, 0
    // Predicated region
    $region14: #{multihead_attention.7} parent=1 // pred_check
      %p17 = pneg %p16
    $region15: #{multihead_attention.7} parent=1 // pred_check_branch
      %19 = sbr.rel (%p17) target = $region17
    $region16: #{multihead_attention.7} parent=1 // pred_region
      %vm20 = vcmask 261120
      %21 = vst.msk [vmem:[#allocation2] sm:$0xff] %vm20, 0.0
      %22 = vst.msk [vmem:[#allocation2 + $0x8] sm:$0xff] %vm20, 0.0
    $region17: #{multihead_attention.7} parent=1 // pred_fallthru
      _
    %v23 = vld [vmem:[#allocation2] sm:$0xff]
    %v24 = vld [vmem:[#allocation2 + $0x8] sm:$0xff]
    %v25 = vld [vmem:[%s0] sm:$0xff]
    %v26 = vld [vmem:[%s0 + $0x8] sm:$0xff]
    %v27 = vpack.c.bf16 %v26, %v25
    %v28 = vld [vmem:[%s1] sm:$0xff]
    %v29 = vld [vmem:[%s1 + $0x8] sm:$0xff]
    %v30 = vld [vmem:[%s1 + $0x10] sm:$0xff]
    %v31 = vld [vmem:[%s1 + $0x18] sm:$0xff]
    %v32 = vpack.c.bf16 %v29, %v28
    %v33 = vpack.c.bf16 %v31, %v30
    %vm34 = vcmask 261120
    %v36 = vsel %vm34, %v27, 0
    %v39 = vsel %vm34, %v32, 0
    %v42 = vsel %vm34, %v33, 0
    %44 = vmatprep.subr.bf16.mxu0 0
    %45 = vmatpush1.bf16.xpose.msra.mxu0 %v39
    %46 = vmatprep.subr.bf16.mxu0 0
    %47 = vmatpush1.bf16.xpose.msra.mxu0 %v42
    %48 = vmatprep.subr.bf16.mxu0 0
    %49 = vmatpush1.bf16.xpose.msra.mxu0 0
    %50 = vmatprep.subr.bf16.mxu0 0
    %51 = vmatpush1.bf16.xpose.msra.mxu0 0
    %52 = vmatprep.subr.bf16.mxu0 0
    %53 = vmatpush1.bf16.xpose.msra.mxu0 0
    %54 = vmatprep.subr.bf16.mxu0 0
    %55 = vmatpush1.bf16.xpose.msra.mxu0 0
    %56 = vmatprep.subr.bf16.mxu0 0
    %57 = vmatpush1.bf16.xpose.msra.mxu0 0
    %58 = vmatprep.subr.bf16.mxu0 0
    %59 = vmatpush1.bf16.xpose.msra.mxu0 0
    %60 = vmatprep.subr.bf16.mxu0 0
    %61 = vmatpush1.bf16.xpose.msra.mxu0 0
    %62 = vmatprep.subr.bf16.mxu0 0
    %63 = vmatpush1.bf16.xpose.msra.mxu0 0
    %64 = vmatprep.subr.bf16.mxu0 0
    %65 = vmatpush1.bf16.xpose.msra.mxu0 0
    %66 = vmatprep.subr.bf16.mxu0 0
    %67 = vmatpush1.bf16.xpose.msra.mxu0 0
    %68 = vmatprep.subr.bf16.mxu0 0
    %69 = vmatpush1.bf16.xpose.msra.mxu0 0
    %70 = vmatprep.subr.bf16.mxu0 0
    %71 = vmatpush1.bf16.xpose.msra.mxu0 0
    %72 = vmatprep.subr.bf16.mxu0 0
    %73 = vmatpush1.bf16.xpose.msra.mxu0 0
    %74 = vmatprep.subr.bf16.mxu0 0
    %75 = vmatpush1.bf16.xpose.msra.mxu0 0
    %76 = vmatprep.mubr.bf16.mxu0 0
    %77 = vmatmul.mubr.bf16.gmra.mrb[0].mxu0 %v36
    %v78 = vpop.f32.mrb[0].mxu0
    %v79 = vadd.f32 0.0, %v78
    %v80 = vpop.f32.mrb[0].mxu0
    %v81 = vpop.f32.mrb[0].mxu0
    %v82 = vadd.f32 0.0, %v81
    %v83 = vpop.f32.mrb[0].mxu0
    %84 = vdwg.mxu0
    %v85 = vadd.f32 %v23, %v79
    %v86 = vadd.f32 %v24, %v82
    %87 = vst.msk [vmem:[#allocation2] sm:$0xff] %vm34, %v85
    %88 = vst.msk [vmem:[#allocation2 + $0x8] sm:$0xff] %vm34, %v86
    // Predicated region
    $region18: #{multihead_attention.7} parent=1 // pred_check
      %p89 = pneg %p16
    $region19: #{multihead_attention.7} parent=1 // pred_check_branch
      %91 = sbr.rel (%p89) target = $region21
    $region20: #{multihead_attention.7} parent=1 // pred_region
      %v92 = vld [vmem:[#allocation2] sm:$0xff]
      %v93 = vld [vmem:[#allocation2 + $0x8] sm:$0xff]
      %v94 = vld [vmem:[%s2] sm:$0x1]
      %v96 = vlaneseq
      %v97 = vshrl.u32 %v96, 7
      %v98 = vsub.s32 0, %v97
      %v99 = vrot.slane %v94, %v98
      %v101 = vadd.f32 %v92, %v99
      %v102 = vadd.f32 %v93, %v99
      %103 = vst.msk [vmem:[#allocation3] sm:$0xff] %vm34, %v101
      %104 = vst.msk [vmem:[#allocation3 + $0x8] sm:$0xff] %vm34, %v102
    $region21: #{multihead_attention.7} parent=1 // pred_fallthru
      _
    // Predicated region
    $region22: #{multihead_attention.7} parent=1 // pred_check
      _
    $region23: #{multihead_attention.7} parent=1 // pred_check_branch
      %106 = sbr.rel (0) target = $region25
    $region24: #{multihead_attention.7} parent=1 // pred_region
      %s108 = ssub.s32 256, 256
      %109 = vsyncadd [#allocation4], %s108
      %s110 = sshll.u32 [#allocation3], 4
      %s111 = int_to_ptr.vmem [resolvable:$true] %s110
      %116 = dma.vmem_to_hbm [thread:$0]  %s111, 256, %s3, [#allocation4], 128, 128, 8
    $region25: #{multihead_attention.7} parent=1 // pred_fallthru
      _
    // Predicated region
    $region26: #{multihead_attention.7} parent=1 // pred_check
      _
    $region27: #{multihead_attention.7} parent=1 // pred_check_branch
      %118 = sbr.rel (0) target = $region29
    $region28: #{multihead_attention.7} parent=1 // pred_region
      %119 = dma.done [#allocation4], 256
    $region29: #{multihead_attention.7} parent=1 // pred_fallthru
      _
    %120 = vsyncpa [#allocation4], 1

// kernel: multihead_attention.6
$region0: #{multihead_attention.6}
  #allocation0 [shape = 'u32[]', space=smem, size = 0x4, offset = 0x4, fixed_abs, tag = 'smem constant byte address 0x4 - core index']
  #allocation1 [shape = 'u32[144,128]{1,0:T(1,128)}', space=vmem, size = 0x12000, scoped, tag = 'internal scratch']
  #allocation2 [shape = 'f32[4,8,8]{2,1,0:T(8,128)}', space=vmem, size = 0x4000, scoped, tag = 'scratch operand']
  #allocation3 [shape = 'f32[4,8,1]{2,1,0:T(8,128)}', space=vmem, size = 0x4000, scoped, tag = 'scratch operand']
  #allocation4 [shape = 'f32[4,8,1]{2,1,0:T(8,128)}', space=vmem, size = 0x4000, scoped, tag = 'scratch operand']
  #allocation5 [shape = 'f32[4,8,8]{2,1,0:T(8,128)}', space=vmem, size = 0x4000, scoped, tag = 'scratch operand']
  %s0 = inlined_call_operand.vmem [shape: f32[2,8,32], index: 0, kind: input, shape index: {}]
  %s1 = inlined_call_operand.vmem [shape: f32[2,12,64], index: 1, kind: input, shape index: {}]
  %s2 = inlined_call_operand.vmem [shape: f32[8,8], index: 2, kind: input, shape index: {}]
  %s3 = inlined_call_operand.vmem [shape: f32[8,8], index: 3, kind: input, shape index: {}]
  %s4 = inlined_call_operand.vmem [shape: f32[12,8], index: 4, kind: input, shape index: {}]
  %s5 = inlined_call_operand.vmem [shape: f32[12,8], index: 5, kind: input, shape index: {}]
  %s6 = inlined_call_operand.vmem [shape: f32[8,8], index: 6, kind: input, shape index: {}]
  %s7 = inlined_call_operand.vmem [shape: s8[2,8,12], index: 7, kind: input, shape index: {}]
  %s8 = inlined_call_operand.vmem [shape: f32[2,8,32], index: 8, kind: output, shape index: {}]
  %s9 = sld [smem:[#allocation0]]
  $region73: #{multihead_attention.6} parent=0
    _
  %s11 = ssub.s32 1, %s9
  %s12 = scalar_select 0, %s11, %s9
  loop: start=0, step=1, limit=4
  $region2: #{multihead_attention.6} parent=0 // loop_pre_header
    _
  $region3: #{multihead_attention.6} parent=0 // loop_header
    %s14 = sphi 0, %s18
    %p15 = scmp.ge.s32.totalorder %s14, 4
    %s21 = sphi 0, %s33
    %s22 = sphi 0, %s29
    %s23 = sphi 0, %s21
    %s24 = sphi 0, %s22
    %s25 = sphi 0, %s23
    %s26 = sphi 0, %s24
    %s36 = sphi 0, %s38
    %s39 = sphi 0, %s36
    %s40 = sphi 0, %s39
    %s56 = sphi 0, %s40
    %s64 = sphi 0, %s66
    %s67 = sphi 0, %s64
    %s68 = sphi 0, %s67
    %s84 = sphi 0, %s68
    %s88 = sphi 0, %s88
    %s90 = sphi 0, %s88
    %s91 = sphi 0, %s90
    %s105 = sphi 0, %s91
    %s109 = sphi 0, %s109
    %s111 = sphi 0, %s109
    %s112 = sphi 0, %s111
    %s126 = sphi 0, %s112
    %s132 = sphi 0, %s134
    %s135 = sphi 0, %s132
    %s136 = sphi 0, %s135
    %s152 = sphi 0, %s136
    %s158 = sphi 0, %s160
    %s161 = sphi 0, %s158
    %s162 = sphi 0, %s161
    %s178 = sphi 0, %s162
    %s182 = sphi 0, %s182
    %s184 = sphi 0, %s182
    %s185 = sphi 0, %s184
    %s199 = sphi 0, %s185
    %s207 = sphi 0, %s209
    %s210 = sphi 0, %s207
    %s211 = sphi 0, %s210
    %s227 = sphi 0, %s211
    %s233 = sphi 0, %s235
    %s236 = sphi 0, %s233
    %s237 = sphi 0, %s236
    %s253 = sphi 0, %s237
  $region4: #{multihead_attention.6} parent=0 // loop_header_branch
    %17 = sbr.rel (%p15) target = $region8
  $region5: #{multihead_attention.6} parent=0 // loop_body
    %s19 = ssub.s32 %s14, 1
    %s20 = ssub.s32 %s14, 2
    %s27 = sadd.s32 1, %s22
    %p28 = scmp.ge.s32.totalorder %s27, 1
    %s29 = scalar_select %p28, 0, %s27
    %s30 = sadd.s32 1, %s21
    %s31 = scalar_select %p28, %s30, %s21
    %p32 = scmp.ge.s32.totalorder %s31, 2
    %s33 = scalar_select %p32, 0, %s31
    %s34 = ssub.s32 %s21, %s33
    %p35 = scmp.eq.s32.totalorder %s34, 0
    %s37 = sadd.s32 %s36, 1
    %s38 = scalar_select %p35, %s36, %s37
    %p41 = pneg %p35
    %p42 = scmp.eq.s32.totalorder %s14, 1
    %p43 = por %p41, %p42
    %p44 = scmp.ne.s32.totalorder %s36, %s39
    %p45 = scmp.eq.s32.totalorder %s14, 0
    %p46 = por %p44, %p45
    %p47 = scmp.ne.s32.totalorder %s36, %s39
    %p48 = scmp.eq.s32.totalorder %s19, 1
    %p49 = por %p47, %p48
    %p50 = scmp.ne.s32.totalorder %s39, %s40
    %p51 = scmp.eq.s32.totalorder %s19, 0
    %p52 = por %p50, %p51
    %p53 = scmp.ne.s32.totalorder %s39, %s40
    %p54 = scmp.eq.s32.totalorder %s20, 1
    %p55 = por %p53, %p54
    %p57 = scmp.ne.s32.totalorder %s40, %s56
    %p58 = scmp.eq.s32.totalorder %s20, 0
    %p59 = por %p57, %p58
    %s60 = ssub.s32 %s21, %s33
    %s61 = ssub.s32 %s22, %s29
    %s62 = sor.u32 %s60, %s61
    %p63 = scmp.eq.s32.totalorder %s62, 0
    %s65 = sadd.s32 %s64, 1
    %s66 = scalar_select %p63, %s64, %s65
    %p69 = pneg %p63
    %p70 = scmp.eq.s32.totalorder %s14, 1
    %p71 = por %p69, %p70
    %p72 = scmp.ne.s32.totalorder %s64, %s67
    %p73 = scmp.eq.s32.totalorder %s14, 0
    %p74 = por %p72, %p73
    %p75 = scmp.ne.s32.totalorder %s64, %s67
    %p76 = scmp.eq.s32.totalorder %s19, 1
    %p77 = por %p75, %p76
    %p78 = scmp.ne.s32.totalorder %s67, %s68
    %p79 = scmp.eq.s32.totalorder %s19, 0
    %p80 = por %p78, %p79
    %p81 = scmp.ne.s32.totalorder %s67, %s68
    %p82 = scmp.eq.s32.totalorder %s20, 1
    %p83 = por %p81, %p82
    %p85 = scmp.ne.s32.totalorder %s68, %s84
    %p86 = scmp.eq.s32.totalorder %s20, 0
    %p87 = por %p85, %p86
    %s89 = sadd.s32 %s88, 1
    %p92 = scmp.eq.s32.totalorder %s14, 1
    %p93 = scmp.ne.s32.totalorder %s88, %s90
    %p94 = scmp.eq.s32.totalorder %s14, 0
    %p95 = por %p93, %p94
    %p96 = scmp.ne.s32.totalorder %s88, %s90
    %p97 = scmp.eq.s32.totalorder %s19, 1
    %p98 = por %p96, %p97
    %p99 = scmp.ne.s32.totalorder %s90, %s91
    %p100 = scmp.eq.s32.totalorder %s19, 0
    %p101 = por %p99, %p100
    %p102 = scmp.ne.s32.totalorder %s90, %s91
    %p103 = scmp.eq.s32.totalorder %s20, 1
    %p104 = por %p102, %p103
    %p106 = scmp.ne.s32.totalorder %s91, %s105
    %p107 = scmp.eq.s32.totalorder %s20, 0
    %p108 = por %p106, %p107
    %s110 = sadd.s32 %s109, 1
    %p113 = scmp.eq.s32.totalorder %s14, 1
    %p114 = scmp.ne.s32.totalorder %s109, %s111
    %p115 = scmp.eq.s32.totalorder %s14, 0
    %p116 = por %p114, %p115
    %p117 = scmp.ne.s32.totalorder %s109, %s111
    %p118 = scmp.eq.s32.totalorder %s19, 1
    %p119 = por %p117, %p118
    %p120 = scmp.ne.s32.totalorder %s111, %s112
    %p121 = scmp.eq.s32.totalorder %s19, 0
    %p122 = por %p120, %p121
    %p123 = scmp.ne.s32.totalorder %s111, %s112
    %p124 = scmp.eq.s32.totalorder %s20, 1
    %p125 = por %p123, %p124
    %p127 = scmp.ne.s32.totalorder %s112, %s126
    %p128 = scmp.eq.s32.totalorder %s20, 0
    %p129 = por %p127, %p128
    %s130 = ssub.s32 %s22, %s29
    %p131 = scmp.eq.s32.totalorder %s130, 0
    %s133 = sadd.s32 %s132, 1
    %s134 = scalar_select %p131, %s132, %s133
    %p137 = pneg %p131
    %p138 = scmp.eq.s32.totalorder %s14, 1
    %p139 = por %p137, %p138
    %p140 = scmp.ne.s32.totalorder %s132, %s135
    %p141 = scmp.eq.s32.totalorder %s14, 0
    %p142 = por %p140, %p141
    %p143 = scmp.ne.s32.totalorder %s132, %s135
    %p144 = scmp.eq.s32.totalorder %s19, 1
    %p145 = por %p143, %p144
    %p146 = scmp.ne.s32.totalorder %s135, %s136
    %p147 = scmp.eq.s32.totalorder %s19, 0
    %p148 = por %p146, %p147
    %p149 = scmp.ne.s32.totalorder %s135, %s136
    %p150 = scmp.eq.s32.totalorder %s20, 1
    %p151 = por %p149, %p150
    %p153 = scmp.ne.s32.totalorder %s136, %s152
    %p154 = scmp.eq.s32.totalorder %s20, 0
    %p155 = por %p153, %p154
    %s156 = ssub.s32 %s22, %s29
    %p157 = scmp.eq.s32.totalorder %s156, 0
    %s159 = sadd.s32 %s158, 1
    %s160 = scalar_select %p157, %s158, %s159
    %p163 = pneg %p157
    %p164 = scmp.eq.s32.totalorder %s14, 1
    %p165 = por %p163, %p164
    %p166 = scmp.ne.s32.totalorder %s158, %s161
    %p167 = scmp.eq.s32.totalorder %s14, 0
    %p168 = por %p166, %p167
    %p169 = scmp.ne.s32.totalorder %s158, %s161
    %p170 = scmp.eq.s32.totalorder %s19, 1
    %p171 = por %p169, %p170
    %p172 = scmp.ne.s32.totalorder %s161, %s162
    %p173 = scmp.eq.s32.totalorder %s19, 0
    %p174 = por %p172, %p173
    %p175 = scmp.ne.s32.totalorder %s161, %s162
    %p176 = scmp.eq.s32.totalorder %s20, 1
    %p177 = por %p175, %p176
    %p179 = scmp.ne.s32.totalorder %s162, %s178
    %p180 = scmp.eq.s32.totalorder %s20, 0
    %p181 = por %p179, %p180
    %s183 = sadd.s32 %s182, 1
    %p186 = scmp.eq.s32.totalorder %s14, 1
    %p187 = scmp.ne.s32.totalorder %s182, %s184
    %p188 = scmp.eq.s32.totalorder %s14, 0
    %p189 = por %p187, %p188
    %p190 = scmp.ne.s32.totalorder %s182, %s184
    %p191 = scmp.eq.s32.totalorder %s19, 1
    %p192 = por %p190, %p191
    %p193 = scmp.ne.s32.totalorder %s184, %s185
    %p194 = scmp.eq.s32.totalorder %s19, 0
    %p195 = por %p193, %p194
    %p196 = scmp.ne.s32.totalorder %s184, %s185
    %p197 = scmp.eq.s32.totalorder %s20, 1
    %p198 = por %p196, %p197
    %p200 = scmp.ne.s32.totalorder %s185, %s199
    %p201 = scmp.eq.s32.totalorder %s20, 0
    %p202 = por %p200, %p201
    %s203 = ssub.s32 %s21, %s33
    %s204 = ssub.s32 %s22, %s29
    %s205 = sor.u32 %s203, %s204
    %p206 = scmp.eq.s32.totalorder %s205, 0
    %s208 = sadd.s32 %s207, 1
    %s209 = scalar_select %p206, %s207, %s208
    %p212 = pneg %p206
    %p213 = scmp.eq.s32.totalorder %s14, 1
    %p214 = por %p212, %p213
    %p215 = scmp.ne.s32.totalorder %s207, %s210
    %p216 = scmp.eq.s32.totalorder %s14, 0
    %p217 = por %p215, %p216
    %p218 = scmp.ne.s32.totalorder %s207, %s210
    %p219 = scmp.eq.s32.totalorder %s19, 1
    %p220 = por %p218, %p219
    %p221 = scmp.ne.s32.totalorder %s210, %s211
    %p222 = scmp.eq.s32.totalorder %s19, 0
    %p223 = por %p221, %p222
    %p224 = scmp.ne.s32.totalorder %s210, %s211
    %p225 = scmp.eq.s32.totalorder %s20, 1
    %p226 = por %p224, %p225
    %p228 = scmp.ne.s32.totalorder %s211, %s227
    %p229 = scmp.eq.s32.totalorder %s20, 0
    %p230 = por %p228, %p229
    %s231 = ssub.s32 %s21, %s33
    %p232 = scmp.eq.s32.totalorder %s231, 0
    %s234 = sadd.s32 %s233, 1
    %s235 = scalar_select %p232, %s233, %s234
    %p238 = pneg %p232
    %p239 = scmp.eq.s32.totalorder %s14, 1
    %p240 = por %p238, %p239
    %p241 = scmp.ne.s32.totalorder %s233, %s236
    %p242 = scmp.eq.s32.totalorder %s14, 0
    %p243 = por %p241, %p242
    %p244 = scmp.ne.s32.totalorder %s233, %s236
    %p245 = scmp.eq.s32.totalorder %s19, 1
    %p246 = por %p244, %p245
    %p247 = scmp.ne.s32.totalorder %s236, %s237
    %p248 = scmp.eq.s32.totalorder %s19, 0
    %p249 = por %p247, %p248
    %p250 = scmp.ne.s32.totalorder %s236, %s237
    %p251 = scmp.eq.s32.totalorder %s20, 1
    %p252 = por %p250, %p251
    %p254 = scmp.ne.s32.totalorder %s237, %s253
    %p255 = scmp.eq.s32.totalorder %s20, 0
    %p256 = por %p254, %p255
    %p257 = scmp.le.s32.totalorder 1, %s14
    %p258 = scmp.lt.s32.totalorder %s14, 3
    %p259 = pnand %p257, %p258
    %p260 = pneg %p259
    // Predicated region
    $region9: #{multihead_attention.6} parent=5 // pred_check
      _
    $region10: #{multihead_attention.6} parent=5 // pred_check_branch
      %262 = sbr.rel (%p259) target = $region12
    $region11: #{multihead_attention.6} parent=5 // pred_region
      %s263 = ssub.s32 %s14, 1
      // Predicated region
      $region13: #{multihead_attention.6} parent=11 // pred_check
        %p264 = pneg %p101
      $region14: #{multihead_attention.6} parent=11 // pred_check_branch
        %266 = sbr.rel (%p264) target = $region16
      $region15: #{multihead_attention.6} parent=11 // pred_region
        _
      $region16: #{multihead_attention.6} parent=11 // pred_fallthru
        _
      // Predicated region
      $region17: #{multihead_attention.6} parent=11 // pred_check
        %p267 = pneg %p122
      $region18: #{multihead_attention.6} parent=11 // pred_check_branch
        %269 = sbr.rel (%p267) target = $region20
      $region19: #{multihead_attention.6} parent=11 // pred_region
        _
      $region20: #{multihead_attention.6} parent=11 // pred_fallthru
        _
      // Predicated region
      $region21: #{multihead_attention.6} parent=11 // pred_check
        %p270 = pneg %p148
      $region22: #{multihead_attention.6} parent=11 // pred_check_branch
        %272 = sbr.rel (%p270) target = $region24
      $region23: #{multihead_attention.6} parent=11 // pred_region
        %s273 = smul.u32 2, %s24
        %p274 = scmp.lt.s32.totalorder %s273, 1
        %s275 = scalar_select %p274, %s273, 1
        %s276 = smul.addr %s275, 8
        %s277 = scalar_lea.vmem %s4, %s276
        %s278 = smul.u32 2, %s24
      $region24: #{multihead_attention.6} parent=11 // pred_fallthru
        _
      // Predicated region
      $region25: #{multihead_attention.6} parent=11 // pred_check
        %p279 = pneg %p174
      $region26: #{multihead_attention.6} parent=11 // pred_check_branch
        %281 = sbr.rel (%p279) target = $region28
      $region27: #{multihead_attention.6} parent=11 // pred_region
        %s282 = smul.u32 2, %s24
        %p283 = scmp.lt.s32.totalorder %s282, 1
        %s284 = scalar_select %p283, %s282, 1
        %s285 = smul.addr %s284, 8
        %s286 = scalar_lea.vmem %s5, %s285
        %s287 = smul.u32 2, %s24
      $region28: #{multihead_attention.6} parent=11 // pred_fallthru
        _
      // Predicated region
      $region29: #{multihead_attention.6} parent=11 // pred_check
        %p288 = pneg %p195
      $region30: #{multihead_attention.6} parent=11 // pred_check_branch
        %290 = sbr.rel (%p288) target = $region32
      $region31: #{multihead_attention.6} parent=11 // pred_region
        _
      $region32: #{multihead_attention.6} parent=11 // pred_fallthru
        _
    $region12: #{multihead_attention.6} parent=5 // pred_fallthru
      _
    %p291 = scmp.lt.s32.totalorder %s14, 2
    // Predicated region
    $region33: #{multihead_attention.6} parent=5 // pred_check
      %p292 = pneg %p291
    $region34: #{multihead_attention.6} parent=5 // pred_check_branch
      %294 = sbr.rel (%p292) target = $region36
    $region35: #{multihead_attention.6} parent=5 // pred_region
      // Predicated region
      $region37: #{multihead_attention.6} parent=35 // pred_check
        %p295 = pneg %p46
      $region38: #{multihead_attention.6} parent=35 // pred_check_branch
        %297 = sbr.rel (%p295) target = $region40
      $region39: #{multihead_attention.6} parent=35 // pred_region
        %p298 = scmp.lt.s32.totalorder %s21, 1
        %s299 = scalar_select %p298, %s21, 1
        %s300 = smul.addr %s299, 8
        %s301 = scalar_lea.vmem %s0, %s300
      $region40: #{multihead_attention.6} parent=35 // pred_fallthru
        _
      // Predicated region
      $region41: #{multihead_attention.6} parent=35 // pred_check
        %p302 = pneg %p74
      $region42: #{multihead_attention.6} parent=35 // pred_check_branch
        %304 = sbr.rel (%p302) target = $region44
      $region43: #{multihead_attention.6} parent=35 // pred_region
        %s305 = smul.u32 2, %s22
        %p306 = scmp.lt.s32.totalorder %s21, 1
        %s307 = scalar_select %p306, %s21, 1
        %p308 = scmp.lt.s32.totalorder %s305, 1
        %s309 = scalar_select %p308, %s305, 1
        %s310 = smul.addr %s307, 2
        %s311 = sadd.s32 %s309, %s310
        %s312 = smul.addr %s311, 8
        %s313 = scalar_lea.vmem %s1, %s312
        %s314 = smul.u32 2, %s22
      $region44: #{multihead_attention.6} parent=35 // pred_fallthru
        _
      // Predicated region
      $region45: #{multihead_attention.6} parent=35 // pred_check
        %p315 = pneg %p217
      $region46: #{multihead_attention.6} parent=35 // pred_check_branch
        %317 = sbr.rel (%p315) target = $region48
      $region47: #{multihead_attention.6} parent=35 // pred_region
        %p318 = scmp.lt.s32.totalorder %s21, 1
        %s319 = scalar_select %p318, %s21, 1
        %p320 = scmp.lt.s32.totalorder %s22, 0
        %s321 = scalar_select %p320, %s22, 0
        %s322 = sadd.s32 %s321, %s319
        %s323 = smul.addr %s322, 2
        %s324 = scalar_lea.vmem %s7, %s323
      $region48: #{multihead_attention.6} parent=35 // pred_fallthru
        _
    $region36: #{multihead_attention.6} parent=5 // pred_fallthru
      _
    %p325 = scmp.le.s32.totalorder 1, %s14
    %p326 = scmp.lt.s32.totalorder %s14, 3
    %p327 = pnand %p325, %p326
    %p328 = pneg %p327
    // Predicated region
    $region49: #{multihead_attention.6} parent=5 // pred_check
      _
    $region50: #{multihead_attention.6} parent=5 // pred_check_branch
      %330 = sbr.rel (%p327) target = $region52
    $region51: #{multihead_attention.6} parent=5 // pred_region
      %s331 = ssub.s32 %s14, 1
      %p332 = scmp.lt.s32.totalorder %s23, 1
      %s333 = scalar_select %p332, %s23, 1
      %s334 = smul.addr %s333, 8
      %s335 = scalar_lea.vmem %s0, %s334
      %p336 = pneg %p52
      %p337 = pneg %p49
      %s338 = smul.u32 2, %s24
      %p339 = scmp.lt.s32.totalorder %s23, 1
      %s340 = scalar_select %p339, %s23, 1
      %p341 = scmp.lt.s32.totalorder %s338, 1
      %s342 = scalar_select %p341, %s338, 1
      %s343 = smul.addr %s340, 2
      %s344 = sadd.s32 %s342, %s343
      %s345 = smul.addr %s344, 8
      %s346 = scalar_lea.vmem %s1, %s345
      %p347 = pneg %p80
      %p348 = pneg %p77
      %p349 = pneg %p101
      %p350 = pneg %p98
      %p351 = pneg %p122
      %p352 = pneg %p119
      %s353 = smul.u32 2, %s24
      %p354 = scmp.lt.s32.totalorder %s353, 1
      %s355 = scalar_select %p354, %s353, 1
      %s356 = smul.addr %s355, 8
      %s357 = scalar_lea.vmem %s4, %s356
      %p358 = pneg %p148
      %p359 = pneg %p145
      %s360 = smul.u32 2, %s24
      %p361 = scmp.lt.s32.totalorder %s360, 1
      %s362 = scalar_select %p361, %s360, 1
      %s363 = smul.addr %s362, 8
      %s364 = scalar_lea.vmem %s5, %s363
      %p365 = pneg %p174
      %p366 = pneg %p171
      %p367 = pneg %p195
      %p368 = pneg %p192
      %p369 = scmp.lt.s32.totalorder %s23, 1
      %s370 = scalar_select %p369, %s23, 1
      %p371 = scmp.lt.s32.totalorder %s24, 0
      %s372 = scalar_select %p371, %s24, 0
      %s373 = sadd.s32 %s372, %s370
      %s374 = smul.addr %s373, 2
      %s375 = scalar_lea.vmem %s7, %s374
      %p376 = pneg %p223
      %p377 = pneg %p220
      %p378 = pneg %p249
      %p379 = pneg %p246
      %p380 = scmp.lt.s32.totalorder %s23, 1
      %s381 = scalar_select %p380, %s23, 1
      %s382 = smul.addr %s381, 8
      %s383 = scalar_lea.vmem %s8, %s382
      %p384 = scmp.lt.s32.totalorder %s23, 1
      %s385 = scalar_select %p384, %s23, 1
      %s386 = smul.addr %s385, 8
      %s387 = scalar_lea.vmem %s0, %s386
      %s388 = smul.u32 2, %s24
      %p389 = scmp.lt.s32.totalorder %s23, 1
      %s390 = scalar_select %p389, %s23, 1
      %p391 = scmp.lt.s32.totalorder %s388, 1
      %s392 = scalar_select %p391, %s388, 1
      %s393 = smul.addr %s390, 2
      %s394 = sadd.s32 %s392, %s393
      %s395 = smul.addr %s394, 8
      %s396 = scalar_lea.vmem %s1, %s395
      %s397 = smul.u32 2, %s24
      %s398 = smul.u32 2, %s24
      %p399 = scmp.lt.s32.totalorder %s398, 1
      %s400 = scalar_select %p399, %s398, 1
      %s401 = smul.addr %s400, 8
      %s402 = scalar_lea.vmem %s4, %s401
      %s403 = smul.u32 2, %s24
      %s404 = smul.u32 2, %s24
      %p405 = scmp.lt.s32.totalorder %s404, 1
      %s406 = scalar_select %p405, %s404, 1
      %s407 = smul.addr %s406, 8
      %s408 = scalar_lea.vmem %s5, %s407
      %s409 = smul.u32 2, %s24
      %p410 = scmp.lt.s32.totalorder %s23, 1
      %s411 = scalar_select %p410, %s23, 1
      %p412 = scmp.lt.s32.totalorder %s24, 0
      %s413 = scalar_select %p412, %s24, 0
      %s414 = sadd.s32 %s413, %s411
      %s415 = smul.addr %s414, 2
      %s416 = scalar_lea.vmem %s7, %s415
      %p417 = scmp.lt.s32.totalorder %s23, 1
      %s418 = scalar_select %p417, %s23, 1
      %s419 = smul.addr %s418, 8
      %s420 = scalar_lea.vmem %s8, %s419
      %v422 = vld [vmem:[%s6] sm:$0xff]
      %v423 = vpack.c.bf16 %v422, %v422
      %p424 = scmp.eq.s32.totalorder %s24, 0
      // Predicated region
      $region53: #{multihead_attention.6} parent=51 // pred_check
        %p425 = pneg %p424
      $region54: #{multihead_attention.6} parent=51 // pred_check_branch
        %427 = sbr.rel (%p425) target = $region56
      $region55: #{multihead_attention.6} parent=51 // pred_region
        %vm428 = vcmask 7168
        %429 = vst.msk [vmem:[#allocation3] sm:$0xff] %vm428, -1e+30
        %430 = vst.msk [vmem:[#allocation3 + $0x8] sm:$0xff] %vm428, -1e+30
        %431 = vst.msk [vmem:[#allocation3 + $0x10] sm:$0xff] %vm428, -1e+30
        %432 = vst.msk [vmem:[#allocation3 + $0x18] sm:$0xff] %vm428, -1e+30
        %433 = vst.msk [vmem:[#allocation4] sm:$0xff] %vm428, 0.0
        %434 = vst.msk [vmem:[#allocation4 + $0x8] sm:$0xff] %vm428, 0.0
        %435 = vst.msk [vmem:[#allocation4 + $0x10] sm:$0xff] %vm428, 0.0
        %436 = vst.msk [vmem:[#allocation4 + $0x18] sm:$0xff] %vm428, 0.0
        %vm437 = vcmask 64512
        %438 = vst.msk [vmem:[#allocation5] sm:$0xff] %vm437, 0.0
        %439 = vst.msk [vmem:[#allocation5 + $0x8] sm:$0xff] %vm437, 0.0
        %440 = vst.msk [vmem:[#allocation5 + $0x10] sm:$0xff] %vm437, 0.0
        %441 = vst.msk [vmem:[#allocation5 + $0x18] sm:$0xff] %vm437, 0.0
        %v442 = vld [vmem:[%s387] sm:$0xff]
        %v443 = vld [vmem:[%s2] sm:$0xff]
        %v444 = vld [vmem:[%s3] sm:$0xff]
        %v445 = vpack.c.bf16 %v442, %v442
        %v447 = vsel %vm437, %v445, 0
        %vm449 = vcmask 1043456
        %v451 = vsel %vm449, %v423, 0
        %453 = vmatprep.subr.bf16.mxu0 0
        %454 = vmatpush1.bf16.msra.mxu0 %v451
        %455 = vmatprep.subr.bf16.mxu0 0
        %456 = vmatpush1.bf16.msra.mxu0 0
        %457 = vmatprep.subr.bf16.mxu0 0
        %458 = vmatpush1.bf16.msra.mxu0 0
        %459 = vmatprep.subr.bf16.mxu0 0
        %460 = vmatpush1.bf16.msra.mxu0 0
        %461 = vmatprep.subr.bf16.mxu0 0
        %462 = vmatpush1.bf16.msra.mxu0 0
        %463 = vmatprep.subr.bf16.mxu0 0
        %464 = vmatpush1.bf16.msra.mxu0 0
        %465 = vmatprep.subr.bf16.mxu0 0
        %466 = vmatpush1.bf16.msra.mxu0 0
        %467 = vmatprep.subr.bf16.mxu0 0
        %468 = vmatpush1.bf16.msra.mxu0 0
        %469 = vmatprep.subr.bf16.mxu0 0
        %470 = vmatpush1.bf16.msra.mxu0 0
        %471 = vmatprep.subr.bf16.mxu0 0
        %472 = vmatpush1.bf16.msra.mxu0 0
        %473 = vmatprep.subr.bf16.mxu0 0
        %474 = vmatpush1.bf16.msra.mxu0 0
        %475 = vmatprep.subr.bf16.mxu0 0
        %476 = vmatpush1.bf16.msra.mxu0 0
        %477 = vmatprep.subr.bf16.mxu0 0
        %478 = vmatpush1.bf16.msra.mxu0 0
        %479 = vmatprep.subr.bf16.mxu0 0
        %480 = vmatpush1.bf16.msra.mxu0 0
        %481 = vmatprep.subr.bf16.mxu0 0
        %482 = vmatpush1.bf16.msra.mxu0 0
        %483 = vmatprep.subr.bf16.mxu0 0
        %484 = vmatpush1.bf16.msra.mxu0 0
        %485 = vmatprep.mubr.bf16.mxu0 0
        %486 = vmatmul.mubr.bf16.gmra.mrb[0].mxu0 %v447
        %v487 = vpop.f32.mrb[0].mxu0
        %v488 = vadd.f32 0.0, %v487
        %v489 = vpop.f32.mrb[0].mxu0
        %v490 = vpop.f32.mrb[0].mxu0
        %v491 = vpop.f32.mrb[0].mxu0
        %492 = vdwg.mxu0
        %v493 = vmul.f32 %v442, %v443
        %v494 = vmul.f32 %v488, %v444
        %v495 = vadd.f32 %v493, %v494
        %496 = vst.msk [vmem:[#allocation2] sm:$0xff] %vm437, %v495
        %498 = vrot.lane.b32.xlu0 %v445, 120
        %v499 = vpop.permute.xlu0 %498
        %v501 = vsel %vm437, %v499, 0
        %503 = vmatprep.subr.bf16.mxu0 0
        %504 = vmatpush1.bf16.msra.mxu0 %v451
        %505 = vmatprep.subr.bf16.mxu0 0
        %506 = vmatpush1.bf16.msra.mxu0 0
        %507 = vmatprep.subr.bf16.mxu0 0
        %508 = vmatpush1.bf16.msra.mxu0 0
        %509 = vmatprep.subr.bf16.mxu0 0
        %510 = vmatpush1.bf16.msra.mxu0 0
        %511 = vmatprep.subr.bf16.mxu0 0
        %512 = vmatpush1.bf16.msra.mxu0 0
        %513 = vmatprep.subr.bf16.mxu0 0
        %514 = vmatpush1.bf16.msra.mxu0 0
        %515 = vmatprep.subr.bf16.mxu0 0
        %516 = vmatpush1.bf16.msra.mxu0 0
        %517 = vmatprep.subr.bf16.mxu0 0
        %518 = vmatpush1.bf16.msra.mxu0 0
        %519 = vmatprep.subr.bf16.mxu0 0
        %520 = vmatpush1.bf16.msra.mxu0 0
        %521 = vmatprep.subr.bf16.mxu0 0
        %522 = vmatpush1.bf16.msra.mxu0 0
        %523 = vmatprep.subr.bf16.mxu0 0
        %524 = vmatpush1.bf16.msra.mxu0 0
        %525 = vmatprep.subr.bf16.mxu0 0
        %526 = vmatpush1.bf16.msra.mxu0 0
        %527 = vmatprep.subr.bf16.mxu0 0
        %528 = vmatpush1.bf16.msra.mxu0 0
        %529 = vmatprep.subr.bf16.mxu0 0
        %530 = vmatpush1.bf16.msra.mxu0 0
        %531 = vmatprep.subr.bf16.mxu0 0
        %532 = vmatpush1.bf16.msra.mxu0 0
        %533 = vmatprep.subr.bf16.mxu0 0
        %534 = vmatpush1.bf16.msra.mxu0 0
        %535 = vmatprep.mubr.bf16.mxu0 0
        %536 = vmatmul.mubr.bf16.gmra.mrb[0].mxu0 %v501
        %v537 = vpop.f32.mrb[0].mxu0
        %v538 = vadd.f32 0.0, %v537
        %v539 = vpop.f32.mrb[0].mxu0
        %v540 = vpop.f32.mrb[0].mxu0
        %v541 = vpop.f32.mrb[0].mxu0
        %542 = vdwg.mxu0
        %544 = vrot.lane.b32.xlu0 %v443, 8
        %v545 = vpop.permute.xlu0 %544
        %v547 = vmul.f32 %v442, %v545
        %v548 = vmul.f32 %v538, %v444
        %550 = vrot.lane.b32.xlu0 %v548, 8
        %v551 = vpop.permute.xlu0 %550
        %v553 = vadd.f32 %v547, %v551
        %555 = vrot.lane.b32.xlu0 %v553, 120
        %v556 = vpop.permute.xlu0 %555
        %s558 = scalar_lea.vmem [#allocation2], 8
        %559 = vst.msk [vmem:[%s558] sm:$0xff] %vm437, %v556
        %560 = vrot.lane.b32.xlu0 %v445, 112
        %v561 = vpop.permute.xlu0 %560
        %v563 = vsel %vm437, %v561, 0
        %565 = vmatprep.subr.bf16.mxu0 0
        %566 = vmatpush1.bf16.msra.mxu0 %v451
        %567 = vmatprep.subr.bf16.mxu0 0
        %568 = vmatpush1.bf16.msra.mxu0 0
        %569 = vmatprep.subr.bf16.mxu0 0
        %570 = vmatpush1.bf16.msra.mxu0 0
        %571 = vmatprep.subr.bf16.mxu0 0
        %572 = vmatpush1.bf16.msra.mxu0 0
        %573 = vmatprep.subr.bf16.mxu0 0
        %574 = vmatpush1.bf16.msra.mxu0 0
        %575 = vmatprep.subr.bf16.mxu0 0
        %576 = vmatpush1.bf16.msra.mxu0 0
        %577 = vmatprep.subr.bf16.mxu0 0
        %578 = vmatpush1.bf16.msra.mxu0 0
        %579 = vmatprep.subr.bf16.mxu0 0
        %580 = vmatpush1.bf16.msra.mxu0 0
        %581 = vmatprep.subr.bf16.mxu0 0
        %582 = vmatpush1.bf16.msra.mxu0 0
        %583 = vmatprep.subr.bf16.mxu0 0
        %584 = vmatpush1.bf16.msra.mxu0 0
        %585 = vmatprep.subr.bf16.mxu0 0
        %586 = vmatpush1.bf16.msra.mxu0 0
        %587 = vmatprep.subr.bf16.mxu0 0
        %588 = vmatpush1.bf16.msra.mxu0 0
        %589 = vmatprep.subr.bf16.mxu0 0
        %590 = vmatpush1.bf16.msra.mxu0 0
        %591 = vmatprep.subr.bf16.mxu0 0
        %592 = vmatpush1.bf16.msra.mxu0 0
        %593 = vmatprep.subr.bf16.mxu0 0
        %594 = vmatpush1.bf16.msra.mxu0 0
        %595 = vmatprep.subr.bf16.mxu0 0
        %596 = vmatpush1.bf16.msra.mxu0 0
        %597 = vmatprep.mubr.bf16.mxu0 0
        %598 = vmatmul.mubr.bf16.gmra.mrb[0].mxu0 %v563
        %v599 = vpop.f32.mrb[0].mxu0
        %v600 = vadd.f32 0.0, %v599
        %v601 = vpop.f32.mrb[0].mxu0
        %v602 = vpop.f32.mrb[0].mxu0
        %v603 = vpop.f32.mrb[0].mxu0
        %604 = vdwg.mxu0
        %605 = vrot.lane.b32.xlu0 %v443, 16
        %v606 = vpop.permute.xlu0 %605
        %v608 = vmul.f32 %v442, %v606
        %v609 = vmul.f32 %v600, %v444
        %611 = vrot.lane.b32.xlu0 %v609, 16
        %v612 = vpop.permute.xlu0 %611
        %v614 = vadd.f32 %v608, %v612
        %616 = vrot.lane.b32.xlu0 %v614, 112
        %v617 = vpop.permute.xlu0 %616
        %s619 = scalar_lea.vmem [#allocation2], 16
        %620 = vst.msk [vmem:[%s619] sm:$0xff] %vm437, %v617
        %621 = vrot.lane.b32.xlu0 %v445, 104
        %v622 = vpop.permute.xlu0 %621
        %v624 = vsel %vm437, %v622, 0
        %626 = vmatprep.subr.bf16.mxu0 0
        %627 = vmatpush1.bf16.msra.mxu0 %v451
        %628 = vmatprep.subr.bf16.mxu0 0
        %629 = vmatpush1.bf16.msra.mxu0 0
        %630 = vmatprep.subr.bf16.mxu0 0
        %631 = vmatpush1.bf16.msra.mxu0 0
        %632 = vmatprep.subr.bf16.mxu0 0
        %633 = vmatpush1.bf16.msra.mxu0 0
        %634 = vmatprep.subr.bf16.mxu0 0
        %635 = vmatpush1.bf16.msra.mxu0 0
        %636 = vmatprep.subr.bf16.mxu0 0
        %637 = vmatpush1.bf16.msra.mxu0 0
        %638 = vmatprep.subr.bf16.mxu0 0
        %639 = vmatpush1.bf16.msra.mxu0 0
        %640 = vmatprep.subr.bf16.mxu0 0
        %641 = vmatpush1.bf16.msra.mxu0 0
        %642 = vmatprep.subr.bf16.mxu0 0
        %643 = vmatpush1.bf16.msra.mxu0 0
        %644 = vmatprep.subr.bf16.mxu0 0
        %645 = vmatpush1.bf16.msra.mxu0 0
        %646 = vmatprep.subr.bf16.mxu0 0
        %647 = vmatpush1.bf16.msra.mxu0 0
        %648 = vmatprep.subr.bf16.mxu0 0
        %649 = vmatpush1.bf16.msra.mxu0 0
        %650 = vmatprep.subr.bf16.mxu0 0
        %651 = vmatpush1.bf16.msra.mxu0 0
        %652 = vmatprep.subr.bf16.mxu0 0
        %653 = vmatpush1.bf16.msra.mxu0 0
        %654 = vmatprep.subr.bf16.mxu0 0
        %655 = vmatpush1.bf16.msra.mxu0 0
        %656 = vmatprep.subr.bf16.mxu0 0
        %657 = vmatpush1.bf16.msra.mxu0 0
        %658 = vmatprep.mubr.bf16.mxu0 0
        %659 = vmatmul.mubr.bf16.gmra.mrb[0].mxu0 %v624
        %v660 = vpop.f32.mrb[0].mxu0
        %v661 = vadd.f32 0.0, %v660
        %v662 = vpop.f32.mrb[0].mxu0
        %v663 = vpop.f32.mrb[0].mxu0
        %v664 = vpop.f32.mrb[0].mxu0
        %665 = vdwg.mxu0
        %666 = vrot.lane.b32.xlu0 %v443, 24
        %v667 = vpop.permute.xlu0 %666
        %v669 = vmul.f32 %v442, %v667
        %v670 = vmul.f32 %v661, %v444
        %672 = vrot.lane.b32.xlu0 %v670, 24
        %v673 = vpop.permute.xlu0 %672
        %v675 = vadd.f32 %v669, %v673
        %677 = vrot.lane.b32.xlu0 %v675, 104
        %v678 = vpop.permute.xlu0 %677
        %s680 = scalar_lea.vmem [#allocation2], 24
        %681 = vst.msk [vmem:[%s680] sm:$0xff] %vm437, %v678
      $region56: #{multihead_attention.6} parent=51 // pred_fallthru
        _
      %v682 = vld [vmem:[%s396] sm:$0xff]
      %v683 = vld [vmem:[%s396 + $0x8] sm:$0xf]
      %v684 = vld [vmem:[%s416] sm:$0x3]
      %v685 = vunpack.c.0.s8 %v684
      %v686 = vcvt.s32.f32 %v685
      %v687 = vld [vmem:[%s402] sm:$0xff]
      %v688 = vld [vmem:[%s402 + $0x8] sm:$0xf]
      %v689 = vld [vmem:[%s408] sm:$0xff]
      %v690 = vld [vmem:[%s408 + $0x8] sm:$0xf]
      %v691 = vpack.c.bf16 %v683, %v682
      %vm692 = vcmask 64512
      %v694 = vsel %vm692, %v691, 0
      %vm696 = vcmask 1043456
      %v698 = vsel %vm696, %v423, 0
      %700 = vmatprep.subr.bf16.mxu0 0
      %701 = vmatpush1.bf16.msra.mxu0 %v698
      %702 = vmatprep.subr.bf16.mxu0 0
      %703 = vmatpush1.bf16.msra.mxu0 0
      %704 = vmatprep.subr.bf16.mxu0 0
      %705 = vmatpush1.bf16.msra.mxu0 0
      %706 = vmatprep.subr.bf16.mxu0 0
      %707 = vmatpush1.bf16.msra.mxu0 0
      %708 = vmatprep.subr.bf16.mxu0 0
      %709 = vmatpush1.bf16.msra.mxu0 0
      %710 = vmatprep.subr.bf16.mxu0 0
      %711 = vmatpush1.bf16.msra.mxu0 0
      %712 = vmatprep.subr.bf16.mxu0 0
      %713 = vmatpush1.bf16.msra.mxu0 0
      %714 = vmatprep.subr.bf16.mxu0 0
      %715 = vmatpush1.bf16.msra.mxu0 0
      %716 = vmatprep.subr.bf16.mxu0 0
      %717 = vmatpush1.bf16.msra.mxu0 0
      %718 = vmatprep.subr.bf16.mxu0 0
      %719 = vmatpush1.bf16.msra.mxu0 0
      %720 = vmatprep.subr.bf16.mxu0 0
      %721 = vmatpush1.bf16.msra.mxu0 0
      %722 = vmatprep.subr.bf16.mxu0 0
      %723 = vmatpush1.bf16.msra.mxu0 0
      %724 = vmatprep.subr.bf16.mxu0 0
      %725 = vmatpush1.bf16.msra.mxu0 0
      %726 = vmatprep.subr.bf16.mxu0 0
      %727 = vmatpush1.bf16.msra.mxu0 0
      %728 = vmatprep.subr.bf16.mxu0 0
      %729 = vmatpush1.bf16.msra.mxu0 0
      %730 = vmatprep.subr.bf16.mxu0 0
      %731 = vmatpush1.bf16.msra.mxu0 0
      %732 = vmatprep.mubr.bf16.mxu0 0
      %733 = vmatmul.mubr.bf16.gmra.mrb[0].mxu0 %v694
      %v734 = vpop.f32.mrb[0].mxu0
      %v735 = vadd.f32 0.0, %v734
      %v736 = vpop.f32.mrb[0].mxu0
      %v737 = vpop.f32.mrb[0].mxu0
      %v738 = vadd.f32 0.0, %v737
      %v739 = vpop.f32.mrb[0].mxu0
      %740 = vdwg.mxu0
      %v741 = vmul.f32 %v682, %v687
      %v742 = vmul.f32 %v683, %v688
      %v743 = vmul.f32 %v735, %v689
      %v744 = vmul.f32 %v738, %v690
      %v745 = vadd.f32 %v741, %v743
      %v746 = vadd.f32 %v742, %v744
      %v747 = vld [vmem:[#allocation2] sm:$0xff]
      %v748 = vpack.c.bf16 %v747, %v747
      %v749 = vpack.c.bf16 %v746, %v745
      %v751 = vsel %vm692, %v748, 0
      %v754 = vsel %vm692, %v749, 0
      %756 = vmatprep.subr.bf16.mxu0 0
      %757 = vmatpush1.bf16.xpose.msra.mxu0 %v754
      %758 = vmatprep.subr.bf16.mxu0 0
      %759 = vmatpush1.bf16.xpose.msra.mxu0 0
      %760 = vmatprep.subr.bf16.mxu0 0
      %761 = vmatpush1.bf16.xpose.msra.mxu0 0
      %762 = vmatprep.subr.bf16.mxu0 0
      %763 = vmatpush1.bf16.xpose.msra.mxu0 0
      %764 = vmatprep.subr.bf16.mxu0 0
      %765 = vmatpush1.bf16.xpose.msra.mxu0 0
      %766 = vmatprep.subr.bf16.mxu0 0
      %767 = vmatpush1.bf16.xpose.msra.mxu0 0
      %768 = vmatprep.subr.bf16.mxu0 0
      %769 = vmatpush1.bf16.xpose.msra.mxu0 0
      %770 = vmatprep.subr.bf16.mxu0 0
      %771 = vmatpush1.bf16.xpose.msra.mxu0 0
      %772 = vmatprep.subr.bf16.mxu0 0
      %773 = vmatpush1.bf16.xpose.msra.mxu0 0
      %774 = vmatprep.subr.bf16.mxu0 0
      %775 = vmatpush1.bf16.xpose.msra.mxu0 0
      %776 = vmatprep.subr.bf16.mxu0 0
      %777 = vmatpush1.bf16.xpose.msra.mxu0 0
      %778 = vmatprep.subr.bf16.mxu0 0
      %779 = vmatpush1.bf16.xpose.msra.mxu0 0
      %780 = vmatprep.subr.bf16.mxu0 0
      %781 = vmatpush1.bf16.xpose.msra.mxu0 0
      %782 = vmatprep.subr.bf16.mxu0 0
      %783 = vmatpush1.bf16.xpose.msra.mxu0 0
      %784 = vmatprep.subr.bf16.mxu0 0
      %785 = vmatpush1.bf16.xpose.msra.mxu0 0
      %786 = vmatprep.subr.bf16.mxu0 0
      %787 = vmatpush1.bf16.xpose.msra.mxu0 0
      %788 = vmatprep.mubr.bf16.mxu0 0
      %789 = vmatmul.mubr.bf16.gmra.mrb[0].mxu0 %v751
      %v790 = vpop.f32.mrb[0].mxu0
      %v791 = vadd.f32 0.0, %v790
      %v792 = vpop.f32.mrb[0].mxu0
      %v793 = vpop.f32.mrb[0].mxu0
      %v794 = vpop.f32.mrb[0].mxu0
      %795 = vdwg.mxu0
      %vm796 = vcmp.ne.f32.partialorder %v686, 0.0
      %v797 = vsel %vm796, %v791, -1e+30
      %v798 = vld [vmem:[#allocation3] sm:$0xff]
      %vm799 = vcmask 97280
      %v800 = vsel %vm799, %v797, -inf
      %801 = vmax.xlane.f32.xlu0 %v800
      %v802 = vpop.xlane.xlu0 %801
      %v803 = vmax.f32 %v798, %v802
      %v804 = vsub.f32 %v798, %v803
      %v805 = vmul.f32 %v804, 1.442695
      %v806 = vpow.pop %v805
      %808 = vset.pattern.permute.xlu0 0
      %809 = vperm.xlu0 %808, %v803
      %v810 = vpop.permute.xlu0 %809
      %v812 = vsub.f32 %v797, %v810
      %v813 = vmul.f32 %v812, 1.442695
      %v814 = vpow.pop %v813
      %v815 = vld [vmem:[#allocation4] sm:$0xff]
      %v816 = vmul.f32 %v806, %v815
      %v817 = vsel %vm799, %v814, 0.0
      %818 = vadd.xlane.f32.xlu0 %v817
      %v819 = vpop.xlane.xlu0 %818
      %v820 = vadd.f32 %v816, %v819
      %vm821 = vcmask 7168
      %822 = vst.msk [vmem:[#allocation4] sm:$0xff] %vm821, %v820
      %v823 = vld [vmem:[#allocation5] sm:$0xff]
      %825 = vset.pattern.permute.xlu0 0
      %826 = vperm.xlu0 %825, %v806
      %v827 = vpop.permute.xlu0 %826
      %v829 = vmul.f32 %v827, %v823
      %v830 = vpack.c.bf16 %v814, %v814
      %832 = vrot.lane.b32.xlu0 %v691, 96
      %v833 = vpop.permute.xlu0 %832
      %v835 = vsel %vm799, %v830, 0
      %vm837 = vcmask 1045504
      %v839 = vsel %vm837, %v833, 0
      %841 = vmatprep.subr.bf16.mxu0 0
      %842 = vmatpush1.bf16.msra.mxu0 %v839
      %843 = vmatprep.subr.bf16.mxu0 0
      %844 = vmatpush1.bf16.msra.mxu0 0
      %845 = vmatprep.subr.bf16.mxu0 0
      %846 = vmatpush1.bf16.msra.mxu0 0
      %847 = vmatprep.subr.bf16.mxu0 0
      %848 = vmatpush1.bf16.msra.mxu0 0
      %849 = vmatprep.subr.bf16.mxu0 0
      %850 = vmatpush1.bf16.msra.mxu0 0
      %851 = vmatprep.subr.bf16.mxu0 0
      %852 = vmatpush1.bf16.msra.mxu0 0
      %853 = vmatprep.subr.bf16.mxu0 0
      %854 = vmatpush1.bf16.msra.mxu0 0
      %855 = vmatprep.subr.bf16.mxu0 0
      %856 = vmatpush1.bf16.msra.mxu0 0
      %857 = vmatprep.subr.bf16.mxu0 0
      %858 = vmatpush1.bf16.msra.mxu0 0
      %859 = vmatprep.subr.bf16.mxu0 0
      %860 = vmatpush1.bf16.msra.mxu0 0
      %861 = vmatprep.subr.bf16.mxu0 0
      %862 = vmatpush1.bf16.msra.mxu0 0
      %863 = vmatprep.subr.bf16.mxu0 0
      %864 = vmatpush1.bf16.msra.mxu0 0
      %865 = vmatprep.subr.bf16.mxu0 0
      %866 = vmatpush1.bf16.msra.mxu0 0
      %867 = vmatprep.subr.bf16.mxu0 0
      %868 = vmatpush1.bf16.msra.mxu0 0
      %869 = vmatprep.subr.bf16.mxu0 0
      %870 = vmatpush1.bf16.msra.mxu0 0
      %871 = vmatprep.subr.bf16.mxu0 0
      %872 = vmatpush1.bf16.msra.mxu0 0
      %873 = vmatprep.mubr.bf16.mxu0 0
      %874 = vmatmul.mubr.bf16.gmra.mrb[0].mxu0 %v835
      %v875 = vpop.f32.mrb[0].mxu0
      %v876 = vadd.f32 0.0, %v875
      %v877 = vpop.f32.mrb[0].mxu0
      %v878 = vpop.f32.mrb[0].mxu0
      %v879 = vpop.f32.mrb[0].mxu0
      %880 = vdwg.mxu0
      %v881 = vadd.f32 %v829, %v876
      %882 = vst.msk [vmem:[#allocation5] sm:$0xff] %vm692, %v881
      %883 = vst.msk [vmem:[#allocation3] sm:$0xff] %vm821, %v803
      %884 = vrot.lane.b32.xlu0 %v691, 120
      %v885 = vpop.permute.xlu0 %884
      %v887 = vsel %vm692, %v885, 0
      %889 = vmatprep.subr.bf16.mxu0 0
      %890 = vmatpush1.bf16.msra.mxu0 %v698
      %891 = vmatprep.subr.bf16.mxu0 0
      %892 = vmatpush1.bf16.msra.mxu0 0
      %893 = vmatprep.subr.bf16.mxu0 0
      %894 = vmatpush1.bf16.msra.mxu0 0
      %895 = vmatprep.subr.bf16.mxu0 0
      %896 = vmatpush1.bf16.msra.mxu0 0
      %897 = vmatprep.subr.bf16.mxu0 0
      %898 = vmatpush1.bf16.msra.mxu0 0
      %899 = vmatprep.subr.bf16.mxu0 0
      %900 = vmatpush1.bf16.msra.mxu0 0
      %901 = vmatprep.subr.bf16.mxu0 0
      %902 = vmatpush1.bf16.msra.mxu0 0
      %903 = vmatprep.subr.bf16.mxu0 0
      %904 = vmatpush1.bf16.msra.mxu0 0
      %905 = vmatprep.subr.bf16.mxu0 0
      %906 = vmatpush1.bf16.msra.mxu0 0
      %907 = vmatprep.subr.bf16.mxu0 0
      %908 = vmatpush1.bf16.msra.mxu0 0
      %909 = vmatprep.subr.bf16.mxu0 0
      %910 = vmatpush1.bf16.msra.mxu0 0
      %911 = vmatprep.subr.bf16.mxu0 0
      %912 = vmatpush1.bf16.msra.mxu0 0
      %913 = vmatprep.subr.bf16.mxu0 0
      %914 = vmatpush1.bf16.msra.mxu0 0
      %915 = vmatprep.subr.bf16.mxu0 0
      %916 = vmatpush1.bf16.msra.mxu0 0
      %917 = vmatprep.subr.bf16.mxu0 0
      %918 = vmatpush1.bf16.msra.mxu0 0
      %919 = vmatprep.subr.bf16.mxu0 0
      %920 = vmatpush1.bf16.msra.mxu0 0
      %921 = vmatprep.mubr.bf16.mxu0 0
      %922 = vmatmul.mubr.bf16.gmra.mrb[0].mxu0 %v887
      %v923 = vpop.f32.mrb[0].mxu0
      %v924 = vadd.f32 0.0, %v923
      %v925 = vpop.f32.mrb[0].mxu0
      %v926 = vpop.f32.mrb[0].mxu0
      %v927 = vadd.f32 0.0, %v926
      %v928 = vpop.f32.mrb[0].mxu0
      %929 = vdwg.mxu0
      %932 = vrot.lane.b32.xlu0 %v687, 8
      %v933 = vpop.permute.xlu0 %932
      %934 = vrot.lane.b32.xlu0 %v688, 8
      %v935 = vpop.permute.xlu0 %934
      %v938 = vmul.f32 %v682, %v933
      %v939 = vmul.f32 %v683, %v935
      %v940 = vmul.f32 %v924, %v689
      %v941 = vmul.f32 %v927, %v690
      %944 = vrot.lane.b32.xlu0 %v940, 8
      %v945 = vpop.permute.xlu0 %944
      %946 = vrot.lane.b32.xlu0 %v941, 8
      %v947 = vpop.permute.xlu0 %946
      %v950 = vadd.f32 %v938, %v945
      %v951 = vadd.f32 %v939, %v947
      %s952 = scalar_lea.vmem [#allocation2], 8
      %v953 = vld [vmem:[%s952] sm:$0xff]
      %v954 = vpack.c.bf16 %v953, %v953
      %v955 = vpack.c.bf16 %v951, %v950
      %957 = vrot.lane.b32.xlu0 %v955, 120
      %v958 = vpop.permute.xlu0 %957
      %v960 = vsel %vm692, %v954, 0
      %v963 = vsel %vm692, %v958, 0
      %965 = vmatprep.subr.bf16.mxu0 0
      %966 = vmatpush1.bf16.xpose.msra.mxu0 %v963
      %967 = vmatprep.subr.bf16.mxu0 0
      %968 = vmatpush1.bf16.xpose.msra.mxu0 0
      %969 = vmatprep.subr.bf16.mxu0 0
      %970 = vmatpush1.bf16.xpose.msra.mxu0 0
      %971 = vmatprep.subr.bf16.mxu0 0
      %972 = vmatpush1.bf16.xpose.msra.mxu0 0
      %973 = vmatprep.subr.bf16.mxu0 0
      %974 = vmatpush1.bf16.xpose.msra.mxu0 0
      %975 = vmatprep.subr.bf16.mxu0 0
      %976 = vmatpush1.bf16.xpose.msra.mxu0 0
      %977 = vmatprep.subr.bf16.mxu0 0
      %978 = vmatpush1.bf16.xpose.msra.mxu0 0
      %979 = vmatprep.subr.bf16.mxu0 0
      %980 = vmatpush1.bf16.xpose.msra.mxu0 0
      %981 = vmatprep.subr.bf16.mxu0 0
      %982 = vmatpush1.bf16.xpose.msra.mxu0 0
      %983 = vmatprep.subr.bf16.mxu0 0
      %984 = vmatpush1.bf16.xpose.msra.mxu0 0
      %985 = vmatprep.subr.bf16.mxu0 0
      %986 = vmatpush1.bf16.xpose.msra.mxu0 0
      %987 = vmatprep.subr.bf16.mxu0 0
      %988 = vmatpush1.bf16.xpose.msra.mxu0 0
      %989 = vmatprep.subr.bf16.mxu0 0
      %990 = vmatpush1.bf16.xpose.msra.mxu0 0
      %991 = vmatprep.subr.bf16.mxu0 0
      %992 = vmatpush1.bf16.xpose.msra.mxu0 0
      %993 = vmatprep.subr.bf16.mxu0 0
      %994 = vmatpush1.bf16.xpose.msra.mxu0 0
      %995 = vmatprep.subr.bf16.mxu0 0
      %996 = vmatpush1.bf16.xpose.msra.mxu0 0
      %997 = vmatprep.mubr.bf16.mxu0 0
      %998 = vmatmul.mubr.bf16.gmra.mrb[0].mxu0 %v960
      %v999 = vpop.f32.mrb[0].mxu0
      %v1000 = vadd.f32 0.0, %v999
      %v1001 = vpop.f32.mrb[0].mxu0
      %v1002 = vpop.f32.mrb[0].mxu0
      %v1003 = vpop.f32.mrb[0].mxu0
      %1004 = vdwg.mxu0
      %v1005 = vsel %vm796, %v1000, -1e+30
      %s1006 = scalar_lea.vmem [#allocation3], 8
      %v1007 = vld [vmem:[%s1006] sm:$0xff]
      %v1008 = vsel %vm799, %v1005, -inf
      %1009 = vmax.xlane.f32.xlu0 %v1008
      %v1010 = vpop.xlane.xlu0 %1009
      %v1011 = vmax.f32 %v1007, %v1010
      %v1012 = vsub.f32 %v1007, %v1011
      %v1013 = vmul.f32 %v1012, 1.442695
      %v1014 = vpow.pop %v1013
      %1016 = vset.pattern.permute.xlu0 0
      %1017 = vperm.xlu0 %1016, %v1011
      %v1018 = vpop.permute.xlu0 %1017
      %v1020 = vsub.f32 %v1005, %v1018
      %v1021 = vmul.f32 %v1020, 1.442695
      %v1022 = vpow.pop %v1021
      %s1023 = scalar_lea.vmem [#allocation4], 8
      %v1024 = vld [vmem:[%s1023] sm:$0xff]
      %v1025 = vmul.f32 %v1014, %v1024
      %v1026 = vsel %vm799, %v1022, 0.0
      %1027 = vadd.xlane.f32.xlu0 %v1026
      %v1028 = vpop.xlane.xlu0 %1027
      %v1029 = vadd.f32 %v1025, %v1028
      %1030 = vst.msk [vmem:[%s1023] sm:$0xff] %vm821, %v1029
      %s1031 = scalar_lea.vmem [#allocation5], 8
      %v1032 = vld [vmem:[%s1031] sm:$0xff]
      %1034 = vset.pattern.permute.xlu0 0
      %1035 = vperm.xlu0 %1034, %v1014
      %v1036 = vpop.permute.xlu0 %1035
      %v1038 = vmul.f32 %v1036, %v1032
      %v1039 = vpack.c.bf16 %v1022, %v1022
      %1040 = vrot.lane.b32.xlu0 %v691, 88
      %v1041 = vpop.permute.xlu0 %1040
      %v1043 = vsel %vm799, %v1039, 0
      %v1046 = vsel %vm837, %v1041, 0
      %1048 = vmatprep.subr.bf16.mxu0 0
      %1049 = vmatpush1.bf16.msra.mxu0 %v1046
      %1050 = vmatprep.subr.bf16.mxu0 0
      %1051 = vmatpush1.bf16.msra.mxu0 0
      %1052 = vmatprep.subr.bf16.mxu0 0
      %1053 = vmatpush1.bf16.msra.mxu0 0
      %1054 = vmatprep.subr.bf16.mxu0 0
      %1055 = vmatpush1.bf16.msra.mxu0 0
      %1056 = vmatprep.subr.bf16.mxu0 0
      %1057 = vmatpush1.bf16.msra.mxu0 0
      %1058 = vmatprep.subr.bf16.mxu0 0
      %1059 = vmatpush1.bf16.msra.mxu0 0
      %1060 = vmatprep.subr.bf16.mxu0 0
      %1061 = vmatpush1.bf16.msra.mxu0 0
      %1062 = vmatprep.subr.bf16.mxu0 0
      %1063 = vmatpush1.bf16.msra.mxu0 0
      %1064 = vmatprep.subr.bf16.mxu0 0
      %1065 = vmatpush1.bf16.msra.mxu0 0
      %1066 = vmatprep.subr.bf16.mxu0 0
      %1067 = vmatpush1.bf16.msra.mxu0 0
      %1068 = vmatprep.subr.bf16.mxu0 0
      %1069 = vmatpush1.bf16.msra.mxu0 0
      %1070 = vmatprep.subr.bf16.mxu0 0
      %1071 = vmatpush1.bf16.msra.mxu0 0
      %1072 = vmatprep.subr.bf16.mxu0 0
      %1073 = vmatpush1.bf16.msra.mxu0 0
      %1074 = vmatprep.subr.bf16.mxu0 0
      %1075 = vmatpush1.bf16.msra.mxu0 0
      %1076 = vmatprep.subr.bf16.mxu0 0
      %1077 = vmatpush1.bf16.msra.mxu0 0
      %1078 = vmatprep.subr.bf16.mxu0 0
      %1079 = vmatpush1.bf16.msra.mxu0 0
      %1080 = vmatprep.mubr.bf16.mxu0 0
      %1081 = vmatmul.mubr.bf16.gmra.mrb[0].mxu0 %v1043
      %v1082 = vpop.f32.mrb[0].mxu0
      %v1083 = vadd.f32 0.0, %v1082
      %v1084 = vpop.f32.mrb[0].mxu0
      %v1085 = vpop.f32.mrb[0].mxu0
      %v1086 = vpop.f32.mrb[0].mxu0
      %1087 = vdwg.mxu0
      %v1088 = vadd.f32 %v1038, %v1083
      %1089 = vst.msk [vmem:[%s1031] sm:$0xff] %vm692, %v1088
      %1090 = vst.msk [vmem:[%s1006] sm:$0xff] %vm821, %v1011
      %1091 = vrot.lane.b32.xlu0 %v691, 112
      %v1092 = vpop.permute.xlu0 %1091
      %v1094 = vsel %vm692, %v1092, 0
      %1096 = vmatprep.subr.bf16.mxu0 0
      %1097 = vmatpush1.bf16.msra.mxu0 %v698
      %1098 = vmatprep.subr.bf16.mxu0 0
      %1099 = vmatpush1.bf16.msra.mxu0 0
      %1100 = vmatprep.subr.bf16.mxu0 0
      %1101 = vmatpush1.bf16.msra.mxu0 0
      %1102 = vmatprep.subr.bf16.mxu0 0
      %1103 = vmatpush1.bf16.msra.mxu0 0
      %1104 = vmatprep.subr.bf16.mxu0 0
      %1105 = vmatpush1.bf16.msra.mxu0 0
      %1106 = vmatprep.subr.bf16.mxu0 0
      %1107 = vmatpush1.bf16.msra.mxu0 0
      %1108 = vmatprep.subr.bf16.mxu0 0
      %1109 = vmatpush1.bf16.msra.mxu0 0
      %1110 = vmatprep.subr.bf16.mxu0 0
      %1111 = vmatpush1.bf16.msra.mxu0 0
      %1112 = vmatprep.subr.bf16.mxu0 0
      %1113 = vmatpush1.bf16.msra.mxu0 0
      %1114 = vmatprep.subr.bf16.mxu0 0
      %1115 = vmatpush1.bf16.msra.mxu0 0
      %1116 = vmatprep.subr.bf16.mxu0 0
      %1117 = vmatpush1.bf16.msra.mxu0 0
      %1118 = vmatprep.subr.bf16.mxu0 0
      %1119 = vmatpush1.bf16.msra.mxu0 0
      %1120 = vmatprep.subr.bf16.mxu0 0
      %1121 = vmatpush1.bf16.msra.mxu0 0
      %1122 = vmatprep.subr.bf16.mxu0 0
      %1123 = vmatpush1.bf16.msra.mxu0 0
      %1124 = vmatprep.subr.bf16.mxu0 0
      %1125 = vmatpush1.bf16.msra.mxu0 0
      %1126 = vmatprep.subr.bf16.mxu0 0
      %1127 = vmatpush1.bf16.msra.mxu0 0
      %1128 = vmatprep.mubr.bf16.mxu0 0
      %1129 = vmatmul.mubr.bf16.gmra.mrb[0].mxu0 %v1094
      %v1130 = vpop.f32.mrb[0].mxu0
      %v1131 = vadd.f32 0.0, %v1130
      %v1132 = vpop.f32.mrb[0].mxu0
      %v1133 = vpop.f32.mrb[0].mxu0
      %v1134 = vadd.f32 0.0, %v1133
      %v1135 = vpop.f32.mrb[0].mxu0
      %1136 = vdwg.mxu0
      %1137 = vrot.lane.b32.xlu0 %v687, 16
      %v1138 = vpop.permute.xlu0 %1137
      %1139 = vrot.lane.b32.xlu0 %v688, 16
      %v1140 = vpop.permute.xlu0 %1139
      %v1143 = vmul.f32 %v682, %v1138
      %v1144 = vmul.f32 %v683, %v1140
      %v1145 = vmul.f32 %v1131, %v689
      %v1146 = vmul.f32 %v1134, %v690
      %1149 = vrot.lane.b32.xlu0 %v1145, 16
      %v1150 = vpop.permute.xlu0 %1149
      %1151 = vrot.lane.b32.xlu0 %v1146, 16
      %v1152 = vpop.permute.xlu0 %1151
      %v1155 = vadd.f32 %v1143, %v1150
      %v1156 = vadd.f32 %v1144, %v1152
      %s1157 = scalar_lea.vmem [#allocation2], 16
      %v1158 = vld [vmem:[%s1157] sm:$0xff]
      %v1159 = vpack.c.bf16 %v1158, %v1158
      %v1160 = vpack.c.bf16 %v1156, %v1155
      %1162 = vrot.lane.b32.xlu0 %v1160, 112
      %v1163 = vpop.permute.xlu0 %1162
      %v1165 = vsel %vm692, %v1159, 0
      %v1168 = vsel %vm692, %v1163, 0
      %1170 = vmatprep.subr.bf16.mxu0 0
      %1171 = vmatpush1.bf16.xpose.msra.mxu0 %v1168
      %1172 = vmatprep.subr.bf16.mxu0 0
      %1173 = vmatpush1.bf16.xpose.msra.mxu0 0
      %1174 = vmatprep.subr.bf16.mxu0 0
      %1175 = vmatpush1.bf16.xpose.msra.mxu0 0
      %1176 = vmatprep.subr.bf16.mxu0 0
      %1177 = vmatpush1.bf16.xpose.msra.mxu0 0
      %1178 = vmatprep.subr.bf16.mxu0 0
      %1179 = vmatpush1.bf16.xpose.msra.mxu0 0
      %1180 = vmatprep.subr.bf16.mxu0 0
      %1181 = vmatpush1.bf16.xpose.msra.mxu0 0
      %1182 = vmatprep.subr.bf16.mxu0 0
      %1183 = vmatpush1.bf16.xpose.msra.mxu0 0
      %1184 = vmatprep.subr.bf16.mxu0 0
      %1185 = vmatpush1.bf16.xpose.msra.mxu0 0
      %1186 = vmatprep.subr.bf16.mxu0 0
      %1187 = vmatpush1.bf16.xpose.msra.mxu0 0
      %1188 = vmatprep.subr.bf16.mxu0 0
      %1189 = vmatpush1.bf16.xpose.msra.mxu0 0
      %1190 = vmatprep.subr.bf16.mxu0 0
      %1191 = vmatpush1.bf16.xpose.msra.mxu0 0
      %1192 = vmatprep.subr.bf16.mxu0 0
      %1193 = vmatpush1.bf16.xpose.msra.mxu0 0
      %1194 = vmatprep.subr.bf16.mxu0 0
      %1195 = vmatpush1.bf16.xpose.msra.mxu0 0
      %1196 = vmatprep.subr.bf16.mxu0 0
      %1197 = vmatpush1.bf16.xpose.msra.mxu0 0
      %1198 = vmatprep.subr.bf16.mxu0 0
      %1199 = vmatpush1.bf16.xpose.msra.mxu0 0
      %1200 = vmatprep.subr.bf16.mxu0 0
      %1201 = vmatpush1.bf16.xpose.msra.mxu0 0
      %1202 = vmatprep.mubr.bf16.mxu0 0
      %1203 = vmatmul.mubr.bf16.gmra.mrb[0].mxu0 %v1165
      %v1204 = vpop.f32.mrb[0].mxu0
      %v1205 = vadd.f32 0.0, %v1204
      %v1206 = vpop.f32.mrb[0].mxu0
      %v1207 = vpop.f32.mrb[0].mxu0
      %v1208 = vpop.f32.mrb[0].mxu0
      %1209 = vdwg.mxu0
      %v1210 = vsel %vm796, %v1205, -1e+30
      %s1211 = scalar_lea.vmem [#allocation3], 16
      %v1212 = vld [vmem:[%s1211] sm:$0xff]
      %v1213 = vsel %vm799, %v1210, -inf
      %1214 = vmax.xlane.f32.xlu0 %v1213
      %v1215 = vpop.xlane.xlu0 %1214
      %v1216 = vmax.f32 %v1212, %v1215
      %v1217 = vsub.f32 %v1212, %v1216
      %v1218 = vmul.f32 %v1217, 1.442695
      %v1219 = vpow.pop %v1218
      %1221 = vset.pattern.permute.xlu0 0
      %1222 = vperm.xlu0 %1221, %v1216
      %v1223 = vpop.permute.xlu0 %1222
      %v1225 = vsub.f32 %v1210, %v1223
      %v1226 = vmul.f32 %v1225, 1.442695
      %v1227 = vpow.pop %v1226
      %s1228 = scalar_lea.vmem [#allocation4], 16
      %v1229 = vld [vmem:[%s1228] sm:$0xff]
      %v1230 = vmul.f32 %v1219, %v1229
      %v1231 = vsel %vm799, %v1227, 0.0
      %1232 = vadd.xlane.f32.xlu0 %v1231
      %v1233 = vpop.xlane.xlu0 %1232
      %v1234 = vadd.f32 %v1230, %v1233
      %1235 = vst.msk [vmem:[%s1228] sm:$0xff] %vm821, %v1234
      %s1236 = scalar_lea.vmem [#allocation5], 16
      %v1237 = vld [vmem:[%s1236] sm:$0xff]
      %1239 = vset.pattern.permute.xlu0 0
      %1240 = vperm.xlu0 %1239, %v1219
      %v1241 = vpop.permute.xlu0 %1240
      %v1243 = vmul.f32 %v1241, %v1237
      %v1244 = vpack.c.bf16 %v1227, %v1227
      %1245 = vrot.lane.b32.xlu0 %v691, 80
      %v1246 = vpop.permute.xlu0 %1245
      %v1248 = vsel %vm799, %v1244, 0
      %v1251 = vsel %vm837, %v1246, 0
      %1253 = vmatprep.subr.bf16.mxu0 0
      %1254 = vmatpush1.bf16.msra.mxu0 %v1251
      %1255 = vmatprep.subr.bf16.mxu0 0
      %1256 = vmatpush1.bf16.msra.mxu0 0
      %1257 = vmatprep.subr.bf16.mxu0 0
      %1258 = vmatpush1.bf16.msra.mxu0 0
      %1259 = vmatprep.subr.bf16.mxu0 0
      %1260 = vmatpush1.bf16.msra.mxu0 0
      %1261 = vmatprep.subr.bf16.mxu0 0
      %1262 = vmatpush1.bf16.msra.mxu0 0
      %1263 = vmatprep.subr.bf16.mxu0 0
      %1264 = vmatpush1.bf16.msra.mxu0 0
      %1265 = vmatprep.subr.bf16.mxu0 0
      %1266 = vmatpush1.bf16.msra.mxu0 0
      %1267 = vmatprep.subr.bf16.mxu0 0
      %1268 = vmatpush1.bf16.msra.mxu0 0
      %1269 = vmatprep.subr.bf16.mxu0 0
      %1270 = vmatpush1.bf16.msra.mxu0 0
      %1271 = vmatprep.subr.bf16.mxu0 0
      %1272 = vmatpush1.bf16.msra.mxu0 0
      %1273 = vmatprep.subr.bf16.mxu0 0
      %1274 = vmatpush1.bf16.msra.mxu0 0
      %1275 = vmatprep.subr.bf16.mxu0 0
      %1276 = vmatpush1.bf16.msra.mxu0 0
      %1277 = vmatprep.subr.bf16.mxu0 0
      %1278 = vmatpush1.bf16.msra.mxu0 0
      %1279 = vmatprep.subr.bf16.mxu0 0
      %1280 = vmatpush1.bf16.msra.mxu0 0
      %1281 = vmatprep.subr.bf16.mxu0 0
      %1282 = vmatpush1.bf16.msra.mxu0 0
      %1283 = vmatprep.subr.bf16.mxu0 0
      %1284 = vmatpush1.bf16.msra.mxu0 0
      %1285 = vmatprep.mubr.bf16.mxu0 0
      %1286 = vmatmul.mubr.bf16.gmra.mrb[0].mxu0 %v1248
      %v1287 = vpop.f32.mrb[0].mxu0
      %v1288 = vadd.f32 0.0, %v1287
      %v1289 = vpop.f32.mrb[0].mxu0
      %v1290 = vpop.f32.mrb[0].mxu0
      %v1291 = vpop.f32.mrb[0].mxu0
      %1292 = vdwg.mxu0
      %v1293 = vadd.f32 %v1243, %v1288
      %1294 = vst.msk [vmem:[%s1236] sm:$0xff] %vm692, %v1293
      %1295 = vst.msk [vmem:[%s1211] sm:$0xff] %vm821, %v1216
      %1296 = vrot.lane.b32.xlu0 %v691, 104
      %v1297 = vpop.permute.xlu0 %1296
      %v1299 = vsel %vm692, %v1297, 0
      %1301 = vmatprep.subr.bf16.mxu0 0
      %1302 = vmatpush1.bf16.msra.mxu0 %v698
      %1303 = vmatprep.subr.bf16.mxu0 0
      %1304 = vmatpush1.bf16.msra.mxu0 0
      %1305 = vmatprep.subr.bf16.mxu0 0
      %1306 = vmatpush1.bf16.msra.mxu0 0
      %1307 = vmatprep.subr.bf16.mxu0 0
      %1308 = vmatpush1.bf16.msra.mxu0 0
      %1309 = vmatprep.subr.bf16.mxu0 0
      %1310 = vmatpush1.bf16.msra.mxu0 0
      %1311 = vmatprep.subr.bf16.mxu0 0
      %1312 = vmatpush1.bf16.msra.mxu0 0
      %1313 = vmatprep.subr.bf16.mxu0 0
      %1314 = vmatpush1.bf16.msra.mxu0 0
      %1315 = vmatprep.subr.bf16.mxu0 0
      %1316 = vmatpush1.bf16.msra.mxu0 0
      %1317 = vmatprep.subr.bf16.mxu0 0
      %1318 = vmatpush1.bf16.msra.mxu0 0
      %1319 = vmatprep.subr.bf16.mxu0 0
      %1320 = vmatpush1.bf16.msra.mxu0 0
      %1321 = vmatprep.subr.bf16.mxu0 0
      %1322 = vmatpush1.bf16.msra.mxu0 0
      %1323 = vmatprep.subr.bf16.mxu0 0
      %1324 = vmatpush1.bf16.msra.mxu0 0
      %1325 = vmatprep.subr.bf16.mxu0 0
      %1326 = vmatpush1.bf16.msra.mxu0 0
      %1327 = vmatprep.subr.bf16.mxu0 0
      %1328 = vmatpush1.bf16.msra.mxu0 0
      %1329 = vmatprep.subr.bf16.mxu0 0
      %1330 = vmatpush1.bf16.msra.mxu0 0
      %1331 = vmatprep.subr.bf16.mxu0 0
      %1332 = vmatpush1.bf16.msra.mxu0 0
      %1333 = vmatprep.mubr.bf16.mxu0 0
      %1334 = vmatmul.mubr.bf16.gmra.mrb[0].mxu0 %v1299
      %v1335 = vpop.f32.mrb[0].mxu0
      %v1336 = vadd.f32 0.0, %v1335
      %v1337 = vpop.f32.mrb[0].mxu0
      %v1338 = vpop.f32.mrb[0].mxu0
      %v1339 = vadd.f32 0.0, %v1338
      %v1340 = vpop.f32.mrb[0].mxu0
      %1341 = vdwg.mxu0
      %1342 = vrot.lane.b32.xlu0 %v687, 24
      %v1343 = vpop.permute.xlu0 %1342
      %1344 = vrot.lane.b32.xlu0 %v688, 24
      %v1345 = vpop.permute.xlu0 %1344
      %v1348 = vmul.f32 %v682, %v1343
      %v1349 = vmul.f32 %v683, %v1345
      %v1350 = vmul.f32 %v1336, %v689
      %v1351 = vmul.f32 %v1339, %v690
      %1354 = vrot.lane.b32.xlu0 %v1350, 24
      %v1355 = vpop.permute.xlu0 %1354
      %1356 = vrot.lane.b32.xlu0 %v1351, 24
      %v1357 = vpop.permute.xlu0 %1356
      %v1360 = vadd.f32 %v1348, %v1355
      %v1361 = vadd.f32 %v1349, %v1357
      %s1362 = scalar_lea.vmem [#allocation2], 24
      %v1363 = vld [vmem:[%s1362] sm:$0xff]
      %v1364 = vpack.c.bf16 %v1363, %v1363
      %v1365 = vpack.c.bf16 %v1361, %v1360
      %1367 = vrot.lane.b32.xlu0 %v1365, 104
      %v1368 = vpop.permute.xlu0 %1367
      %v1370 = vsel %vm692, %v1364, 0
      %v1373 = vsel %vm692, %v1368, 0
      %1375 = vmatprep.subr.bf16.mxu0 0
      %1376 = vmatpush1.bf16.xpose.msra.mxu0 %v1373
      %1377 = vmatprep.subr.bf16.mxu0 0
      %1378 = vmatpush1.bf16.xpose.msra.mxu0 0
      %1379 = vmatprep.subr.bf16.mxu0 0
      %1380 = vmatpush1.bf16.xpose.msra.mxu0 0
      %1381 = vmatprep.subr.bf16.mxu0 0
      %1382 = vmatpush1.bf16.xpose.msra.mxu0 0
      %1383 = vmatprep.subr.bf16.mxu0 0
      %1384 = vmatpush1.bf16.xpose.msra.mxu0 0
      %1385 = vmatprep.subr.bf16.mxu0 0
      %1386 = vmatpush1.bf16.xpose.msra.mxu0 0
      %1387 = vmatprep.subr.bf16.mxu0 0
      %1388 = vmatpush1.bf16.xpose.msra.mxu0 0
      %1389 = vmatprep.subr.bf16.mxu0 0
      %1390 = vmatpush1.bf16.xpose.msra.mxu0 0
      %1391 = vmatprep.subr.bf16.mxu0 0
      %1392 = vmatpush1.bf16.xpose.msra.mxu0 0
      %1393 = vmatprep.subr.bf16.mxu0 0
      %1394 = vmatpush1.bf16.xpose.msra.mxu0 0
      %1395 = vmatprep.subr.bf16.mxu0 0
      %1396 = vmatpush1.bf16.xpose.msra.mxu0 0
      %1397 = vmatprep.subr.bf16.mxu0 0
      %1398 = vmatpush1.bf16.xpose.msra.mxu0 0
      %1399 = vmatprep.subr.bf16.mxu0 0
      %1400 = vmatpush1.bf16.xpose.msra.mxu0 0
      %1401 = vmatprep.subr.bf16.mxu0 0
      %1402 = vmatpush1.bf16.xpose.msra.mxu0 0
      %1403 = vmatprep.subr.bf16.mxu0 0
      %1404 = vmatpush1.bf16.xpose.msra.mxu0 0
      %1405 = vmatprep.subr.bf16.mxu0 0
      %1406 = vmatpush1.bf16.xpose.msra.mxu0 0
      %1407 = vmatprep.mubr.bf16.mxu0 0
      %1408 = vmatmul.mubr.bf16.gmra.mrb[0].mxu0 %v1370
      %v1409 = vpop.f32.mrb[0].mxu0
      %v1410 = vadd.f32 0.0, %v1409
      %v1411 = vpop.f32.mrb[0].mxu0
      %v1412 = vpop.f32.mrb[0].mxu0
      %v1413 = vpop.f32.mrb[0].mxu0
      %1414 = vdwg.mxu0
      %v1415 = vsel %vm796, %v1410, -1e+30
      %s1416 = scalar_lea.vmem [#allocation3], 24
      %v1417 = vld [vmem:[%s1416] sm:$0xff]
      %v1418 = vsel %vm799, %v1415, -inf
      %1419 = vmax.xlane.f32.xlu0 %v1418
      %v1420 = vpop.xlane.xlu0 %1419
      %v1421 = vmax.f32 %v1417, %v1420
      %v1422 = vsub.f32 %v1417, %v1421
      %v1423 = vmul.f32 %v1422, 1.442695
      %v1424 = vpow.pop %v1423
      %1426 = vset.pattern.permute.xlu0 0
      %1427 = vperm.xlu0 %1426, %v1421
      %v1428 = vpop.permute.xlu0 %1427
      %v1430 = vsub.f32 %v1415, %v1428
      %v1431 = vmul.f32 %v1430, 1.442695
      %v1432 = vpow.pop %v1431
      %s1433 = scalar_lea.vmem [#allocation4], 24
      %v1434 = vld [vmem:[%s1433] sm:$0xff]
      %v1435 = vmul.f32 %v1424, %v1434
      %v1436 = vsel %vm799, %v1432, 0.0
      %1437 = vadd.xlane.f32.xlu0 %v1436
      %v1438 = vpop.xlane.xlu0 %1437
      %v1439 = vadd.f32 %v1435, %v1438
      %1440 = vst.msk [vmem:[%s1433] sm:$0xff] %vm821, %v1439
      %s1441 = scalar_lea.vmem [#allocation5], 24
      %v1442 = vld [vmem:[%s1441] sm:$0xff]
      %1444 = vset.pattern.permute.xlu0 0
      %1445 = vperm.xlu0 %1444, %v1424
      %v1446 = vpop.permute.xlu0 %1445
      %v1448 = vmul.f32 %v1446, %v1442
      %v1449 = vpack.c.bf16 %v1432, %v1432
      %1450 = vrot.lane.b32.xlu0 %v691, 72
      %v1451 = vpop.permute.xlu0 %1450
      %v1453 = vsel %vm799, %v1449, 0
      %v1456 = vsel %vm837, %v1451, 0
      %1458 = vmatprep.subr.bf16.mxu0 0
      %1459 = vmatpush1.bf16.msra.mxu0 %v1456
      %1460 = vmatprep.subr.bf16.mxu0 0
      %1461 = vmatpush1.bf16.msra.mxu0 0
      %1462 = vmatprep.subr.bf16.mxu0 0
      %1463 = vmatpush1.bf16.msra.mxu0 0
      %1464 = vmatprep.subr.bf16.mxu0 0
      %1465 = vmatpush1.bf16.msra.mxu0 0
      %1466 = vmatprep.subr.bf16.mxu0 0
      %1467 = vmatpush1.bf16.msra.mxu0 0
      %1468 = vmatprep.subr.bf16.mxu0 0
      %1469 = vmatpush1.bf16.msra.mxu0 0
      %1470 = vmatprep.subr.bf16.mxu0 0
      %1471 = vmatpush1.bf16.msra.mxu0 0
      %1472 = vmatprep.subr.bf16.mxu0 0
      %1473 = vmatpush1.bf16.msra.mxu0 0
      %1474 = vmatprep.subr.bf16.mxu0 0
      %1475 = vmatpush1.bf16.msra.mxu0 0
      %1476 = vmatprep.subr.bf16.mxu0 0
      %1477 = vmatpush1.bf16.msra.mxu0 0
      %1478 = vmatprep.subr.bf16.mxu0 0
      %1479 = vmatpush1.bf16.msra.mxu0 0
      %1480 = vmatprep.subr.bf16.mxu0 0
      %1481 = vmatpush1.bf16.msra.mxu0 0
      %1482 = vmatprep.subr.bf16.mxu0 0
      %1483 = vmatpush1.bf16.msra.mxu0 0
      %1484 = vmatprep.subr.bf16.mxu0 0
      %1485 = vmatpush1.bf16.msra.mxu0 0
      %1486 = vmatprep.subr.bf16.mxu0 0
      %1487 = vmatpush1.bf16.msra.mxu0 0
      %1488 = vmatprep.subr.bf16.mxu0 0
      %1489 = vmatpush1.bf16.msra.mxu0 0
      %1490 = vmatprep.mubr.bf16.mxu0 0
      %1491 = vmatmul.mubr.bf16.gmra.mrb[0].mxu0 %v1453
      %v1492 = vpop.f32.mrb[0].mxu0
      %v1493 = vadd.f32 0.0, %v1492
      %v1494 = vpop.f32.mrb[0].mxu0
      %v1495 = vpop.f32.mrb[0].mxu0
      %v1496 = vpop.f32.mrb[0].mxu0
      %1497 = vdwg.mxu0
      %v1498 = vadd.f32 %v1448, %v1493
      %1499 = vst.msk [vmem:[%s1441] sm:$0xff] %vm692, %v1498
      %1500 = vst.msk [vmem:[%s1416] sm:$0xff] %vm821, %v1421
      // Predicated region
      $region57: #{multihead_attention.6} parent=51 // pred_check
        %p1501 = pneg %p424
      $region58: #{multihead_attention.6} parent=51 // pred_check_branch
        %1503 = sbr.rel (%p1501) target = $region60
      $region59: #{multihead_attention.6} parent=51 // pred_region
        %v1504 = vld [vmem:[#allocation5] sm:$0xff]
        %v1505 = vld [vmem:[#allocation4] sm:$0xff]
        %v1506 = vrcp.pop %v1505
        %1508 = vset.pattern.permute.xlu0 0
        %1509 = vperm.xlu0 %1508, %v1506
        %v1510 = vpop.permute.xlu0 %1509
        %v1512 = vmul.f32 %v1504, %v1510
        %v1513 = vld [vmem:[%s1031] sm:$0xff]
        %v1514 = vld [vmem:[%s1023] sm:$0xff]
        %v1515 = vrcp.pop %v1514
        %1517 = vset.pattern.permute.xlu0 0
        %1518 = vperm.xlu0 %1517, %v1515
        %v1519 = vpop.permute.xlu0 %1518
        %v1521 = vmul.f32 %v1513, %v1519
        %v1522 = vld [vmem:[%s1236] sm:$0xff]
        %v1523 = vld [vmem:[%s1228] sm:$0xff]
        %v1524 = vrcp.pop %v1523
        %1526 = vset.pattern.permute.xlu0 0
        %1527 = vperm.xlu0 %1526, %v1524
        %v1528 = vpop.permute.xlu0 %1527
        %v1530 = vmul.f32 %v1522, %v1528
        %v1531 = vld [vmem:[%s1441] sm:$0xff]
        %v1532 = vld [vmem:[%s1433] sm:$0xff]
        %v1533 = vrcp.pop %v1532
        %1535 = vset.pattern.permute.xlu0 0
        %1536 = vperm.xlu0 %1535, %v1533
        %v1537 = vpop.permute.xlu0 %1536
        %v1539 = vmul.f32 %v1531, %v1537
        %1541 = vrot.lane.b32.xlu0 %v1521, 8
        %v1542 = vpop.permute.xlu0 %1541
        %1545 = vrot.lane.b32.xlu0 %v1530, 16
        %v1546 = vpop.permute.xlu0 %1545
        %1549 = vrot.lane.b32.xlu0 %v1539, 24
        %v1550 = vpop.permute.xlu0 %1549
        %v1552 = vsel %vm692, %v1512, %v1542
        %vm1553 = vcmask 130048
        %v1554 = vsel %vm1553, %v1552, %v1546
        %vm1555 = vcmask 195584
        %v1556 = vsel %vm1555, %v1554, %v1550
        %vm1557 = vcmask 261120
        %1558 = vst.msk [vmem:[%s420] sm:$0xff] %vm1557, %v1556
      $region60: #{multihead_attention.6} parent=51 // pred_fallthru
        _
      %p1559 = scmp.lt.s32.totalorder %s23, 1
      %s1560 = scalar_select %p1559, %s23, 1
      %s1561 = smul.addr %s1560, 8
      %s1562 = scalar_lea.vmem %s8, %s1561
      // Predicated region
      $region61: #{multihead_attention.6} parent=51 // pred_check
        %p1563 = pneg %p246
      $region62: #{multihead_attention.6} parent=51 // pred_check_branch
        %1565 = sbr.rel (%p1563) target = $region64
      $region63: #{multihead_attention.6} parent=51 // pred_region
        _
      $region64: #{multihead_attention.6} parent=51 // pred_fallthru
        _
    $region52: #{multihead_attention.6} parent=5 // pred_fallthru
      _
    %p1566 = scmp.le.s32.totalorder 2, %s14
    // Predicated region
    $region65: #{multihead_attention.6} parent=5 // pred_check
      %p1567 = pneg %p1566
    $region66: #{multihead_attention.6} parent=5 // pred_check_branch
      %1569 = sbr.rel (%p1567) target = $region68
    $region67: #{multihead_attention.6} parent=5 // pred_region
      %s1570 = ssub.s32 %s14, 2
      // Predicated region
      $region69: #{multihead_attention.6} parent=67 // pred_check
        %p1571 = pneg %p252
      $region70: #{multihead_attention.6} parent=67 // pred_check_branch
        %1573 = sbr.rel (%p1571) target = $region72
      $region71: #{multihead_attention.6} parent=67 // pred_region
        %p1574 = scmp.lt.s32.totalorder %s25, 1
        %s1575 = scalar_select %p1574, %s25, 1
        %s1576 = smul.addr %s1575, 8
        %s1577 = scalar_lea.vmem %s8, %s1576
      $region72: #{multihead_attention.6} parent=67 // pred_fallthru
        _
    $region68: #{multihead_attention.6} parent=5 // pred_fallthru
      _
  $region6: #{multihead_attention.6} parent=0 // loop_footer
    %s18 = sadd.s32 1, %s14
  $region7: #{multihead_attention.6} parent=0 // loop_footer_branch
    %13 = sbr.rel target = $region3
  $region8: #{multihead_attention.6} parent=0 // loop_exit
    _

</llo_original>
